<compile_context>
chip_gen: v7x
topology: tpu7x:2x2x1
jax: 0.10.0
libtpu: 0.0.40
codegen_flags: <defaults>
</compile_context>

<pallas_src>
import jax
import jax.numpy as jnp
import numpy as np
from jax.experimental import pallas as pl
from jax.experimental.pallas import tpu as pltpu


def _leaky_relu(v, slope=0.2):
    return jnp.where(v > 0, v, slope * v)


def dense_block_kernel(x_ref, w1_ref, b1_ref, w2_ref, b2_ref, out_ref,
                       xy1p_ref):
    """Fused DenseBlock for one batch element.

    x_ref   : (1, H, W, C)     unpadded input (NHWC, f32)
    w1_ref  : (3, 3, C, C)     conv1 weight, HWIO, bf16
    b1_ref  : (1, C)           conv1 bias, f32
    w2_ref  : (3, 3, 2C, C)    conv2 weight, HWIO, bf16 (unsplit: K = 2C)
    b2_ref  : (1, C)           conv2 bias, f32
    out_ref : (1, H, W, 3C)    cat(x, y1, y2), f32
    xy1p_ref: (H+2, W+2, 2C)   VMEM scratch: zero halo + padded cat(x, y1)
    """
    Hp, Wp, C2 = xy1p_ref.shape
    H, W = Hp - 2, Wp - 2
    C = C2 // 2

    # Zero only the 1-pixel halo; the interior is fully overwritten each step.
    # Cheap (O(Hp + Wp) pixels) and safe under megacore sharding of the batch
    # axis (no reliance on program_id == 0 ever running on a given core).
    zrow = jnp.zeros((1, Wp, C2), xy1p_ref.dtype)
    zcol = jnp.zeros((Hp, 1, C2), xy1p_ref.dtype)
    xy1p_ref[0:1, :, :] = zrow
    xy1p_ref[Hp - 1:Hp, :, :] = zrow
    xy1p_ref[:, 0:1, :] = zcol
    xy1p_ref[:, Wp - 1:Wp, :] = zcol

    # Stage x into the first C channels of the padded scratch.
    x = x_ref[0]                                       # (H, W, C) f32
    xy1p_ref[1:1 + H, 1:1 + W, 0:C] = x

    # ---- conv1(x) + leaky_relu: 9 shifted matmuls, K = C -----------------
    # bf16 operands feed the MXU at full rate; accumulation stays in f32.
    # (Scratch is kept f32 so offset slices stay on the proven unpacked path;
    #  operands are cast to bf16 at the MXU boundary.)
    acc1 = jnp.zeros((H * W, C), jnp.float32)
    for dy in range(3):
        for dx in range(3):
            patch = xy1p_ref[dy:dy + H, dx:dx + W, 0:C].reshape(H * W, C)
            acc1 += jnp.dot(patch.astype(jnp.bfloat16), w1_ref[dy, dx],
                            preferred_element_type=jnp.float32)
    y1 = _leaky_relu(acc1 + b1_ref[0, :]).reshape(H, W, C)

    # Stage y1 -> scratch now holds the padded cat(x, y1).
    xy1p_ref[1:1 + H, 1:1 + W, C:2 * C] = y1

    # ---- conv2(cat(x, y1)) + leaky_relu: 9 shifted matmuls, K = 2C -------
    acc2 = jnp.zeros((H * W, C), jnp.float32)
    for dy in range(3):
        for dx in range(3):
            patch = xy1p_ref[dy:dy + H, dx:dx + W, :].reshape(H * W, 2 * C)
            acc2 += jnp.dot(patch.astype(jnp.bfloat16), w2_ref[dy, dx],
                            preferred_element_type=jnp.float32)
    y2 = _leaky_relu(acc2 + b2_ref[0, :]).reshape(H, W, C)

    # ---- single coalesced store of cat(x, y1, y2) -------------------------
    out_ref[0] = jnp.concatenate([x, y1, y2], axis=-1)


def dense_block(x_nchw, params):
    """params = (w1 (C,C,3,3), b1 (C,), w2 (C,2C,3,3), b2 (C,)) in torch OIHW."""
    w1, b1, w2, b2 = params
    N, C, H, W = x_nchw.shape
    Hp, Wp = H + 2, W + 2

    # NCHW -> NHWC (glue only; padding happens inside the kernel).
    x = jnp.transpose(x_nchw, (0, 2, 3, 1)).astype(jnp.float32)

    # OIHW -> HWIO; bf16 for the MXU (f32 accumulation inside the kernel).
    w1_h = jnp.transpose(w1, (2, 3, 1, 0)).astype(jnp.bfloat16)   # (3,3,C,C)
    w2_h = jnp.transpose(w2, (2, 3, 1, 0)).astype(jnp.bfloat16)   # (3,3,2C,C)
    b1_2d = b1.reshape(1, C).astype(jnp.float32)
    b2_2d = b2.reshape(1, C).astype(jnp.float32)

    out_nhwc = pl.pallas_call(
        dense_block_kernel,
        out_shape=jax.ShapeDtypeStruct((N, H, W, 3 * C), jnp.float32),
        grid_spec=pltpu.PrefetchScalarGridSpec(
            num_scalar_prefetch=0,
            grid=(N,),
            in_specs=[
                pl.BlockSpec((1, H, W, C), lambda n: (n, 0, 0, 0)),
                pl.BlockSpec((3, 3, C, C), lambda n: (0, 0, 0, 0)),
                pl.BlockSpec((1, C), lambda n: (0, 0)),
                pl.BlockSpec((3, 3, 2 * C, C), lambda n: (0, 0, 0, 0)),
                pl.BlockSpec((1, C), lambda n: (0, 0)),
            ],
            out_specs=pl.BlockSpec((1, H, W, 3 * C), lambda n: (n, 0, 0, 0)),
            scratch_shapes=[pltpu.VMEM((Hp, Wp, 2 * C), jnp.float32)],
        ),
        compiler_params=pltpu.CompilerParams(
            dimension_semantics=("parallel",),
            vmem_limit_bytes=32 * 1024 * 1024,
        ),
    )(x, w1_h, b1_2d, w2_h, b2_2d)

    return jnp.transpose(out_nhwc, (0, 3, 1, 2))    # back to NCHW


def dense_block_reference(x_nchw, params):
    """Pure-JAX reference matching the PyTorch forward (all f32)."""
    w1, b1, w2, b2 = params

    def conv_lrelu(x, w, b):
        y = jax.lax.conv_general_dilated(
            x, w, window_strides=(1, 1), padding=((1, 1), (1, 1)),
            dimension_numbers=("NCHW", "OIHW", "NCHW"))
        return jax.nn.leaky_relu(y + b[None, :, None, None],
                                 negative_slope=0.2)

    y1 = conv_lrelu(x_nchw, w1, b1)
    x1 = jnp.concatenate([x_nchw, y1], axis=1)
    y2 = conv_lrelu(x1, w2, b2)
    return jnp.concatenate([x1, y2], axis=1)


if __name__ == "__main__":
    N, C, H, W = 2, 4, 16, 16

    key = jax.random.PRNGKey(0)
    kx, k1, kb1, k2, kb2 = jax.random.split(key, 5)

    x = jax.random.normal(kx, (N, C, H, W), jnp.float32)
    # Deterministic synthetic parameters (shapes from nn.Conv2d in __init__).
    w1 = jax.random.normal(k1, (C, C, 3, 3), jnp.float32) * 0.1       # conv1
    b1 = jax.random.normal(kb1, (C,), jnp.float32) * 0.1
    w2 = jax.random.normal(k2, (C, 2 * C, 3, 3), jnp.float32) * 0.1   # conv2
    b2 = jax.random.normal(kb2, (C,), jnp.float32) * 0.1
    params = (w1, b1, w2, b2)

    out = dense_block(x, params)
    out = jax.block_until_ready(out)

    ref = jax.block_until_ready(dense_block_reference(x, params))
    assert out.shape == (N, 3 * C, H, W), out.shape
    # bf16 MXU inputs with f32 accumulation -> slightly looser tolerances.
    np.testing.assert_allclose(np.asarray(out), np.asarray(ref),
                               rtol=5e-2, atol=5e-2)

    print("KERNEL_OK")
</pallas_src>

<mosaic_0001>
module attributes {stable_mosaic.version = 11 : i64} {
  func.func @dense_block_kernel(%arg0: i32, %arg1: memref<1x16x16x4xf32, #tpu.memory_space<vmem>>, %arg2: memref<3x3x4x4xbf16, #tpu.memory_space<vmem>>, %arg3: memref<1x4xf32, #tpu.memory_space<vmem>>, %arg4: memref<3x3x8x4xbf16, #tpu.memory_space<vmem>>, %arg5: memref<1x4xf32, #tpu.memory_space<vmem>>, %arg6: memref<1x16x16x12xf32, #tpu.memory_space<vmem>>, %arg7: memref<18x18x8xf32, #tpu.memory_space<vmem>>) attributes {dimension_semantics = [#tpu.dimension_semantics<parallel>], iteration_bounds = array<i64: 2>, scalar_prefetch = 0 : i64, scratch_operands = 1 : i64, tpu.core_type = #tpu.core_type<tc>, window_params = [{transform_indices = @transform_0, window_bounds = array<i64: 1, 16, 16, 4>}, {pipeline_mode = #tpu.pipeline_mode<synchronous>, transform_indices = @transform_1, window_bounds = array<i64: 3, 3, 4, 4>}, {pipeline_mode = #tpu.pipeline_mode<synchronous>, transform_indices = @transform_2, window_bounds = array<i64: 1, 4>}, {pipeline_mode = #tpu.pipeline_mode<synchronous>, transform_indices = @transform_3, window_bounds = array<i64: 3, 3, 8, 4>}, {pipeline_mode = #tpu.pipeline_mode<synchronous>, transform_indices = @transform_4, window_bounds = array<i64: 1, 4>}, {transform_indices = @transform_5, window_bounds = array<i64: 1, 16, 16, 12>}]} {
    %cst = arith.constant 0.000000e+00 : f32
    %0 = vector.broadcast %cst : f32 to vector<1x18x8xf32>
    %cst_0 = arith.constant 0.000000e+00 : f32
    %1 = vector.broadcast %cst_0 : f32 to vector<18x1x8xf32>
    %c0 = arith.constant 0 : index
    %c0_1 = arith.constant 0 : index
    %c0_2 = arith.constant 0 : index
    %2 = vector.load %arg7[%c0, %c0_1, %c0_2] : memref<18x18x8xf32, #tpu.memory_space<vmem>>, vector<1x18x8xf32>
    tpu.vector_store %arg7[%c0, %c0_1, %c0_2], %0 {strides = array<i32>} : memref<18x18x8xf32, #tpu.memory_space<vmem>>, vector<1x18x8xf32>,
    %c17 = arith.constant 17 : index
    %c0_3 = arith.constant 0 : index
    %c0_4 = arith.constant 0 : index
    %3 = vector.load %arg7[%c17, %c0_3, %c0_4] : memref<18x18x8xf32, #tpu.memory_space<vmem>>, vector<1x18x8xf32>
    tpu.vector_store %arg7[%c17, %c0_3, %c0_4], %0 {strides = array<i32>} : memref<18x18x8xf32, #tpu.memory_space<vmem>>, vector<1x18x8xf32>,
    %c0_5 = arith.constant 0 : index
    %c0_6 = arith.constant 0 : index
    %c0_7 = arith.constant 0 : index
    %4 = vector.load %arg7[%c0_5, %c0_6, %c0_7] : memref<18x18x8xf32, #tpu.memory_space<vmem>>, vector<18x1x8xf32>
    tpu.vector_store %arg7[%c0_5, %c0_6, %c0_7], %1 {strides = array<i32>} : memref<18x18x8xf32, #tpu.memory_space<vmem>>, vector<18x1x8xf32>,
    %c0_8 = arith.constant 0 : index
    %c17_9 = arith.constant 17 : index
    %c0_10 = arith.constant 0 : index
    %5 = vector.load %arg7[%c0_8, %c17_9, %c0_10] : memref<18x18x8xf32, #tpu.memory_space<vmem>>, vector<18x1x8xf32>
    tpu.vector_store %arg7[%c0_8, %c17_9, %c0_10], %1 {strides = array<i32>} : memref<18x18x8xf32, #tpu.memory_space<vmem>>, vector<18x1x8xf32>,
    %c0_11 = arith.constant 0 : index
    %c0_12 = arith.constant 0 : index
    %c0_13 = arith.constant 0 : index
    %c0_14 = arith.constant 0 : index
    %6 = vector.load %arg1[%c0_11, %c0_12, %c0_13, %c0_14] : memref<1x16x16x4xf32, #tpu.memory_space<vmem>>, vector<1x16x16x4xf32>
    %7 = vector.shape_cast %6 : vector<1x16x16x4xf32> to vector<16x16x4xf32>
    %c1 = arith.constant 1 : index
    %c1_15 = arith.constant 1 : index
    %c0_16 = arith.constant 0 : index
    %8 = vector.load %arg7[%c1, %c1_15, %c0_16] : memref<18x18x8xf32, #tpu.memory_space<vmem>>, vector<16x16x4xf32>
    tpu.vector_store %arg7[%c1, %c1_15, %c0_16], %7 {strides = array<i32>} : memref<18x18x8xf32, #tpu.memory_space<vmem>>, vector<16x16x4xf32>,
    %cst_17 = arith.constant 0.000000e+00 : f32
    %9 = vector.broadcast %cst_17 : f32 to vector<256x4xf32>
    %c0_18 = arith.constant 0 : index
    %c0_19 = arith.constant 0 : index
    %c0_20 = arith.constant 0 : index
    %10 = vector.load %arg7[%c0_18, %c0_19, %c0_20] : memref<18x18x8xf32, #tpu.memory_space<vmem>>, vector<16x16x4xf32>
    %11 = vector.shape_cast %10 : vector<16x16x4xf32> to vector<256x4xf32>
    %12 = arith.truncf %11 : vector<256x4xf32> to vector<256x4xbf16>
    %c0_21 = arith.constant 0 : index
    %c0_22 = arith.constant 0 : index
    %c0_23 = arith.constant 0 : index
    %c0_24 = arith.constant 0 : index
    %13 = vector.load %arg2[%c0_21, %c0_22, %c0_23, %c0_24] : memref<3x3x4x4xbf16, #tpu.memory_space<vmem>>, vector<1x1x4x4xbf16>
    %14 = vector.shape_cast %13 : vector<1x1x4x4xbf16> to vector<4x4xbf16>
    %cst_25 = arith.constant dense<0.000000e+00> : vector<256x4xf32>
    %15 = tpu.matmul %12, %14, %cst_25 {dimension_numbers = #tpu.dot_dimension_numbers<[1], [0], [0], [1], [0, 0, 1, 1], [], []>} : vector<256x4xbf16>, vector<4x4xbf16>, vector<256x4xf32> -> vector<256x4xf32>
    %16 = arith.addf %9, %15 : vector<256x4xf32>
    %c0_26 = arith.constant 0 : index
    %c1_27 = arith.constant 1 : index
    %c0_28 = arith.constant 0 : index
    %17 = vector.load %arg7[%c0_26, %c1_27, %c0_28] : memref<18x18x8xf32, #tpu.memory_space<vmem>>, vector<16x16x4xf32>
    %18 = vector.shape_cast %17 : vector<16x16x4xf32> to vector<256x4xf32>
    %19 = arith.truncf %18 : vector<256x4xf32> to vector<256x4xbf16>
    %c0_29 = arith.constant 0 : index
    %c1_30 = arith.constant 1 : index
    %c0_31 = arith.constant 0 : index
    %c0_32 = arith.constant 0 : index
    %20 = vector.load %arg2[%c0_29, %c1_30, %c0_31, %c0_32] : memref<3x3x4x4xbf16, #tpu.memory_space<vmem>>, vector<1x1x4x4xbf16>
    %21 = vector.shape_cast %20 : vector<1x1x4x4xbf16> to vector<4x4xbf16>
    %cst_33 = arith.constant dense<0.000000e+00> : vector<256x4xf32>
    %22 = tpu.matmul %19, %21, %cst_33 {dimension_numbers = #tpu.dot_dimension_numbers<[1], [0], [0], [1], [0, 0, 1, 1], [], []>} : vector<256x4xbf16>, vector<4x4xbf16>, vector<256x4xf32> -> vector<256x4xf32>
    %23 = arith.addf %16, %22 : vector<256x4xf32>
    %c0_34 = arith.constant 0 : index
    %c2 = arith.constant 2 : index
    %c0_35 = arith.constant 0 : index
    %24 = vector.load %arg7[%c0_34, %c2, %c0_35] : memref<18x18x8xf32, #tpu.memory_space<vmem>>, vector<16x16x4xf32>
    %25 = vector.shape_cast %24 : vector<16x16x4xf32> to vector<256x4xf32>
    %26 = arith.truncf %25 : vector<256x4xf32> to vector<256x4xbf16>
    %c0_36 = arith.constant 0 : index
    %c2_37 = arith.constant 2 : index
    %c0_38 = arith.constant 0 : index
    %c0_39 = arith.constant 0 : index
    %27 = vector.load %arg2[%c0_36, %c2_37, %c0_38, %c0_39] : memref<3x3x4x4xbf16, #tpu.memory_space<vmem>>, vector<1x1x4x4xbf16>
    %28 = vector.shape_cast %27 : vector<1x1x4x4xbf16> to vector<4x4xbf16>
    %cst_40 = arith.constant dense<0.000000e+00> : vector<256x4xf32>
    %29 = tpu.matmul %26, %28, %cst_40 {dimension_numbers = #tpu.dot_dimension_numbers<[1], [0], [0], [1], [0, 0, 1, 1], [], []>} : vector<256x4xbf16>, vector<4x4xbf16>, vector<256x4xf32> -> vector<256x4xf32>
    %30 = arith.addf %23, %29 : vector<256x4xf32>
    %c1_41 = arith.constant 1 : index
    %c0_42 = arith.constant 0 : index
    %c0_43 = arith.constant 0 : index
    %31 = vector.load %arg7[%c1_41, %c0_42, %c0_43] : memref<18x18x8xf32, #tpu.memory_space<vmem>>, vector<16x16x4xf32>
    %32 = vector.shape_cast %31 : vector<16x16x4xf32> to vector<256x4xf32>
    %33 = arith.truncf %32 : vector<256x4xf32> to vector<256x4xbf16>
    %c1_44 = arith.constant 1 : index
    %c0_45 = arith.constant 0 : index
    %c0_46 = arith.constant 0 : index
    %c0_47 = arith.constant 0 : index
    %34 = vector.load %arg2[%c1_44, %c0_45, %c0_46, %c0_47] : memref<3x3x4x4xbf16, #tpu.memory_space<vmem>>, vector<1x1x4x4xbf16>
    %35 = vector.shape_cast %34 : vector<1x1x4x4xbf16> to vector<4x4xbf16>
    %cst_48 = arith.constant dense<0.000000e+00> : vector<256x4xf32>
    %36 = tpu.matmul %33, %35, %cst_48 {dimension_numbers = #tpu.dot_dimension_numbers<[1], [0], [0], [1], [0, 0, 1, 1], [], []>} : vector<256x4xbf16>, vector<4x4xbf16>, vector<256x4xf32> -> vector<256x4xf32>
    %37 = arith.addf %30, %36 : vector<256x4xf32>
    %c1_49 = arith.constant 1 : index
    %c1_50 = arith.constant 1 : index
    %c0_51 = arith.constant 0 : index
    %38 = vector.load %arg7[%c1_49, %c1_50, %c0_51] : memref<18x18x8xf32, #tpu.memory_space<vmem>>, vector<16x16x4xf32>
    %39 = vector.shape_cast %38 : vector<16x16x4xf32> to vector<256x4xf32>
    %40 = arith.truncf %39 : vector<256x4xf32> to vector<256x4xbf16>
    %c1_52 = arith.constant 1 : index
    %c1_53 = arith.constant 1 : index
    %c0_54 = arith.constant 0 : index
    %c0_55 = arith.constant 0 : index
    %41 = vector.load %arg2[%c1_52, %c1_53, %c0_54, %c0_55] : memref<3x3x4x4xbf16, #tpu.memory_space<vmem>>, vector<1x1x4x4xbf16>
    %42 = vector.shape_cast %41 : vector<1x1x4x4xbf16> to vector<4x4xbf16>
    %cst_56 = arith.constant dense<0.000000e+00> : vector<256x4xf32>
    %43 = tpu.matmul %40, %42, %cst_56 {dimension_numbers = #tpu.dot_dimension_numbers<[1], [0], [0], [1], [0, 0, 1, 1], [], []>} : vector<256x4xbf16>, vector<4x4xbf16>, vector<256x4xf32> -> vector<256x4xf32>
    %44 = arith.addf %37, %43 : vector<256x4xf32>
    %c1_57 = arith.constant 1 : index
    %c2_58 = arith.constant 2 : index
    %c0_59 = arith.constant 0 : index
    %45 = vector.load %arg7[%c1_57, %c2_58, %c0_59] : memref<18x18x8xf32, #tpu.memory_space<vmem>>, vector<16x16x4xf32>
    %46 = vector.shape_cast %45 : vector<16x16x4xf32> to vector<256x4xf32>
    %47 = arith.truncf %46 : vector<256x4xf32> to vector<256x4xbf16>
    %c1_60 = arith.constant 1 : index
    %c2_61 = arith.constant 2 : index
    %c0_62 = arith.constant 0 : index
    %c0_63 = arith.constant 0 : index
    %48 = vector.load %arg2[%c1_60, %c2_61, %c0_62, %c0_63] : memref<3x3x4x4xbf16, #tpu.memory_space<vmem>>, vector<1x1x4x4xbf16>
    %49 = vector.shape_cast %48 : vector<1x1x4x4xbf16> to vector<4x4xbf16>
    %cst_64 = arith.constant dense<0.000000e+00> : vector<256x4xf32>
    %50 = tpu.matmul %47, %49, %cst_64 {dimension_numbers = #tpu.dot_dimension_numbers<[1], [0], [0], [1], [0, 0, 1, 1], [], []>} : vector<256x4xbf16>, vector<4x4xbf16>, vector<256x4xf32> -> vector<256x4xf32>
    %51 = arith.addf %44, %50 : vector<256x4xf32>
    %c2_65 = arith.constant 2 : index
    %c0_66 = arith.constant 0 : index
    %c0_67 = arith.constant 0 : index
    %52 = vector.load %arg7[%c2_65, %c0_66, %c0_67] : memref<18x18x8xf32, #tpu.memory_space<vmem>>, vector<16x16x4xf32>
    %53 = vector.shape_cast %52 : vector<16x16x4xf32> to vector<256x4xf32>
    %54 = arith.truncf %53 : vector<256x4xf32> to vector<256x4xbf16>
    %c2_68 = arith.constant 2 : index
    %c0_69 = arith.constant 0 : index
    %c0_70 = arith.constant 0 : index
    %c0_71 = arith.constant 0 : index
    %55 = vector.load %arg2[%c2_68, %c0_69, %c0_70, %c0_71] : memref<3x3x4x4xbf16, #tpu.memory_space<vmem>>, vector<1x1x4x4xbf16>
    %56 = vector.shape_cast %55 : vector<1x1x4x4xbf16> to vector<4x4xbf16>
    %cst_72 = arith.constant dense<0.000000e+00> : vector<256x4xf32>
    %57 = tpu.matmul %54, %56, %cst_72 {dimension_numbers = #tpu.dot_dimension_numbers<[1], [0], [0], [1], [0, 0, 1, 1], [], []>} : vector<256x4xbf16>, vector<4x4xbf16>, vector<256x4xf32> -> vector<256x4xf32>
    %58 = arith.addf %51, %57 : vector<256x4xf32>
    %c2_73 = arith.constant 2 : index
    %c1_74 = arith.constant 1 : index
    %c0_75 = arith.constant 0 : index
    %59 = vector.load %arg7[%c2_73, %c1_74, %c0_75] : memref<18x18x8xf32, #tpu.memory_space<vmem>>, vector<16x16x4xf32>
    %60 = vector.shape_cast %59 : vector<16x16x4xf32> to vector<256x4xf32>
    %61 = arith.truncf %60 : vector<256x4xf32> to vector<256x4xbf16>
    %c2_76 = arith.constant 2 : index
    %c1_77 = arith.constant 1 : index
    %c0_78 = arith.constant 0 : index
    %c0_79 = arith.constant 0 : index
    %62 = vector.load %arg2[%c2_76, %c1_77, %c0_78, %c0_79] : memref<3x3x4x4xbf16, #tpu.memory_space<vmem>>, vector<1x1x4x4xbf16>
    %63 = vector.shape_cast %62 : vector<1x1x4x4xbf16> to vector<4x4xbf16>
    %cst_80 = arith.constant dense<0.000000e+00> : vector<256x4xf32>
    %64 = tpu.matmul %61, %63, %cst_80 {dimension_numbers = #tpu.dot_dimension_numbers<[1], [0], [0], [1], [0, 0, 1, 1], [], []>} : vector<256x4xbf16>, vector<4x4xbf16>, vector<256x4xf32> -> vector<256x4xf32>
    %65 = arith.addf %58, %64 : vector<256x4xf32>
    %c2_81 = arith.constant 2 : index
    %c2_82 = arith.constant 2 : index
    %c0_83 = arith.constant 0 : index
    %66 = vector.load %arg7[%c2_81, %c2_82, %c0_83] : memref<18x18x8xf32, #tpu.memory_space<vmem>>, vector<16x16x4xf32>
    %67 = vector.shape_cast %66 : vector<16x16x4xf32> to vector<256x4xf32>
    %68 = arith.truncf %67 : vector<256x4xf32> to vector<256x4xbf16>
    %c2_84 = arith.constant 2 : index
    %c2_85 = arith.constant 2 : index
    %c0_86 = arith.constant 0 : index
    %c0_87 = arith.constant 0 : index
    %69 = vector.load %arg2[%c2_84, %c2_85, %c0_86, %c0_87] : memref<3x3x4x4xbf16, #tpu.memory_space<vmem>>, vector<1x1x4x4xbf16>
    %70 = vector.shape_cast %69 : vector<1x1x4x4xbf16> to vector<4x4xbf16>
    %cst_88 = arith.constant dense<0.000000e+00> : vector<256x4xf32>
    %71 = tpu.matmul %68, %70, %cst_88 {dimension_numbers = #tpu.dot_dimension_numbers<[1], [0], [0], [1], [0, 0, 1, 1], [], []>} : vector<256x4xbf16>, vector<4x4xbf16>, vector<256x4xf32> -> vector<256x4xf32>
    %72 = arith.addf %65, %71 : vector<256x4xf32>
    %c0_89 = arith.constant 0 : index
    %c0_90 = arith.constant 0 : index
    %73 = vector.load %arg3[%c0_89, %c0_90] : memref<1x4xf32, #tpu.memory_space<vmem>>, vector<1x4xf32>
    %74 = vector.shape_cast %73 : vector<1x4xf32> to vector<4xf32>
    %75 = vector.shape_cast %74 : vector<4xf32> to vector<1x4xf32>
    %76 = vector.broadcast %75 : vector<1x4xf32> to vector<256x4xf32>
    %77 = arith.addf %72, %76 : vector<256x4xf32>
    %cst_91 = arith.constant 0.000000e+00 : f32
    %78 = vector.broadcast %cst_91 : f32 to vector<256x4xf32>
    %79 = arith.cmpf ogt, %77, %78 : vector<256x4xf32>
    %cst_92 = arith.constant 2.000000e-01 : f32
    %80 = vector.broadcast %cst_92 : f32 to vector<256x4xf32>
    %81 = arith.mulf %80, %77 : vector<256x4xf32>
    %82 = arith.select %79, %77, %81 : vector<256x4xi1>, vector<256x4xf32>
    %83 = vector.shape_cast %82 : vector<256x4xf32> to vector<16x16x4xf32>
    %c1_93 = arith.constant 1 : index
    %c1_94 = arith.constant 1 : index
    %c4 = arith.constant 4 : index
    %84 = vector.load %arg7[%c1_93, %c1_94, %c4] : memref<18x18x8xf32, #tpu.memory_space<vmem>>, vector<16x16x4xf32>
    tpu.vector_store %arg7[%c1_93, %c1_94, %c4], %83 {strides = array<i32>} : memref<18x18x8xf32, #tpu.memory_space<vmem>>, vector<16x16x4xf32>,
    %cst_95 = arith.constant 0.000000e+00 : f32
    %85 = vector.broadcast %cst_95 : f32 to vector<256x4xf32>
    %c0_96 = arith.constant 0 : index
    %c0_97 = arith.constant 0 : index
    %c0_98 = arith.constant 0 : index
    %86 = vector.load %arg7[%c0_96, %c0_97, %c0_98] : memref<18x18x8xf32, #tpu.memory_space<vmem>>, vector<16x16x8xf32>
    %87 = vector.shape_cast %86 : vector<16x16x8xf32> to vector<256x8xf32>
    %88 = arith.truncf %87 : vector<256x8xf32> to vector<256x8xbf16>
    %c0_99 = arith.constant 0 : index
    %c0_100 = arith.constant 0 : index
    %c0_101 = arith.constant 0 : index
    %c0_102 = arith.constant 0 : index
    %89 = vector.load %arg4[%c0_99, %c0_100, %c0_101, %c0_102] : memref<3x3x8x4xbf16, #tpu.memory_space<vmem>>, vector<1x1x8x4xbf16>
    %90 = vector.shape_cast %89 : vector<1x1x8x4xbf16> to vector<8x4xbf16>
    %cst_103 = arith.constant dense<0.000000e+00> : vector<256x4xf32>
    %91 = tpu.matmul %88, %90, %cst_103 {dimension_numbers = #tpu.dot_dimension_numbers<[1], [0], [0], [1], [0, 0, 1, 1], [], []>} : vector<256x8xbf16>, vector<8x4xbf16>, vector<256x4xf32> -> vector<256x4xf32>
    %92 = arith.addf %85, %91 : vector<256x4xf32>
    %c0_104 = arith.constant 0 : index
    %c1_105 = arith.constant 1 : index
    %c0_106 = arith.constant 0 : index
    %93 = vector.load %arg7[%c0_104, %c1_105, %c0_106] : memref<18x18x8xf32, #tpu.memory_space<vmem>>, vector<16x16x8xf32>
    %94 = vector.shape_cast %93 : vector<16x16x8xf32> to vector<256x8xf32>
    %95 = arith.truncf %94 : vector<256x8xf32> to vector<256x8xbf16>
    %c0_107 = arith.constant 0 : index
    %c1_108 = arith.constant 1 : index
    %c0_109 = arith.constant 0 : index
    %c0_110 = arith.constant 0 : index
    %96 = vector.load %arg4[%c0_107, %c1_108, %c0_109, %c0_110] : memref<3x3x8x4xbf16, #tpu.memory_space<vmem>>, vector<1x1x8x4xbf16>
    %97 = vector.shape_cast %96 : vector<1x1x8x4xbf16> to vector<8x4xbf16>
    %cst_111 = arith.constant dense<0.000000e+00> : vector<256x4xf32>
    %98 = tpu.matmul %95, %97, %cst_111 {dimension_numbers = #tpu.dot_dimension_numbers<[1], [0], [0], [1], [0, 0, 1, 1], [], []>} : vector<256x8xbf16>, vector<8x4xbf16>, vector<256x4xf32> -> vector<256x4xf32>
    %99 = arith.addf %92, %98 : vector<256x4xf32>
    %c0_112 = arith.constant 0 : index
    %c2_113 = arith.constant 2 : index
    %c0_114 = arith.constant 0 : index
    %100 = vector.load %arg7[%c0_112, %c2_113, %c0_114] : memref<18x18x8xf32, #tpu.memory_space<vmem>>, vector<16x16x8xf32>
    %101 = vector.shape_cast %100 : vector<16x16x8xf32> to vector<256x8xf32>
    %102 = arith.truncf %101 : vector<256x8xf32> to vector<256x8xbf16>
    %c0_115 = arith.constant 0 : index
    %c2_116 = arith.constant 2 : index
    %c0_117 = arith.constant 0 : index
    %c0_118 = arith.constant 0 : index
    %103 = vector.load %arg4[%c0_115, %c2_116, %c0_117, %c0_118] : memref<3x3x8x4xbf16, #tpu.memory_space<vmem>>, vector<1x1x8x4xbf16>
    %104 = vector.shape_cast %103 : vector<1x1x8x4xbf16> to vector<8x4xbf16>
    %cst_119 = arith.constant dense<0.000000e+00> : vector<256x4xf32>
    %105 = tpu.matmul %102, %104, %cst_119 {dimension_numbers = #tpu.dot_dimension_numbers<[1], [0], [0], [1], [0, 0, 1, 1], [], []>} : vector<256x8xbf16>, vector<8x4xbf16>, vector<256x4xf32> -> vector<256x4xf32>
    %106 = arith.addf %99, %105 : vector<256x4xf32>
    %c1_120 = arith.constant 1 : index
    %c0_121 = arith.constant 0 : index
    %c0_122 = arith.constant 0 : index
    %107 = vector.load %arg7[%c1_120, %c0_121, %c0_122] : memref<18x18x8xf32, #tpu.memory_space<vmem>>, vector<16x16x8xf32>
    %108 = vector.shape_cast %107 : vector<16x16x8xf32> to vector<256x8xf32>
    %109 = arith.truncf %108 : vector<256x8xf32> to vector<256x8xbf16>
    %c1_123 = arith.constant 1 : index
    %c0_124 = arith.constant 0 : index
    %c0_125 = arith.constant 0 : index
    %c0_126 = arith.constant 0 : index
    %110 = vector.load %arg4[%c1_123, %c0_124, %c0_125, %c0_126] : memref<3x3x8x4xbf16, #tpu.memory_space<vmem>>, vector<1x1x8x4xbf16>
    %111 = vector.shape_cast %110 : vector<1x1x8x4xbf16> to vector<8x4xbf16>
    %cst_127 = arith.constant dense<0.000000e+00> : vector<256x4xf32>
    %112 = tpu.matmul %109, %111, %cst_127 {dimension_numbers = #tpu.dot_dimension_numbers<[1], [0], [0], [1], [0, 0, 1, 1], [], []>} : vector<256x8xbf16>, vector<8x4xbf16>, vector<256x4xf32> -> vector<256x4xf32>
    %113 = arith.addf %106, %112 : vector<256x4xf32>
    %c1_128 = arith.constant 1 : index
    %c1_129 = arith.constant 1 : index
    %c0_130 = arith.constant 0 : index
    %114 = vector.load %arg7[%c1_128, %c1_129, %c0_130] : memref<18x18x8xf32, #tpu.memory_space<vmem>>, vector<16x16x8xf32>
    %115 = vector.shape_cast %114 : vector<16x16x8xf32> to vector<256x8xf32>
    %116 = arith.truncf %115 : vector<256x8xf32> to vector<256x8xbf16>
    %c1_131 = arith.constant 1 : index
    %c1_132 = arith.constant 1 : index
    %c0_133 = arith.constant 0 : index
    %c0_134 = arith.constant 0 : index
    %117 = vector.load %arg4[%c1_131, %c1_132, %c0_133, %c0_134] : memref<3x3x8x4xbf16, #tpu.memory_space<vmem>>, vector<1x1x8x4xbf16>
    %118 = vector.shape_cast %117 : vector<1x1x8x4xbf16> to vector<8x4xbf16>
    %cst_135 = arith.constant dense<0.000000e+00> : vector<256x4xf32>
    %119 = tpu.matmul %116, %118, %cst_135 {dimension_numbers = #tpu.dot_dimension_numbers<[1], [0], [0], [1], [0, 0, 1, 1], [], []>} : vector<256x8xbf16>, vector<8x4xbf16>, vector<256x4xf32> -> vector<256x4xf32>
    %120 = arith.addf %113, %119 : vector<256x4xf32>
    %c1_136 = arith.constant 1 : index
    %c2_137 = arith.constant 2 : index
    %c0_138 = arith.constant 0 : index
    %121 = vector.load %arg7[%c1_136, %c2_137, %c0_138] : memref<18x18x8xf32, #tpu.memory_space<vmem>>, vector<16x16x8xf32>
    %122 = vector.shape_cast %121 : vector<16x16x8xf32> to vector<256x8xf32>
    %123 = arith.truncf %122 : vector<256x8xf32> to vector<256x8xbf16>
    %c1_139 = arith.constant 1 : index
    %c2_140 = arith.constant 2 : index
    %c0_141 = arith.constant 0 : index
    %c0_142 = arith.constant 0 : index
    %124 = vector.load %arg4[%c1_139, %c2_140, %c0_141, %c0_142] : memref<3x3x8x4xbf16, #tpu.memory_space<vmem>>, vector<1x1x8x4xbf16>
    %125 = vector.shape_cast %124 : vector<1x1x8x4xbf16> to vector<8x4xbf16>
    %cst_143 = arith.constant dense<0.000000e+00> : vector<256x4xf32>
    %126 = tpu.matmul %123, %125, %cst_143 {dimension_numbers = #tpu.dot_dimension_numbers<[1], [0], [0], [1], [0, 0, 1, 1], [], []>} : vector<256x8xbf16>, vector<8x4xbf16>, vector<256x4xf32> -> vector<256x4xf32>
    %127 = arith.addf %120, %126 : vector<256x4xf32>
    %c2_144 = arith.constant 2 : index
    %c0_145 = arith.constant 0 : index
    %c0_146 = arith.constant 0 : index
    %128 = vector.load %arg7[%c2_144, %c0_145, %c0_146] : memref<18x18x8xf32, #tpu.memory_space<vmem>>, vector<16x16x8xf32>
    %129 = vector.shape_cast %128 : vector<16x16x8xf32> to vector<256x8xf32>
    %130 = arith.truncf %129 : vector<256x8xf32> to vector<256x8xbf16>
    %c2_147 = arith.constant 2 : index
    %c0_148 = arith.constant 0 : index
    %c0_149 = arith.constant 0 : index
    %c0_150 = arith.constant 0 : index
    %131 = vector.load %arg4[%c2_147, %c0_148, %c0_149, %c0_150] : memref<3x3x8x4xbf16, #tpu.memory_space<vmem>>, vector<1x1x8x4xbf16>
    %132 = vector.shape_cast %131 : vector<1x1x8x4xbf16> to vector<8x4xbf16>
    %cst_151 = arith.constant dense<0.000000e+00> : vector<256x4xf32>
    %133 = tpu.matmul %130, %132, %cst_151 {dimension_numbers = #tpu.dot_dimension_numbers<[1], [0], [0], [1], [0, 0, 1, 1], [], []>} : vector<256x8xbf16>, vector<8x4xbf16>, vector<256x4xf32> -> vector<256x4xf32>
    %134 = arith.addf %127, %133 : vector<256x4xf32>
    %c2_152 = arith.constant 2 : index
    %c1_153 = arith.constant 1 : index
    %c0_154 = arith.constant 0 : index
    %135 = vector.load %arg7[%c2_152, %c1_153, %c0_154] : memref<18x18x8xf32, #tpu.memory_space<vmem>>, vector<16x16x8xf32>
    %136 = vector.shape_cast %135 : vector<16x16x8xf32> to vector<256x8xf32>
    %137 = arith.truncf %136 : vector<256x8xf32> to vector<256x8xbf16>
    %c2_155 = arith.constant 2 : index
    %c1_156 = arith.constant 1 : index
    %c0_157 = arith.constant 0 : index
    %c0_158 = arith.constant 0 : index
    %138 = vector.load %arg4[%c2_155, %c1_156, %c0_157, %c0_158] : memref<3x3x8x4xbf16, #tpu.memory_space<vmem>>, vector<1x1x8x4xbf16>
    %139 = vector.shape_cast %138 : vector<1x1x8x4xbf16> to vector<8x4xbf16>
    %cst_159 = arith.constant dense<0.000000e+00> : vector<256x4xf32>
    %140 = tpu.matmul %137, %139, %cst_159 {dimension_numbers = #tpu.dot_dimension_numbers<[1], [0], [0], [1], [0, 0, 1, 1], [], []>} : vector<256x8xbf16>, vector<8x4xbf16>, vector<256x4xf32> -> vector<256x4xf32>
    %141 = arith.addf %134, %140 : vector<256x4xf32>
    %c2_160 = arith.constant 2 : index
    %c2_161 = arith.constant 2 : index
    %c0_162 = arith.constant 0 : index
    %142 = vector.load %arg7[%c2_160, %c2_161, %c0_162] : memref<18x18x8xf32, #tpu.memory_space<vmem>>, vector<16x16x8xf32>
    %143 = vector.shape_cast %142 : vector<16x16x8xf32> to vector<256x8xf32>
    %144 = arith.truncf %143 : vector<256x8xf32> to vector<256x8xbf16>
    %c2_163 = arith.constant 2 : index
    %c2_164 = arith.constant 2 : index
    %c0_165 = arith.constant 0 : index
    %c0_166 = arith.constant 0 : index
    %145 = vector.load %arg4[%c2_163, %c2_164, %c0_165, %c0_166] : memref<3x3x8x4xbf16, #tpu.memory_space<vmem>>, vector<1x1x8x4xbf16>
    %146 = vector.shape_cast %145 : vector<1x1x8x4xbf16> to vector<8x4xbf16>
    %cst_167 = arith.constant dense<0.000000e+00> : vector<256x4xf32>
    %147 = tpu.matmul %144, %146, %cst_167 {dimension_numbers = #tpu.dot_dimension_numbers<[1], [0], [0], [1], [0, 0, 1, 1], [], []>} : vector<256x8xbf16>, vector<8x4xbf16>, vector<256x4xf32> -> vector<256x4xf32>
    %148 = arith.addf %141, %147 : vector<256x4xf32>
    %c0_168 = arith.constant 0 : index
    %c0_169 = arith.constant 0 : index
    %149 = vector.load %arg5[%c0_168, %c0_169] : memref<1x4xf32, #tpu.memory_space<vmem>>, vector<1x4xf32>
    %150 = vector.shape_cast %149 : vector<1x4xf32> to vector<4xf32>
    %151 = vector.shape_cast %150 : vector<4xf32> to vector<1x4xf32>
    %152 = vector.broadcast %151 : vector<1x4xf32> to vector<256x4xf32>
    %153 = arith.addf %148, %152 : vector<256x4xf32>
    %cst_170 = arith.constant 0.000000e+00 : f32
    %154 = vector.broadcast %cst_170 : f32 to vector<256x4xf32>
    %155 = arith.cmpf ogt, %153, %154 : vector<256x4xf32>
    %cst_171 = arith.constant 2.000000e-01 : f32
    %156 = vector.broadcast %cst_171 : f32 to vector<256x4xf32>
    %157 = arith.mulf %156, %153 : vector<256x4xf32>
    %158 = arith.select %155, %153, %157 : vector<256x4xi1>, vector<256x4xf32>
    %159 = vector.shape_cast %158 : vector<256x4xf32> to vector<16x16x4xf32>
    %160 = tpu.concatenate %7, %83, %159 in 2 : vector<16x16x4xf32>, vector<16x16x4xf32>, vector<16x16x4xf32> -> vector<16x16x12xf32>
    %c0_172 = arith.constant 0 : index
    %c0_173 = arith.constant 0 : index
    %c0_174 = arith.constant 0 : index
    %c0_175 = arith.constant 0 : index
    %161 = vector.load %arg6[%c0_172, %c0_173, %c0_174, %c0_175] : memref<1x16x16x12xf32, #tpu.memory_space<vmem>>, vector<1x16x16x12xf32>
    %162 = vector.shape_cast %161 : vector<1x16x16x12xf32> to vector<16x16x12xf32>
    %163 = vector.shape_cast %160 : vector<16x16x12xf32> to vector<1x16x16x12xf32>
    tpu.vector_store %arg6[%c0_172, %c0_173, %c0_174, %c0_175], %163 {strides = array<i32>} : memref<1x16x16x12xf32, #tpu.memory_space<vmem>>, vector<1x16x16x12xf32>,
    return
  }
  func.func @transform_0(%arg0: i32) -> (i32, i32, i32, i32) {
    %c0_i32 = arith.constant 0 : i32
    %c0_i32_0 = arith.constant 0 : i32
    %c0_i32_1 = arith.constant 0 : i32
    %c0_i32_2 = arith.constant 0 : i32
    return %arg0, %c0_i32, %c0_i32_0, %c0_i32_1 : i32, i32, i32, i32
  }
  func.func @transform_1(%arg0: i32) -> (i32, i32, i32, i32) {
    %c0_i32 = arith.constant 0 : i32
    %c0_i32_0 = arith.constant 0 : i32
    %c0_i32_1 = arith.constant 0 : i32
    %c0_i32_2 = arith.constant 0 : i32
    %c0_i32_3 = arith.constant 0 : i32
    return %c0_i32, %c0_i32_0, %c0_i32_1, %c0_i32_2 : i32, i32, i32, i32
  }
  func.func @transform_2(%arg0: i32) -> (i32, i32) {
    %c0_i32 = arith.constant 0 : i32
    %c0_i32_0 = arith.constant 0 : i32
    %c0_i32_1 = arith.constant 0 : i32
    return %c0_i32, %c0_i32_0 : i32, i32
  }
  func.func @transform_3(%arg0: i32) -> (i32, i32, i32, i32) {
    %c0_i32 = arith.constant 0 : i32
    %c0_i32_0 = arith.constant 0 : i32
    %c0_i32_1 = arith.constant 0 : i32
    %c0_i32_2 = arith.constant 0 : i32
    %c0_i32_3 = arith.constant 0 : i32
    return %c0_i32, %c0_i32_0, %c0_i32_1, %c0_i32_2 : i32, i32, i32, i32
  }
  func.func @transform_4(%arg0: i32) -> (i32, i32) {
    %c0_i32 = arith.constant 0 : i32
    %c0_i32_0 = arith.constant 0 : i32
    %c0_i32_1 = arith.constant 0 : i32
    return %c0_i32, %c0_i32_0 : i32, i32
  }
  func.func @transform_5(%arg0: i32) -> (i32, i32, i32, i32) {
    %c0_i32 = arith.constant 0 : i32
    %c0_i32_0 = arith.constant 0 : i32
    %c0_i32_1 = arith.constant 0 : i32
    %c0_i32_2 = arith.constant 0 : i32
    return %arg0, %c0_i32, %c0_i32_0, %c0_i32_1 : i32, i32, i32, i32
  }
}

</mosaic_0001>

<llo_original>
// kernel: tpu_custom_call.1
$region0: #{tpu_custom_call.1}
  #allocation0 [shape = 'u32[]', space=smem, size = 0x4, offset = 0x4, fixed_abs, tag = 'smem constant byte address 0x4 - core index']
  #allocation1 [shape = 'u32[144,128]{1,0:T(1,128)}', space=vmem, size = 0x12000, scoped, tag = 'internal scratch']
  #allocation2 [shape = 'f32[18,18,8]{2,1,0:T(8,128)}', space=vmem, size = 0x36000, scoped, tag = 'scratch operand']
  %s0 = inlined_call_operand.vmem [shape: f32[2,16,16,4], index: 0, kind: input, shape index: {}]
  %s1 = inlined_call_operand.vmem [shape: bf16[3,3,4,4], index: 1, kind: input, shape index: {}]
  %s2 = inlined_call_operand.vmem [shape: f32[1,4], index: 2, kind: input, shape index: {}]
  %s3 = inlined_call_operand.vmem [shape: bf16[3,3,8,4], index: 3, kind: input, shape index: {}]
  %s4 = inlined_call_operand.vmem [shape: f32[1,4], index: 4, kind: input, shape index: {}]
  %s5 = inlined_call_operand.vmem [shape: f32[2,16,16,12], index: 5, kind: output, shape index: {}]
  %s6 = sld [smem:[#allocation0]]
  $region53: #{tpu_custom_call.1} parent=0
    _
  %s8 = ssub.s32 1, %s6
  %s9 = scalar_select 0, %s8, %s6
  loop: start=0, step=1, limit=4
  $region2: #{tpu_custom_call.1} parent=0 // loop_pre_header
    _
  $region3: #{tpu_custom_call.1} parent=0 // loop_header
    %s11 = sphi 0, %s15
    %p12 = scmp.ge.s32.totalorder %s11, 4
    %s21 = sphi 0, %s23
    %s24 = sphi 0, %s21
    %s25 = sphi 0, %s24
    %s41 = sphi 0, %s25
    %s45 = sphi 0, %s45
    %s47 = sphi 0, %s45
    %s48 = sphi 0, %s47
    %s62 = sphi 0, %s48
    %s66 = sphi 0, %s66
    %s68 = sphi 0, %s66
    %s69 = sphi 0, %s68
    %s83 = sphi 0, %s69
    %s87 = sphi 0, %s87
    %s89 = sphi 0, %s87
    %s90 = sphi 0, %s89
    %s104 = sphi 0, %s90
    %s108 = sphi 0, %s108
    %s110 = sphi 0, %s108
    %s111 = sphi 0, %s110
    %s125 = sphi 0, %s111
    %s131 = sphi 0, %s133
    %s134 = sphi 0, %s131
    %s135 = sphi 0, %s134
    %s151 = sphi 0, %s135
  $region4: #{tpu_custom_call.1} parent=0 // loop_header_branch
    %14 = sbr.rel (%p12) target = $region8
  $region5: #{tpu_custom_call.1} parent=0 // loop_body
    %s16 = ssub.s32 %s11, 1
    %s17 = ssub.s32 %s11, 2
    %s18 = sadd.s32 %s11, 1
    %s19 = ssub.s32 %s11, %s18
    %p20 = scmp.eq.s32.totalorder %s19, 0
    %s22 = sadd.s32 %s21, 1
    %s23 = scalar_select %p20, %s21, %s22
    %p26 = pneg %p20
    %p27 = scmp.eq.s32.totalorder %s11, 1
    %p28 = por %p26, %p27
    %p29 = scmp.ne.s32.totalorder %s21, %s24
    %p30 = scmp.eq.s32.totalorder %s11, 0
    %p31 = por %p29, %p30
    %p32 = scmp.ne.s32.totalorder %s21, %s24
    %p33 = scmp.eq.s32.totalorder %s16, 1
    %p34 = por %p32, %p33
    %p35 = scmp.ne.s32.totalorder %s24, %s25
    %p36 = scmp.eq.s32.totalorder %s16, 0
    %p37 = por %p35, %p36
    %p38 = scmp.ne.s32.totalorder %s24, %s25
    %p39 = scmp.eq.s32.totalorder %s17, 1
    %p40 = por %p38, %p39
    %p42 = scmp.ne.s32.totalorder %s25, %s41
    %p43 = scmp.eq.s32.totalorder %s17, 0
    %p44 = por %p42, %p43
    %s46 = sadd.s32 %s45, 1
    %p49 = scmp.eq.s32.totalorder %s11, 1
    %p50 = scmp.ne.s32.totalorder %s45, %s47
    %p51 = scmp.eq.s32.totalorder %s11, 0
    %p52 = por %p50, %p51
    %p53 = scmp.ne.s32.totalorder %s45, %s47
    %p54 = scmp.eq.s32.totalorder %s16, 1
    %p55 = por %p53, %p54
    %p56 = scmp.ne.s32.totalorder %s47, %s48
    %p57 = scmp.eq.s32.totalorder %s16, 0
    %p58 = por %p56, %p57
    %p59 = scmp.ne.s32.totalorder %s47, %s48
    %p60 = scmp.eq.s32.totalorder %s17, 1
    %p61 = por %p59, %p60
    %p63 = scmp.ne.s32.totalorder %s48, %s62
    %p64 = scmp.eq.s32.totalorder %s17, 0
    %p65 = por %p63, %p64
    %s67 = sadd.s32 %s66, 1
    %p70 = scmp.eq.s32.totalorder %s11, 1
    %p71 = scmp.ne.s32.totalorder %s66, %s68
    %p72 = scmp.eq.s32.totalorder %s11, 0
    %p73 = por %p71, %p72
    %p74 = scmp.ne.s32.totalorder %s66, %s68
    %p75 = scmp.eq.s32.totalorder %s16, 1
    %p76 = por %p74, %p75
    %p77 = scmp.ne.s32.totalorder %s68, %s69
    %p78 = scmp.eq.s32.totalorder %s16, 0
    %p79 = por %p77, %p78
    %p80 = scmp.ne.s32.totalorder %s68, %s69
    %p81 = scmp.eq.s32.totalorder %s17, 1
    %p82 = por %p80, %p81
    %p84 = scmp.ne.s32.totalorder %s69, %s83
    %p85 = scmp.eq.s32.totalorder %s17, 0
    %p86 = por %p84, %p85
    %s88 = sadd.s32 %s87, 1
    %p91 = scmp.eq.s32.totalorder %s11, 1
    %p92 = scmp.ne.s32.totalorder %s87, %s89
    %p93 = scmp.eq.s32.totalorder %s11, 0
    %p94 = por %p92, %p93
    %p95 = scmp.ne.s32.totalorder %s87, %s89
    %p96 = scmp.eq.s32.totalorder %s16, 1
    %p97 = por %p95, %p96
    %p98 = scmp.ne.s32.totalorder %s89, %s90
    %p99 = scmp.eq.s32.totalorder %s16, 0
    %p100 = por %p98, %p99
    %p101 = scmp.ne.s32.totalorder %s89, %s90
    %p102 = scmp.eq.s32.totalorder %s17, 1
    %p103 = por %p101, %p102
    %p105 = scmp.ne.s32.totalorder %s90, %s104
    %p106 = scmp.eq.s32.totalorder %s17, 0
    %p107 = por %p105, %p106
    %s109 = sadd.s32 %s108, 1
    %p112 = scmp.eq.s32.totalorder %s11, 1
    %p113 = scmp.ne.s32.totalorder %s108, %s110
    %p114 = scmp.eq.s32.totalorder %s11, 0
    %p115 = por %p113, %p114
    %p116 = scmp.ne.s32.totalorder %s108, %s110
    %p117 = scmp.eq.s32.totalorder %s16, 1
    %p118 = por %p116, %p117
    %p119 = scmp.ne.s32.totalorder %s110, %s111
    %p120 = scmp.eq.s32.totalorder %s16, 0
    %p121 = por %p119, %p120
    %p122 = scmp.ne.s32.totalorder %s110, %s111
    %p123 = scmp.eq.s32.totalorder %s17, 1
    %p124 = por %p122, %p123
    %p126 = scmp.ne.s32.totalorder %s111, %s125
    %p127 = scmp.eq.s32.totalorder %s17, 0
    %p128 = por %p126, %p127
    %s129 = ssub.s32 %s11, %s18
    %p130 = scmp.eq.s32.totalorder %s129, 0
    %s132 = sadd.s32 %s131, 1
    %s133 = scalar_select %p130, %s131, %s132
    %p136 = pneg %p130
    %p137 = scmp.eq.s32.totalorder %s11, 1
    %p138 = por %p136, %p137
    %p139 = scmp.ne.s32.totalorder %s131, %s134
    %p140 = scmp.eq.s32.totalorder %s11, 0
    %p141 = por %p139, %p140
    %p142 = scmp.ne.s32.totalorder %s131, %s134
    %p143 = scmp.eq.s32.totalorder %s16, 1
    %p144 = por %p142, %p143
    %p145 = scmp.ne.s32.totalorder %s134, %s135
    %p146 = scmp.eq.s32.totalorder %s16, 0
    %p147 = por %p145, %p146
    %p148 = scmp.ne.s32.totalorder %s134, %s135
    %p149 = scmp.eq.s32.totalorder %s17, 1
    %p150 = por %p148, %p149
    %p152 = scmp.ne.s32.totalorder %s135, %s151
    %p153 = scmp.eq.s32.totalorder %s17, 0
    %p154 = por %p152, %p153
    %p155 = scmp.le.s32.totalorder 1, %s11
    %p156 = scmp.lt.s32.totalorder %s11, 3
    %p157 = pnand %p155, %p156
    %p158 = pneg %p157
    // Predicated region
    $region9: #{tpu_custom_call.1} parent=5 // pred_check
      _
    $region10: #{tpu_custom_call.1} parent=5 // pred_check_branch
      %160 = sbr.rel (%p157) target = $region12
    $region11: #{tpu_custom_call.1} parent=5 // pred_region
      %s161 = ssub.s32 %s11, 1
      // Predicated region
      $region13: #{tpu_custom_call.1} parent=11 // pred_check
        %p162 = pneg %p58
      $region14: #{tpu_custom_call.1} parent=11 // pred_check_branch
        %164 = sbr.rel (%p162) target = $region16
      $region15: #{tpu_custom_call.1} parent=11 // pred_region
        _
      $region16: #{tpu_custom_call.1} parent=11 // pred_fallthru
        _
      // Predicated region
      $region17: #{tpu_custom_call.1} parent=11 // pred_check
        %p165 = pneg %p79
      $region18: #{tpu_custom_call.1} parent=11 // pred_check_branch
        %167 = sbr.rel (%p165) target = $region20
      $region19: #{tpu_custom_call.1} parent=11 // pred_region
        _
      $region20: #{tpu_custom_call.1} parent=11 // pred_fallthru
        _
      // Predicated region
      $region21: #{tpu_custom_call.1} parent=11 // pred_check
        %p168 = pneg %p100
      $region22: #{tpu_custom_call.1} parent=11 // pred_check_branch
        %170 = sbr.rel (%p168) target = $region24
      $region23: #{tpu_custom_call.1} parent=11 // pred_region
        _
      $region24: #{tpu_custom_call.1} parent=11 // pred_fallthru
        _
      // Predicated region
      $region25: #{tpu_custom_call.1} parent=11 // pred_check
        %p171 = pneg %p121
      $region26: #{tpu_custom_call.1} parent=11 // pred_check_branch
        %173 = sbr.rel (%p171) target = $region28
      $region27: #{tpu_custom_call.1} parent=11 // pred_region
        _
      $region28: #{tpu_custom_call.1} parent=11 // pred_fallthru
        _
    $region12: #{tpu_custom_call.1} parent=5 // pred_fallthru
      _
    %p174 = scmp.lt.s32.totalorder %s11, 2
    // Predicated region
    $region29: #{tpu_custom_call.1} parent=5 // pred_check
      %p175 = pneg %p174
    $region30: #{tpu_custom_call.1} parent=5 // pred_check_branch
      %177 = sbr.rel (%p175) target = $region32
    $region31: #{tpu_custom_call.1} parent=5 // pred_region
      // Predicated region
      $region33: #{tpu_custom_call.1} parent=31 // pred_check
        %p178 = pneg %p31
      $region34: #{tpu_custom_call.1} parent=31 // pred_check_branch
        %180 = sbr.rel (%p178) target = $region36
      $region35: #{tpu_custom_call.1} parent=31 // pred_region
        %p181 = scmp.lt.s32.totalorder %s11, 1
        %s182 = scalar_select %p181, %s11, 1
        %s183 = smul.addr %s182, 32
        %s184 = smul.addr %s183, 8
        %s185 = scalar_lea.vmem %s0, %s184
      $region36: #{tpu_custom_call.1} parent=31 // pred_fallthru
        _
    $region32: #{tpu_custom_call.1} parent=5 // pred_fallthru
      _
    %p186 = scmp.le.s32.totalorder 1, %s11
    %p187 = scmp.lt.s32.totalorder %s11, 3
    %p188 = pnand %p186, %p187
    %p189 = pneg %p188
    // Predicated region
    $region37: #{tpu_custom_call.1} parent=5 // pred_check
      _
    $region38: #{tpu_custom_call.1} parent=5 // pred_check_branch
      %191 = sbr.rel (%p188) target = $region40
    $region39: #{tpu_custom_call.1} parent=5 // pred_region
      %s192 = ssub.s32 %s11, 1
      %p193 = scmp.lt.s32.totalorder %s16, 1
      %s194 = scalar_select %p193, %s16, 1
      %s195 = smul.addr %s194, 32
      %s196 = smul.addr %s195, 8
      %s197 = scalar_lea.vmem %s0, %s196
      %p198 = pneg %p37
      %p199 = pneg %p34
      %p200 = pneg %p58
      %p201 = pneg %p55
      %p202 = pneg %p79
      %p203 = pneg %p76
      %p204 = pneg %p100
      %p205 = pneg %p97
      %p206 = pneg %p121
      %p207 = pneg %p118
      %p208 = pneg %p147
      %p209 = pneg %p144
      %p210 = scmp.lt.s32.totalorder %s16, 1
      %s211 = scalar_select %p210, %s16, 1
      %s212 = smul.addr %s211, 32
      %s213 = smul.addr %s212, 8
      %s214 = scalar_lea.vmem %s5, %s213
      %p215 = scmp.lt.s32.totalorder %s16, 1
      %s216 = scalar_select %p215, %s16, 1
      %s217 = smul.addr %s216, 32
      %s218 = smul.addr %s217, 8
      %s219 = scalar_lea.vmem %s0, %s218
      %p220 = scmp.lt.s32.totalorder %s16, 1
      %s221 = scalar_select %p220, %s16, 1
      %s222 = smul.addr %s221, 32
      %s223 = smul.addr %s222, 8
      %s224 = scalar_lea.vmem %s5, %s223
      %vm226 = vcmask 64512
      %227 = vst.msk [vmem:[#allocation2] sm:$0xff] %vm226, 0.0
      %228 = vst.msk [vmem:[#allocation2 + $0x8] sm:$0xff] %vm226, 0.0
      %vm229 = vcmask 58368
      %230 = vst.msk [vmem:[#allocation2 + $0x10] sm:$0x3] %vm229, 0.0
      %s231 = scalar_lea.vmem [#allocation2], 408
      %232 = vst.msk [vmem:[%s231] sm:$0xff] %vm226, 0.0
      %233 = vst.msk [vmem:[%s231 + $0x8] sm:$0xff] %vm226, 0.0
      %234 = vst.msk [vmem:[%s231 + $0x10] sm:$0x3] %vm229, 0.0
      %vm235 = vcmask 57344
      %236 = vst.msk [vmem:[#allocation2] sm:$0x1] %vm235, 0.0
      %237 = vst.msk [vmem:[#allocation2 + $0x18] sm:$0x1] %vm235, 0.0
      %238 = vst.msk [vmem:[#allocation2 + $0x30] sm:$0x1] %vm235, 0.0
      %239 = vst.msk [vmem:[#allocation2 + $0x48] sm:$0x1] %vm235, 0.0
      %240 = vst.msk [vmem:[#allocation2 + $0x60] sm:$0x1] %vm235, 0.0
      %241 = vst.msk [vmem:[#allocation2 + $0x78] sm:$0x1] %vm235, 0.0
      %242 = vst.msk [vmem:[#allocation2 + $0x90] sm:$0x1] %vm235, 0.0
      %243 = vst.msk [vmem:[#allocation2 + $0xa8] sm:$0x1] %vm235, 0.0
      %244 = vst.msk [vmem:[#allocation2 + $0xc0] sm:$0x1] %vm235, 0.0
      %245 = vst.msk [vmem:[#allocation2 + $0xd8] sm:$0x1] %vm235, 0.0
      %246 = vst.msk [vmem:[#allocation2 + $0xf0] sm:$0x1] %vm235, 0.0
      %247 = vst.msk [vmem:[#allocation2 + $0x108] sm:$0x1] %vm235, 0.0
      %248 = vst.msk [vmem:[#allocation2 + $0x120] sm:$0x1] %vm235, 0.0
      %249 = vst.msk [vmem:[#allocation2 + $0x138] sm:$0x1] %vm235, 0.0
      %250 = vst.msk [vmem:[#allocation2 + $0x150] sm:$0x1] %vm235, 0.0
      %251 = vst.msk [vmem:[#allocation2 + $0x168] sm:$0x1] %vm235, 0.0
      %252 = vst.msk [vmem:[#allocation2 + $0x180] sm:$0x1] %vm235, 0.0
      %253 = vst.msk [vmem:[#allocation2 + $0x198] sm:$0x1] %vm235, 0.0
      %254 = vst.msk [vmem:[#allocation2 + $0x11] sm:$0x1] %vm235, 0.0
      %255 = vst.msk [vmem:[#allocation2 + $0x29] sm:$0x1] %vm235, 0.0
      %256 = vst.msk [vmem:[#allocation2 + $0x41] sm:$0x1] %vm235, 0.0
      %257 = vst.msk [vmem:[#allocation2 + $0x59] sm:$0x1] %vm235, 0.0
      %258 = vst.msk [vmem:[#allocation2 + $0x71] sm:$0x1] %vm235, 0.0
      %259 = vst.msk [vmem:[#allocation2 + $0x89] sm:$0x1] %vm235, 0.0
      %260 = vst.msk [vmem:[#allocation2 + $0xa1] sm:$0x1] %vm235, 0.0
      %261 = vst.msk [vmem:[#allocation2 + $0xb9] sm:$0x1] %vm235, 0.0
      %262 = vst.msk [vmem:[#allocation2 + $0xd1] sm:$0x1] %vm235, 0.0
      %263 = vst.msk [vmem:[#allocation2 + $0xe9] sm:$0x1] %vm235, 0.0
      %264 = vst.msk [vmem:[#allocation2 + $0x101] sm:$0x1] %vm235, 0.0
      %265 = vst.msk [vmem:[#allocation2 + $0x119] sm:$0x1] %vm235, 0.0
      %266 = vst.msk [vmem:[#allocation2 + $0x131] sm:$0x1] %vm235, 0.0
      %267 = vst.msk [vmem:[#allocation2 + $0x149] sm:$0x1] %vm235, 0.0
      %268 = vst.msk [vmem:[#allocation2 + $0x161] sm:$0x1] %vm235, 0.0
      %269 = vst.msk [vmem:[#allocation2 + $0x179] sm:$0x1] %vm235, 0.0
      %270 = vst.msk [vmem:[#allocation2 + $0x191] sm:$0x1] %vm235, 0.0
      %271 = vst.msk [vmem:[#allocation2 + $0x1a9] sm:$0x1] %vm235, 0.0
      %v272 = vld [vmem:[%s219] sm:$0xff]
      %v273 = vld [vmem:[%s219 + $0x8] sm:$0xff]
      %v274 = vld [vmem:[%s219 + $0x10] sm:$0xff]
      %v275 = vld [vmem:[%s219 + $0x18] sm:$0xff]
      %v276 = vld [vmem:[%s219 + $0x20] sm:$0xff]
      %v277 = vld [vmem:[%s219 + $0x28] sm:$0xff]
      %v278 = vld [vmem:[%s219 + $0x30] sm:$0xff]
      %v279 = vld [vmem:[%s219 + $0x38] sm:$0xff]
      %v280 = vld [vmem:[%s219 + $0x40] sm:$0xff]
      %v281 = vld [vmem:[%s219 + $0x48] sm:$0xff]
      %v282 = vld [vmem:[%s219 + $0x50] sm:$0xff]
      %v283 = vld [vmem:[%s219 + $0x58] sm:$0xff]
      %v284 = vld [vmem:[%s219 + $0x60] sm:$0xff]
      %v285 = vld [vmem:[%s219 + $0x68] sm:$0xff]
      %v286 = vld [vmem:[%s219 + $0x70] sm:$0xff]
      %v287 = vld [vmem:[%s219 + $0x78] sm:$0xff]
      %v288 = vld [vmem:[%s219 + $0x80] sm:$0xff]
      %v289 = vld [vmem:[%s219 + $0x88] sm:$0xff]
      %v290 = vld [vmem:[%s219 + $0x90] sm:$0xff]
      %v291 = vld [vmem:[%s219 + $0x98] sm:$0xff]
      %v292 = vld [vmem:[%s219 + $0xa0] sm:$0xff]
      %v293 = vld [vmem:[%s219 + $0xa8] sm:$0xff]
      %v294 = vld [vmem:[%s219 + $0xb0] sm:$0xff]
      %v295 = vld [vmem:[%s219 + $0xb8] sm:$0xff]
      %v296 = vld [vmem:[%s219 + $0xc0] sm:$0xff]
      %v297 = vld [vmem:[%s219 + $0xc8] sm:$0xff]
      %v298 = vld [vmem:[%s219 + $0xd0] sm:$0xff]
      %v299 = vld [vmem:[%s219 + $0xd8] sm:$0xff]
      %v300 = vld [vmem:[%s219 + $0xe0] sm:$0xff]
      %v301 = vld [vmem:[%s219 + $0xe8] sm:$0xff]
      %v302 = vld [vmem:[%s219 + $0xf0] sm:$0xff]
      %v303 = vld [vmem:[%s219 + $0xf8] sm:$0xff]
      %s304 = scalar_lea.vmem [#allocation2], 24
      %vm305 = vcmask 31744
      %306 = vst.msk [vmem:[%s304 + $0x1] sm:$0xff] %vm305, %v272
      %307 = vst.msk [vmem:[%s304 + $0x9] sm:$0xff] %vm305, %v273
      %308 = vst.msk [vmem:[%s304 + $0x19] sm:$0xff] %vm305, %v274
      %309 = vst.msk [vmem:[%s304 + $0x21] sm:$0xff] %vm305, %v275
      %310 = vst.msk [vmem:[%s304 + $0x31] sm:$0xff] %vm305, %v276
      %311 = vst.msk [vmem:[%s304 + $0x39] sm:$0xff] %vm305, %v277
      %312 = vst.msk [vmem:[%s304 + $0x49] sm:$0xff] %vm305, %v278
      %313 = vst.msk [vmem:[%s304 + $0x51] sm:$0xff] %vm305, %v279
      %314 = vst.msk [vmem:[%s304 + $0x61] sm:$0xff] %vm305, %v280
      %315 = vst.msk [vmem:[%s304 + $0x69] sm:$0xff] %vm305, %v281
      %316 = vst.msk [vmem:[%s304 + $0x79] sm:$0xff] %vm305, %v282
      %317 = vst.msk [vmem:[%s304 + $0x81] sm:$0xff] %vm305, %v283
      %318 = vst.msk [vmem:[%s304 + $0x91] sm:$0xff] %vm305, %v284
      %319 = vst.msk [vmem:[%s304 + $0x99] sm:$0xff] %vm305, %v285
      %320 = vst.msk [vmem:[%s304 + $0xa9] sm:$0xff] %vm305, %v286
      %321 = vst.msk [vmem:[%s304 + $0xb1] sm:$0xff] %vm305, %v287
      %322 = vst.msk [vmem:[%s304 + $0xc1] sm:$0xff] %vm305, %v288
      %323 = vst.msk [vmem:[%s304 + $0xc9] sm:$0xff] %vm305, %v289
      %324 = vst.msk [vmem:[%s304 + $0xd9] sm:$0xff] %vm305, %v290
      %325 = vst.msk [vmem:[%s304 + $0xe1] sm:$0xff] %vm305, %v291
      %326 = vst.msk [vmem:[%s304 + $0xf1] sm:$0xff] %vm305, %v292
      %327 = vst.msk [vmem:[%s304 + $0xf9] sm:$0xff] %vm305, %v293
      %328 = vst.msk [vmem:[%s304 + $0x109] sm:$0xff] %vm305, %v294
      %329 = vst.msk [vmem:[%s304 + $0x111] sm:$0xff] %vm305, %v295
      %330 = vst.msk [vmem:[%s304 + $0x121] sm:$0xff] %vm305, %v296
      %331 = vst.msk [vmem:[%s304 + $0x129] sm:$0xff] %vm305, %v297
      %332 = vst.msk [vmem:[%s304 + $0x139] sm:$0xff] %vm305, %v298
      %333 = vst.msk [vmem:[%s304 + $0x141] sm:$0xff] %vm305, %v299
      %334 = vst.msk [vmem:[%s304 + $0x151] sm:$0xff] %vm305, %v300
      %335 = vst.msk [vmem:[%s304 + $0x159] sm:$0xff] %vm305, %v301
      %336 = vst.msk [vmem:[%s304 + $0x169] sm:$0xff] %vm305, %v302
      %337 = vst.msk [vmem:[%s304 + $0x171] sm:$0xff] %vm305, %v303
      %v338 = vld [vmem:[#allocation2] sm:$0xff]
      %v339 = vld [vmem:[#allocation2 + $0x8] sm:$0xff]
      %v340 = vld [vmem:[#allocation2 + $0x18] sm:$0xff]
      %v341 = vld [vmem:[#allocation2 + $0x20] sm:$0xff]
      %v342 = vld [vmem:[#allocation2 + $0x30] sm:$0xff]
      %v343 = vld [vmem:[#allocation2 + $0x38] sm:$0xff]
      %v344 = vld [vmem:[#allocation2 + $0x48] sm:$0xff]
      %v345 = vld [vmem:[#allocation2 + $0x50] sm:$0xff]
      %v346 = vld [vmem:[#allocation2 + $0x60] sm:$0xff]
      %v347 = vld [vmem:[#allocation2 + $0x68] sm:$0xff]
      %v348 = vld [vmem:[#allocation2 + $0x78] sm:$0xff]
      %v349 = vld [vmem:[#allocation2 + $0x80] sm:$0xff]
      %v350 = vld [vmem:[#allocation2 + $0x90] sm:$0xff]
      %v351 = vld [vmem:[#allocation2 + $0x98] sm:$0xff]
      %v352 = vld [vmem:[#allocation2 + $0xa8] sm:$0xff]
      %v353 = vld [vmem:[#allocation2 + $0xb0] sm:$0xff]
      %v354 = vld [vmem:[#allocation2 + $0xc0] sm:$0xff]
      %v355 = vld [vmem:[#allocation2 + $0xc8] sm:$0xff]
      %v356 = vld [vmem:[#allocation2 + $0xd8] sm:$0xff]
      %v357 = vld [vmem:[#allocation2 + $0xe0] sm:$0xff]
      %v358 = vld [vmem:[#allocation2 + $0xf0] sm:$0xff]
      %v359 = vld [vmem:[#allocation2 + $0xf8] sm:$0xff]
      %v360 = vld [vmem:[#allocation2 + $0x108] sm:$0xff]
      %v361 = vld [vmem:[#allocation2 + $0x110] sm:$0xff]
      %v362 = vld [vmem:[#allocation2 + $0x120] sm:$0xff]
      %v363 = vld [vmem:[#allocation2 + $0x128] sm:$0xff]
      %v364 = vld [vmem:[#allocation2 + $0x138] sm:$0xff]
      %v365 = vld [vmem:[#allocation2 + $0x140] sm:$0xff]
      %v366 = vld [vmem:[#allocation2 + $0x150] sm:$0xff]
      %v367 = vld [vmem:[#allocation2 + $0x158] sm:$0xff]
      %v368 = vld [vmem:[#allocation2 + $0x168] sm:$0xff]
      %v369 = vld [vmem:[#allocation2 + $0x170] sm:$0xff]
      %v370 = vpack.c.bf16 %v339, %v338
      %v371 = vpack.c.bf16 %v341, %v340
      %v372 = vpack.c.bf16 %v343, %v342
      %v373 = vpack.c.bf16 %v345, %v344
      %v374 = vpack.c.bf16 %v347, %v346
      %v375 = vpack.c.bf16 %v349, %v348
      %v376 = vpack.c.bf16 %v351, %v350
      %v377 = vpack.c.bf16 %v353, %v352
      %v378 = vpack.c.bf16 %v355, %v354
      %v379 = vpack.c.bf16 %v357, %v356
      %v380 = vpack.c.bf16 %v359, %v358
      %v381 = vpack.c.bf16 %v361, %v360
      %v382 = vpack.c.bf16 %v363, %v362
      %v383 = vpack.c.bf16 %v365, %v364
      %v384 = vpack.c.bf16 %v367, %v366
      %v385 = vpack.c.bf16 %v369, %v368
      %v386 = vld [vmem:[%s1] sm:$0x3]
      %v387 = vld [vmem:[#allocation2 + $0x1] sm:$0xff]
      %v388 = vld [vmem:[#allocation2 + $0x9] sm:$0xff]
      %v389 = vld [vmem:[#allocation2 + $0x19] sm:$0xff]
      %v390 = vld [vmem:[#allocation2 + $0x21] sm:$0xff]
      %v391 = vld [vmem:[#allocation2 + $0x31] sm:$0xff]
      %v392 = vld [vmem:[#allocation2 + $0x39] sm:$0xff]
      %v393 = vld [vmem:[#allocation2 + $0x49] sm:$0xff]
      %v394 = vld [vmem:[#allocation2 + $0x51] sm:$0xff]
      %v395 = vld [vmem:[#allocation2 + $0x61] sm:$0xff]
      %v396 = vld [vmem:[#allocation2 + $0x69] sm:$0xff]
      %v397 = vld [vmem:[#allocation2 + $0x79] sm:$0xff]
      %v398 = vld [vmem:[#allocation2 + $0x81] sm:$0xff]
      %v399 = vld [vmem:[#allocation2 + $0x91] sm:$0xff]
      %v400 = vld [vmem:[#allocation2 + $0x99] sm:$0xff]
      %v401 = vld [vmem:[#allocation2 + $0xa9] sm:$0xff]
      %v402 = vld [vmem:[#allocation2 + $0xb1] sm:$0xff]
      %v403 = vld [vmem:[#allocation2 + $0xc1] sm:$0xff]
      %v404 = vld [vmem:[#allocation2 + $0xc9] sm:$0xff]
      %v405 = vld [vmem:[#allocation2 + $0xd9] sm:$0xff]
      %v406 = vld [vmem:[#allocation2 + $0xe1] sm:$0xff]
      %v407 = vld [vmem:[#allocation2 + $0xf1] sm:$0xff]
      %v408 = vld [vmem:[#allocation2 + $0xf9] sm:$0xff]
      %v409 = vld [vmem:[#allocation2 + $0x109] sm:$0xff]
      %v410 = vld [vmem:[#allocation2 + $0x111] sm:$0xff]
      %v411 = vld [vmem:[#allocation2 + $0x121] sm:$0xff]
      %v412 = vld [vmem:[#allocation2 + $0x129] sm:$0xff]
      %v413 = vld [vmem:[#allocation2 + $0x139] sm:$0xff]
      %v414 = vld [vmem:[#allocation2 + $0x141] sm:$0xff]
      %v415 = vld [vmem:[#allocation2 + $0x151] sm:$0xff]
      %v416 = vld [vmem:[#allocation2 + $0x159] sm:$0xff]
      %v417 = vld [vmem:[#allocation2 + $0x169] sm:$0xff]
      %v418 = vld [vmem:[#allocation2 + $0x171] sm:$0xff]
      %v419 = vpack.c.bf16 %v388, %v387
      %v420 = vpack.c.bf16 %v390, %v389
      %v421 = vpack.c.bf16 %v392, %v391
      %v422 = vpack.c.bf16 %v394, %v393
      %v423 = vpack.c.bf16 %v396, %v395
      %v424 = vpack.c.bf16 %v398, %v397
      %v425 = vpack.c.bf16 %v400, %v399
      %v426 = vpack.c.bf16 %v402, %v401
      %v427 = vpack.c.bf16 %v404, %v403
      %v428 = vpack.c.bf16 %v406, %v405
      %v429 = vpack.c.bf16 %v408, %v407
      %v430 = vpack.c.bf16 %v410, %v409
      %v431 = vpack.c.bf16 %v412, %v411
      %v432 = vpack.c.bf16 %v414, %v413
      %v433 = vpack.c.bf16 %v416, %v415
      %v434 = vpack.c.bf16 %v418, %v417
      %s435 = scalar_lea.vmem %s1, 2
      %v436 = vld [vmem:[%s435] sm:$0x3]
      %v438 = vsel %vm305, %v419, 0
      %v441 = vsel %vm305, %v420, 0
      %v444 = vsel %vm305, %v421, 0
      %v447 = vsel %vm305, %v422, 0
      %v450 = vsel %vm305, %v423, 0
      %v453 = vsel %vm305, %v424, 0
      %v456 = vsel %vm305, %v425, 0
      %v459 = vsel %vm305, %v426, 0
      %v462 = vsel %vm305, %v427, 0
      %v465 = vsel %vm305, %v428, 0
      %v468 = vsel %vm305, %v429, 0
      %v471 = vsel %vm305, %v430, 0
      %v474 = vsel %vm305, %v431, 0
      %v477 = vsel %vm305, %v432, 0
      %v480 = vsel %vm305, %v433, 0
      %v483 = vsel %vm305, %v434, 0
      %vm485 = vcmask 1041408
      %v487 = vsel %vm485, %v436, 0
      %489 = vmatprep.subr.bf16.mxu0 0
      %490 = vmatpush1.bf16.msra.mxu0 %v487
      %491 = vmatprep.subr.bf16.mxu0 0
      %492 = vmatpush1.bf16.msra.mxu0 0
      %493 = vmatprep.subr.bf16.mxu0 0
      %494 = vmatpush1.bf16.msra.mxu0 0
      %495 = vmatprep.subr.bf16.mxu0 0
      %496 = vmatpush1.bf16.msra.mxu0 0
      %497 = vmatprep.subr.bf16.mxu0 0
      %498 = vmatpush1.bf16.msra.mxu0 0
      %499 = vmatprep.subr.bf16.mxu0 0
      %500 = vmatpush1.bf16.msra.mxu0 0
      %501 = vmatprep.subr.bf16.mxu0 0
      %502 = vmatpush1.bf16.msra.mxu0 0
      %503 = vmatprep.subr.bf16.mxu0 0
      %504 = vmatpush1.bf16.msra.mxu0 0
      %505 = vmatprep.subr.bf16.mxu0 0
      %506 = vmatpush1.bf16.msra.mxu0 0
      %507 = vmatprep.subr.bf16.mxu0 0
      %508 = vmatpush1.bf16.msra.mxu0 0
      %509 = vmatprep.subr.bf16.mxu0 0
      %510 = vmatpush1.bf16.msra.mxu0 0
      %511 = vmatprep.subr.bf16.mxu0 0
      %512 = vmatpush1.bf16.msra.mxu0 0
      %513 = vmatprep.subr.bf16.mxu0 0
      %514 = vmatpush1.bf16.msra.mxu0 0
      %515 = vmatprep.subr.bf16.mxu0 0
      %516 = vmatpush1.bf16.msra.mxu0 0
      %517 = vmatprep.subr.bf16.mxu0 0
      %518 = vmatpush1.bf16.msra.mxu0 0
      %519 = vmatprep.subr.bf16.mxu0 0
      %520 = vmatpush1.bf16.msra.mxu0 0
      %521 = vmatprep.mubr.bf16.mxu0 0
      %522 = vmatmul.mubr.bf16.gmra.mrb[0].mxu0 %v438
      %v523 = vpop.f32.mrb[0].mxu0
      %v524 = vadd.f32 0.0, %v523
      %v525 = vpop.f32.mrb[0].mxu0
      %v526 = vpop.f32.mrb[0].mxu0
      %v527 = vadd.f32 0.0, %v526
      %v528 = vpop.f32.mrb[0].mxu0
      %529 = vmatprep.mubr.bf16.mxu0 0
      %530 = vmatmul.mubr.bf16.gmra.mrb[0].mxu0 %v441
      %v531 = vpop.f32.mrb[0].mxu0
      %v532 = vadd.f32 0.0, %v531
      %v533 = vpop.f32.mrb[0].mxu0
      %v534 = vpop.f32.mrb[0].mxu0
      %v535 = vadd.f32 0.0, %v534
      %v536 = vpop.f32.mrb[0].mxu0
      %537 = vmatprep.mubr.bf16.mxu0 0
      %538 = vmatmul.mubr.bf16.gmra.mrb[0].mxu0 %v444
      %v539 = vpop.f32.mrb[0].mxu0
      %v540 = vadd.f32 0.0, %v539
      %v541 = vpop.f32.mrb[0].mxu0
      %v542 = vpop.f32.mrb[0].mxu0
      %v543 = vadd.f32 0.0, %v542
      %v544 = vpop.f32.mrb[0].mxu0
      %545 = vmatprep.mubr.bf16.mxu0 0
      %546 = vmatmul.mubr.bf16.gmra.mrb[0].mxu0 %v447
      %v547 = vpop.f32.mrb[0].mxu0
      %v548 = vadd.f32 0.0, %v547
      %v549 = vpop.f32.mrb[0].mxu0
      %v550 = vpop.f32.mrb[0].mxu0
      %v551 = vadd.f32 0.0, %v550
      %v552 = vpop.f32.mrb[0].mxu0
      %553 = vmatprep.mubr.bf16.mxu0 0
      %554 = vmatmul.mubr.bf16.gmra.mrb[0].mxu0 %v450
      %v555 = vpop.f32.mrb[0].mxu0
      %v556 = vadd.f32 0.0, %v555
      %v557 = vpop.f32.mrb[0].mxu0
      %v558 = vpop.f32.mrb[0].mxu0
      %v559 = vadd.f32 0.0, %v558
      %v560 = vpop.f32.mrb[0].mxu0
      %561 = vmatprep.mubr.bf16.mxu0 0
      %562 = vmatmul.mubr.bf16.gmra.mrb[0].mxu0 %v453
      %v563 = vpop.f32.mrb[0].mxu0
      %v564 = vadd.f32 0.0, %v563
      %v565 = vpop.f32.mrb[0].mxu0
      %v566 = vpop.f32.mrb[0].mxu0
      %v567 = vadd.f32 0.0, %v566
      %v568 = vpop.f32.mrb[0].mxu0
      %569 = vmatprep.mubr.bf16.mxu0 0
      %570 = vmatmul.mubr.bf16.gmra.mrb[0].mxu0 %v456
      %v571 = vpop.f32.mrb[0].mxu0
      %v572 = vadd.f32 0.0, %v571
      %v573 = vpop.f32.mrb[0].mxu0
      %v574 = vpop.f32.mrb[0].mxu0
      %v575 = vadd.f32 0.0, %v574
      %v576 = vpop.f32.mrb[0].mxu0
      %577 = vmatprep.mubr.bf16.mxu0 0
      %578 = vmatmul.mubr.bf16.gmra.mrb[0].mxu0 %v459
      %v579 = vpop.f32.mrb[0].mxu0
      %v580 = vadd.f32 0.0, %v579
      %v581 = vpop.f32.mrb[0].mxu0
      %v582 = vpop.f32.mrb[0].mxu0
      %v583 = vadd.f32 0.0, %v582
      %v584 = vpop.f32.mrb[0].mxu0
      %585 = vmatprep.mubr.bf16.mxu0 0
      %586 = vmatmul.mubr.bf16.gmra.mrb[0].mxu0 %v462
      %v587 = vpop.f32.mrb[0].mxu0
      %v588 = vadd.f32 0.0, %v587
      %v589 = vpop.f32.mrb[0].mxu0
      %v590 = vpop.f32.mrb[0].mxu0
      %v591 = vadd.f32 0.0, %v590
      %v592 = vpop.f32.mrb[0].mxu0
      %593 = vmatprep.mubr.bf16.mxu0 0
      %594 = vmatmul.mubr.bf16.gmra.mrb[0].mxu0 %v465
      %v595 = vpop.f32.mrb[0].mxu0
      %v596 = vadd.f32 0.0, %v595
      %v597 = vpop.f32.mrb[0].mxu0
      %v598 = vpop.f32.mrb[0].mxu0
      %v599 = vadd.f32 0.0, %v598
      %v600 = vpop.f32.mrb[0].mxu0
      %601 = vmatprep.mubr.bf16.mxu0 0
      %602 = vmatmul.mubr.bf16.gmra.mrb[0].mxu0 %v468
      %v603 = vpop.f32.mrb[0].mxu0
      %v604 = vadd.f32 0.0, %v603
      %v605 = vpop.f32.mrb[0].mxu0
      %v606 = vpop.f32.mrb[0].mxu0
      %v607 = vadd.f32 0.0, %v606
      %v608 = vpop.f32.mrb[0].mxu0
      %609 = vmatprep.mubr.bf16.mxu0 0
      %610 = vmatmul.mubr.bf16.gmra.mrb[0].mxu0 %v471
      %v611 = vpop.f32.mrb[0].mxu0
      %v612 = vadd.f32 0.0, %v611
      %v613 = vpop.f32.mrb[0].mxu0
      %v614 = vpop.f32.mrb[0].mxu0
      %v615 = vadd.f32 0.0, %v614
      %v616 = vpop.f32.mrb[0].mxu0
      %617 = vmatprep.mubr.bf16.mxu0 0
      %618 = vmatmul.mubr.bf16.gmra.mrb[0].mxu0 %v474
      %v619 = vpop.f32.mrb[0].mxu0
      %v620 = vadd.f32 0.0, %v619
      %v621 = vpop.f32.mrb[0].mxu0
      %v622 = vpop.f32.mrb[0].mxu0
      %v623 = vadd.f32 0.0, %v622
      %v624 = vpop.f32.mrb[0].mxu0
      %625 = vmatprep.mubr.bf16.mxu0 0
      %626 = vmatmul.mubr.bf16.gmra.mrb[0].mxu0 %v477
      %v627 = vpop.f32.mrb[0].mxu0
      %v628 = vadd.f32 0.0, %v627
      %v629 = vpop.f32.mrb[0].mxu0
      %v630 = vpop.f32.mrb[0].mxu0
      %v631 = vadd.f32 0.0, %v630
      %v632 = vpop.f32.mrb[0].mxu0
      %633 = vmatprep.mubr.bf16.mxu0 0
      %634 = vmatmul.mubr.bf16.gmra.mrb[0].mxu0 %v480
      %v635 = vpop.f32.mrb[0].mxu0
      %v636 = vadd.f32 0.0, %v635
      %v637 = vpop.f32.mrb[0].mxu0
      %v638 = vpop.f32.mrb[0].mxu0
      %v639 = vadd.f32 0.0, %v638
      %v640 = vpop.f32.mrb[0].mxu0
      %641 = vmatprep.mubr.bf16.mxu0 0
      %642 = vmatmul.mubr.bf16.gmra.mrb[0].mxu0 %v483
      %v643 = vpop.f32.mrb[0].mxu0
      %v644 = vadd.f32 0.0, %v643
      %v645 = vpop.f32.mrb[0].mxu0
      %v646 = vpop.f32.mrb[0].mxu0
      %v647 = vadd.f32 0.0, %v646
      %v648 = vpop.f32.mrb[0].mxu0
      %649 = vdwg.mxu0
      %v651 = vsel %vm305, %v370, 0
      %v654 = vsel %vm305, %v371, 0
      %v657 = vsel %vm305, %v372, 0
      %v660 = vsel %vm305, %v373, 0
      %v663 = vsel %vm305, %v374, 0
      %v666 = vsel %vm305, %v375, 0
      %v669 = vsel %vm305, %v376, 0
      %v672 = vsel %vm305, %v377, 0
      %v675 = vsel %vm305, %v378, 0
      %v678 = vsel %vm305, %v379, 0
      %v681 = vsel %vm305, %v380, 0
      %v684 = vsel %vm305, %v381, 0
      %v687 = vsel %vm305, %v382, 0
      %v690 = vsel %vm305, %v383, 0
      %v693 = vsel %vm305, %v384, 0
      %v696 = vsel %vm305, %v385, 0
      %v699 = vsel %vm485, %v386, 0
      %701 = vmatprep.subr.bf16.mxu0 0
      %702 = vmatpush1.bf16.msra.mxu0 %v699
      %703 = vmatprep.subr.bf16.mxu0 0
      %704 = vmatpush1.bf16.msra.mxu0 0
      %705 = vmatprep.subr.bf16.mxu0 0
      %706 = vmatpush1.bf16.msra.mxu0 0
      %707 = vmatprep.subr.bf16.mxu0 0
      %708 = vmatpush1.bf16.msra.mxu0 0
      %709 = vmatprep.subr.bf16.mxu0 0
      %710 = vmatpush1.bf16.msra.mxu0 0
      %711 = vmatprep.subr.bf16.mxu0 0
      %712 = vmatpush1.bf16.msra.mxu0 0
      %713 = vmatprep.subr.bf16.mxu0 0
      %714 = vmatpush1.bf16.msra.mxu0 0
      %715 = vmatprep.subr.bf16.mxu0 0
      %716 = vmatpush1.bf16.msra.mxu0 0
      %717 = vmatprep.subr.bf16.mxu0 0
      %718 = vmatpush1.bf16.msra.mxu0 0
      %719 = vmatprep.subr.bf16.mxu0 0
      %720 = vmatpush1.bf16.msra.mxu0 0
      %721 = vmatprep.subr.bf16.mxu0 0
      %722 = vmatpush1.bf16.msra.mxu0 0
      %723 = vmatprep.subr.bf16.mxu0 0
      %724 = vmatpush1.bf16.msra.mxu0 0
      %725 = vmatprep.subr.bf16.mxu0 0
      %726 = vmatpush1.bf16.msra.mxu0 0
      %727 = vmatprep.subr.bf16.mxu0 0
      %728 = vmatpush1.bf16.msra.mxu0 0
      %729 = vmatprep.subr.bf16.mxu0 0
      %730 = vmatpush1.bf16.msra.mxu0 0
      %731 = vmatprep.subr.bf16.mxu0 0
      %732 = vmatpush1.bf16.msra.mxu0 0
      %733 = vmatprep.mubr.bf16.mxu0 0
      %734 = vmatmul.mubr.bf16.gmra.mrb[0].mxu0 %v651
      %v735 = vpop.f32.mrb[0].mxu0
      %v736 = vadd.f32 %v524, %v735
      %v737 = vpop.f32.mrb[0].mxu0
      %v738 = vpop.f32.mrb[0].mxu0
      %v739 = vadd.f32 %v527, %v738
      %v740 = vpop.f32.mrb[0].mxu0
      %741 = vmatprep.mubr.bf16.mxu0 0
      %742 = vmatmul.mubr.bf16.gmra.mrb[0].mxu0 %v654
      %v743 = vpop.f32.mrb[0].mxu0
      %v744 = vadd.f32 %v532, %v743
      %v745 = vpop.f32.mrb[0].mxu0
      %v746 = vpop.f32.mrb[0].mxu0
      %v747 = vadd.f32 %v535, %v746
      %v748 = vpop.f32.mrb[0].mxu0
      %749 = vmatprep.mubr.bf16.mxu0 0
      %750 = vmatmul.mubr.bf16.gmra.mrb[0].mxu0 %v657
      %v751 = vpop.f32.mrb[0].mxu0
      %v752 = vadd.f32 %v540, %v751
      %v753 = vpop.f32.mrb[0].mxu0
      %v754 = vpop.f32.mrb[0].mxu0
      %v755 = vadd.f32 %v543, %v754
      %v756 = vpop.f32.mrb[0].mxu0
      %757 = vmatprep.mubr.bf16.mxu0 0
      %758 = vmatmul.mubr.bf16.gmra.mrb[0].mxu0 %v660
      %v759 = vpop.f32.mrb[0].mxu0
      %v760 = vadd.f32 %v548, %v759
      %v761 = vpop.f32.mrb[0].mxu0
      %v762 = vpop.f32.mrb[0].mxu0
      %v763 = vadd.f32 %v551, %v762
      %v764 = vpop.f32.mrb[0].mxu0
      %765 = vmatprep.mubr.bf16.mxu0 0
      %766 = vmatmul.mubr.bf16.gmra.mrb[0].mxu0 %v663
      %v767 = vpop.f32.mrb[0].mxu0
      %v768 = vadd.f32 %v556, %v767
      %v769 = vpop.f32.mrb[0].mxu0
      %v770 = vpop.f32.mrb[0].mxu0
      %v771 = vadd.f32 %v559, %v770
      %v772 = vpop.f32.mrb[0].mxu0
      %773 = vmatprep.mubr.bf16.mxu0 0
      %774 = vmatmul.mubr.bf16.gmra.mrb[0].mxu0 %v666
      %v775 = vpop.f32.mrb[0].mxu0
      %v776 = vadd.f32 %v564, %v775
      %v777 = vpop.f32.mrb[0].mxu0
      %v778 = vpop.f32.mrb[0].mxu0
      %v779 = vadd.f32 %v567, %v778
      %v780 = vpop.f32.mrb[0].mxu0
      %781 = vmatprep.mubr.bf16.mxu0 0
      %782 = vmatmul.mubr.bf16.gmra.mrb[0].mxu0 %v669
      %v783 = vpop.f32.mrb[0].mxu0
      %v784 = vadd.f32 %v572, %v783
      %v785 = vpop.f32.mrb[0].mxu0
      %v786 = vpop.f32.mrb[0].mxu0
      %v787 = vadd.f32 %v575, %v786
      %v788 = vpop.f32.mrb[0].mxu0
      %789 = vmatprep.mubr.bf16.mxu0 0
      %790 = vmatmul.mubr.bf16.gmra.mrb[0].mxu0 %v672
      %v791 = vpop.f32.mrb[0].mxu0
      %v792 = vadd.f32 %v580, %v791
      %v793 = vpop.f32.mrb[0].mxu0
      %v794 = vpop.f32.mrb[0].mxu0
      %v795 = vadd.f32 %v583, %v794
      %v796 = vpop.f32.mrb[0].mxu0
      %797 = vmatprep.mubr.bf16.mxu0 0
      %798 = vmatmul.mubr.bf16.gmra.mrb[0].mxu0 %v675
      %v799 = vpop.f32.mrb[0].mxu0
      %v800 = vadd.f32 %v588, %v799
      %v801 = vpop.f32.mrb[0].mxu0
      %v802 = vpop.f32.mrb[0].mxu0
      %v803 = vadd.f32 %v591, %v802
      %v804 = vpop.f32.mrb[0].mxu0
      %805 = vmatprep.mubr.bf16.mxu0 0
      %806 = vmatmul.mubr.bf16.gmra.mrb[0].mxu0 %v678
      %v807 = vpop.f32.mrb[0].mxu0
      %v808 = vadd.f32 %v596, %v807
      %v809 = vpop.f32.mrb[0].mxu0
      %v810 = vpop.f32.mrb[0].mxu0
      %v811 = vadd.f32 %v599, %v810
      %v812 = vpop.f32.mrb[0].mxu0
      %813 = vmatprep.mubr.bf16.mxu0 0
      %814 = vmatmul.mubr.bf16.gmra.mrb[0].mxu0 %v681
      %v815 = vpop.f32.mrb[0].mxu0
      %v816 = vadd.f32 %v604, %v815
      %v817 = vpop.f32.mrb[0].mxu0
      %v818 = vpop.f32.mrb[0].mxu0
      %v819 = vadd.f32 %v607, %v818
      %v820 = vpop.f32.mrb[0].mxu0
      %821 = vmatprep.mubr.bf16.mxu0 0
      %822 = vmatmul.mubr.bf16.gmra.mrb[0].mxu0 %v684
      %v823 = vpop.f32.mrb[0].mxu0
      %v824 = vadd.f32 %v612, %v823
      %v825 = vpop.f32.mrb[0].mxu0
      %v826 = vpop.f32.mrb[0].mxu0
      %v827 = vadd.f32 %v615, %v826
      %v828 = vpop.f32.mrb[0].mxu0
      %829 = vmatprep.mubr.bf16.mxu0 0
      %830 = vmatmul.mubr.bf16.gmra.mrb[0].mxu0 %v687
      %v831 = vpop.f32.mrb[0].mxu0
      %v832 = vadd.f32 %v620, %v831
      %v833 = vpop.f32.mrb[0].mxu0
      %v834 = vpop.f32.mrb[0].mxu0
      %v835 = vadd.f32 %v623, %v834
      %v836 = vpop.f32.mrb[0].mxu0
      %837 = vmatprep.mubr.bf16.mxu0 0
      %838 = vmatmul.mubr.bf16.gmra.mrb[0].mxu0 %v690
      %v839 = vpop.f32.mrb[0].mxu0
      %v840 = vadd.f32 %v628, %v839
      %v841 = vpop.f32.mrb[0].mxu0
      %v842 = vpop.f32.mrb[0].mxu0
      %v843 = vadd.f32 %v631, %v842
      %v844 = vpop.f32.mrb[0].mxu0
      %845 = vmatprep.mubr.bf16.mxu0 0
      %846 = vmatmul.mubr.bf16.gmra.mrb[0].mxu0 %v693
      %v847 = vpop.f32.mrb[0].mxu0
      %v848 = vadd.f32 %v636, %v847
      %v849 = vpop.f32.mrb[0].mxu0
      %v850 = vpop.f32.mrb[0].mxu0
      %v851 = vadd.f32 %v639, %v850
      %v852 = vpop.f32.mrb[0].mxu0
      %853 = vmatprep.mubr.bf16.mxu0 0
      %854 = vmatmul.mubr.bf16.gmra.mrb[0].mxu0 %v696
      %v855 = vpop.f32.mrb[0].mxu0
      %v856 = vadd.f32 %v644, %v855
      %v857 = vpop.f32.mrb[0].mxu0
      %v858 = vpop.f32.mrb[0].mxu0
      %v859 = vadd.f32 %v647, %v858
      %v860 = vpop.f32.mrb[0].mxu0
      %861 = vdwg.mxu0
      %v862 = vld [vmem:[#allocation2 + $0x2] sm:$0xff]
      %v863 = vld [vmem:[#allocation2 + $0xa] sm:$0xff]
      %v864 = vld [vmem:[#allocation2 + $0x1a] sm:$0xff]
      %v865 = vld [vmem:[#allocation2 + $0x22] sm:$0xff]
      %v866 = vld [vmem:[#allocation2 + $0x32] sm:$0xff]
      %v867 = vld [vmem:[#allocation2 + $0x3a] sm:$0xff]
      %v868 = vld [vmem:[#allocation2 + $0x4a] sm:$0xff]
      %v869 = vld [vmem:[#allocation2 + $0x52] sm:$0xff]
      %v870 = vld [vmem:[#allocation2 + $0x62] sm:$0xff]
      %v871 = vld [vmem:[#allocation2 + $0x6a] sm:$0xff]
      %v872 = vld [vmem:[#allocation2 + $0x7a] sm:$0xff]
      %v873 = vld [vmem:[#allocation2 + $0x82] sm:$0xff]
      %v874 = vld [vmem:[#allocation2 + $0x92] sm:$0xff]
      %v875 = vld [vmem:[#allocation2 + $0x9a] sm:$0xff]
      %v876 = vld [vmem:[#allocation2 + $0xaa] sm:$0xff]
      %v877 = vld [vmem:[#allocation2 + $0xb2] sm:$0xff]
      %v878 = vld [vmem:[#allocation2 + $0xc2] sm:$0xff]
      %v879 = vld [vmem:[#allocation2 + $0xca] sm:$0xff]
      %v880 = vld [vmem:[#allocation2 + $0xda] sm:$0xff]
      %v881 = vld [vmem:[#allocation2 + $0xe2] sm:$0xff]
      %v882 = vld [vmem:[#allocation2 + $0xf2] sm:$0xff]
      %v883 = vld [vmem:[#allocation2 + $0xfa] sm:$0xff]
      %v884 = vld [vmem:[#allocation2 + $0x10a] sm:$0xff]
      %v885 = vld [vmem:[#allocation2 + $0x112] sm:$0xff]
      %v886 = vld [vmem:[#allocation2 + $0x122] sm:$0xff]
      %v887 = vld [vmem:[#allocation2 + $0x12a] sm:$0xff]
      %v888 = vld [vmem:[#allocation2 + $0x13a] sm:$0xff]
      %v889 = vld [vmem:[#allocation2 + $0x142] sm:$0xff]
      %v890 = vld [vmem:[#allocation2 + $0x152] sm:$0xff]
      %v891 = vld [vmem:[#allocation2 + $0x15a] sm:$0xff]
      %v892 = vld [vmem:[#allocation2 + $0x16a] sm:$0xff]
      %v893 = vld [vmem:[#allocation2 + $0x172] sm:$0xff]
      %v894 = vpack.c.bf16 %v863, %v862
      %v895 = vpack.c.bf16 %v865, %v864
      %v896 = vpack.c.bf16 %v867, %v866
      %v897 = vpack.c.bf16 %v869, %v868
      %v898 = vpack.c.bf16 %v871, %v870
      %v899 = vpack.c.bf16 %v873, %v872
      %v900 = vpack.c.bf16 %v875, %v874
      %v901 = vpack.c.bf16 %v877, %v876
      %v902 = vpack.c.bf16 %v879, %v878
      %v903 = vpack.c.bf16 %v881, %v880
      %v904 = vpack.c.bf16 %v883, %v882
      %v905 = vpack.c.bf16 %v885, %v884
      %v906 = vpack.c.bf16 %v887, %v886
      %v907 = vpack.c.bf16 %v889, %v888
      %v908 = vpack.c.bf16 %v891, %v890
      %v909 = vpack.c.bf16 %v893, %v892
      %s910 = scalar_lea.vmem %s1, 4
      %v911 = vld [vmem:[%s910] sm:$0x3]
      %v913 = vsel %vm305, %v894, 0
      %v916 = vsel %vm305, %v895, 0
      %v919 = vsel %vm305, %v896, 0
      %v922 = vsel %vm305, %v897, 0
      %v925 = vsel %vm305, %v898, 0
      %v928 = vsel %vm305, %v899, 0
      %v931 = vsel %vm305, %v900, 0
      %v934 = vsel %vm305, %v901, 0
      %v937 = vsel %vm305, %v902, 0
      %v940 = vsel %vm305, %v903, 0
      %v943 = vsel %vm305, %v904, 0
      %v946 = vsel %vm305, %v905, 0
      %v949 = vsel %vm305, %v906, 0
      %v952 = vsel %vm305, %v907, 0
      %v955 = vsel %vm305, %v908, 0
      %v958 = vsel %vm305, %v909, 0
      %v961 = vsel %vm485, %v911, 0
      %963 = vmatprep.subr.bf16.mxu0 0
      %964 = vmatpush1.bf16.msra.mxu0 %v961
      %965 = vmatprep.subr.bf16.mxu0 0
      %966 = vmatpush1.bf16.msra.mxu0 0
      %967 = vmatprep.subr.bf16.mxu0 0
      %968 = vmatpush1.bf16.msra.mxu0 0
      %969 = vmatprep.subr.bf16.mxu0 0
      %970 = vmatpush1.bf16.msra.mxu0 0
      %971 = vmatprep.subr.bf16.mxu0 0
      %972 = vmatpush1.bf16.msra.mxu0 0
      %973 = vmatprep.subr.bf16.mxu0 0
      %974 = vmatpush1.bf16.msra.mxu0 0
      %975 = vmatprep.subr.bf16.mxu0 0
      %976 = vmatpush1.bf16.msra.mxu0 0
      %977 = vmatprep.subr.bf16.mxu0 0
      %978 = vmatpush1.bf16.msra.mxu0 0
      %979 = vmatprep.subr.bf16.mxu0 0
      %980 = vmatpush1.bf16.msra.mxu0 0
      %981 = vmatprep.subr.bf16.mxu0 0
      %982 = vmatpush1.bf16.msra.mxu0 0
      %983 = vmatprep.subr.bf16.mxu0 0
      %984 = vmatpush1.bf16.msra.mxu0 0
      %985 = vmatprep.subr.bf16.mxu0 0
      %986 = vmatpush1.bf16.msra.mxu0 0
      %987 = vmatprep.subr.bf16.mxu0 0
      %988 = vmatpush1.bf16.msra.mxu0 0
      %989 = vmatprep.subr.bf16.mxu0 0
      %990 = vmatpush1.bf16.msra.mxu0 0
      %991 = vmatprep.subr.bf16.mxu0 0
      %992 = vmatpush1.bf16.msra.mxu0 0
      %993 = vmatprep.subr.bf16.mxu0 0
      %994 = vmatpush1.bf16.msra.mxu0 0
      %995 = vmatprep.mubr.bf16.mxu0 0
      %996 = vmatmul.mubr.bf16.gmra.mrb[0].mxu0 %v913
      %v997 = vpop.f32.mrb[0].mxu0
      %v998 = vadd.f32 0.0, %v997
      %v999 = vpop.f32.mrb[0].mxu0
      %v1000 = vpop.f32.mrb[0].mxu0
      %v1001 = vadd.f32 0.0, %v1000
      %v1002 = vpop.f32.mrb[0].mxu0
      %1003 = vmatprep.mubr.bf16.mxu0 0
      %1004 = vmatmul.mubr.bf16.gmra.mrb[0].mxu0 %v916
      %v1005 = vpop.f32.mrb[0].mxu0
      %v1006 = vadd.f32 0.0, %v1005
      %v1007 = vpop.f32.mrb[0].mxu0
      %v1008 = vpop.f32.mrb[0].mxu0
      %v1009 = vadd.f32 0.0, %v1008
      %v1010 = vpop.f32.mrb[0].mxu0
      %1011 = vmatprep.mubr.bf16.mxu0 0
      %1012 = vmatmul.mubr.bf16.gmra.mrb[0].mxu0 %v919
      %v1013 = vpop.f32.mrb[0].mxu0
      %v1014 = vadd.f32 0.0, %v1013
      %v1015 = vpop.f32.mrb[0].mxu0
      %v1016 = vpop.f32.mrb[0].mxu0
      %v1017 = vadd.f32 0.0, %v1016
      %v1018 = vpop.f32.mrb[0].mxu0
      %1019 = vmatprep.mubr.bf16.mxu0 0
      %1020 = vmatmul.mubr.bf16.gmra.mrb[0].mxu0 %v922
      %v1021 = vpop.f32.mrb[0].mxu0
      %v1022 = vadd.f32 0.0, %v1021
      %v1023 = vpop.f32.mrb[0].mxu0
      %v1024 = vpop.f32.mrb[0].mxu0
      %v1025 = vadd.f32 0.0, %v1024
      %v1026 = vpop.f32.mrb[0].mxu0
      %1027 = vmatprep.mubr.bf16.mxu0 0
      %1028 = vmatmul.mubr.bf16.gmra.mrb[0].mxu0 %v925
      %v1029 = vpop.f32.mrb[0].mxu0
      %v1030 = vadd.f32 0.0, %v1029
      %v1031 = vpop.f32.mrb[0].mxu0
      %v1032 = vpop.f32.mrb[0].mxu0
      %v1033 = vadd.f32 0.0, %v1032
      %v1034 = vpop.f32.mrb[0].mxu0
      %1035 = vmatprep.mubr.bf16.mxu0 0
      %1036 = vmatmul.mubr.bf16.gmra.mrb[0].mxu0 %v928
      %v1037 = vpop.f32.mrb[0].mxu0
      %v1038 = vadd.f32 0.0, %v1037
      %v1039 = vpop.f32.mrb[0].mxu0
      %v1040 = vpop.f32.mrb[0].mxu0
      %v1041 = vadd.f32 0.0, %v1040
      %v1042 = vpop.f32.mrb[0].mxu0
      %1043 = vmatprep.mubr.bf16.mxu0 0
      %1044 = vmatmul.mubr.bf16.gmra.mrb[0].mxu0 %v931
      %v1045 = vpop.f32.mrb[0].mxu0
      %v1046 = vadd.f32 0.0, %v1045
      %v1047 = vpop.f32.mrb[0].mxu0
      %v1048 = vpop.f32.mrb[0].mxu0
      %v1049 = vadd.f32 0.0, %v1048
      %v1050 = vpop.f32.mrb[0].mxu0
      %1051 = vmatprep.mubr.bf16.mxu0 0
      %1052 = vmatmul.mubr.bf16.gmra.mrb[0].mxu0 %v934
      %v1053 = vpop.f32.mrb[0].mxu0
      %v1054 = vadd.f32 0.0, %v1053
      %v1055 = vpop.f32.mrb[0].mxu0
      %v1056 = vpop.f32.mrb[0].mxu0
      %v1057 = vadd.f32 0.0, %v1056
      %v1058 = vpop.f32.mrb[0].mxu0
      %1059 = vmatprep.mubr.bf16.mxu0 0
      %1060 = vmatmul.mubr.bf16.gmra.mrb[0].mxu0 %v937
      %v1061 = vpop.f32.mrb[0].mxu0
      %v1062 = vadd.f32 0.0, %v1061
      %v1063 = vpop.f32.mrb[0].mxu0
      %v1064 = vpop.f32.mrb[0].mxu0
      %v1065 = vadd.f32 0.0, %v1064
      %v1066 = vpop.f32.mrb[0].mxu0
      %1067 = vmatprep.mubr.bf16.mxu0 0
      %1068 = vmatmul.mubr.bf16.gmra.mrb[0].mxu0 %v940
      %v1069 = vpop.f32.mrb[0].mxu0
      %v1070 = vadd.f32 0.0, %v1069
      %v1071 = vpop.f32.mrb[0].mxu0
      %v1072 = vpop.f32.mrb[0].mxu0
      %v1073 = vadd.f32 0.0, %v1072
      %v1074 = vpop.f32.mrb[0].mxu0
      %1075 = vmatprep.mubr.bf16.mxu0 0
      %1076 = vmatmul.mubr.bf16.gmra.mrb[0].mxu0 %v943
      %v1077 = vpop.f32.mrb[0].mxu0
      %v1078 = vadd.f32 0.0, %v1077
      %v1079 = vpop.f32.mrb[0].mxu0
      %v1080 = vpop.f32.mrb[0].mxu0
      %v1081 = vadd.f32 0.0, %v1080
      %v1082 = vpop.f32.mrb[0].mxu0
      %1083 = vmatprep.mubr.bf16.mxu0 0
      %1084 = vmatmul.mubr.bf16.gmra.mrb[0].mxu0 %v946
      %v1085 = vpop.f32.mrb[0].mxu0
      %v1086 = vadd.f32 0.0, %v1085
      %v1087 = vpop.f32.mrb[0].mxu0
      %v1088 = vpop.f32.mrb[0].mxu0
      %v1089 = vadd.f32 0.0, %v1088
      %v1090 = vpop.f32.mrb[0].mxu0
      %1091 = vmatprep.mubr.bf16.mxu0 0
      %1092 = vmatmul.mubr.bf16.gmra.mrb[0].mxu0 %v949
      %v1093 = vpop.f32.mrb[0].mxu0
      %v1094 = vadd.f32 0.0, %v1093
      %v1095 = vpop.f32.mrb[0].mxu0
      %v1096 = vpop.f32.mrb[0].mxu0
      %v1097 = vadd.f32 0.0, %v1096
      %v1098 = vpop.f32.mrb[0].mxu0
      %1099 = vmatprep.mubr.bf16.mxu0 0
      %1100 = vmatmul.mubr.bf16.gmra.mrb[0].mxu0 %v952
      %v1101 = vpop.f32.mrb[0].mxu0
      %v1102 = vadd.f32 0.0, %v1101
      %v1103 = vpop.f32.mrb[0].mxu0
      %v1104 = vpop.f32.mrb[0].mxu0
      %v1105 = vadd.f32 0.0, %v1104
      %v1106 = vpop.f32.mrb[0].mxu0
      %1107 = vmatprep.mubr.bf16.mxu0 0
      %1108 = vmatmul.mubr.bf16.gmra.mrb[0].mxu0 %v955
      %v1109 = vpop.f32.mrb[0].mxu0
      %v1110 = vadd.f32 0.0, %v1109
      %v1111 = vpop.f32.mrb[0].mxu0
      %v1112 = vpop.f32.mrb[0].mxu0
      %v1113 = vadd.f32 0.0, %v1112
      %v1114 = vpop.f32.mrb[0].mxu0
      %1115 = vmatprep.mubr.bf16.mxu0 0
      %1116 = vmatmul.mubr.bf16.gmra.mrb[0].mxu0 %v958
      %v1117 = vpop.f32.mrb[0].mxu0
      %v1118 = vadd.f32 0.0, %v1117
      %v1119 = vpop.f32.mrb[0].mxu0
      %v1120 = vpop.f32.mrb[0].mxu0
      %v1121 = vadd.f32 0.0, %v1120
      %v1122 = vpop.f32.mrb[0].mxu0
      %1123 = vdwg.mxu0
      %v1124 = vadd.f32 %v736, %v998
      %v1125 = vadd.f32 %v739, %v1001
      %v1126 = vadd.f32 %v744, %v1006
      %v1127 = vadd.f32 %v747, %v1009
      %v1128 = vadd.f32 %v752, %v1014
      %v1129 = vadd.f32 %v755, %v1017
      %v1130 = vadd.f32 %v760, %v1022
      %v1131 = vadd.f32 %v763, %v1025
      %v1132 = vadd.f32 %v768, %v1030
      %v1133 = vadd.f32 %v771, %v1033
      %v1134 = vadd.f32 %v776, %v1038
      %v1135 = vadd.f32 %v779, %v1041
      %v1136 = vadd.f32 %v784, %v1046
      %v1137 = vadd.f32 %v787, %v1049
      %v1138 = vadd.f32 %v792, %v1054
      %v1139 = vadd.f32 %v795, %v1057
      %v1140 = vadd.f32 %v800, %v1062
      %v1141 = vadd.f32 %v803, %v1065
      %v1142 = vadd.f32 %v808, %v1070
      %v1143 = vadd.f32 %v811, %v1073
      %v1144 = vadd.f32 %v816, %v1078
      %v1145 = vadd.f32 %v819, %v1081
      %v1146 = vadd.f32 %v824, %v1086
      %v1147 = vadd.f32 %v827, %v1089
      %v1148 = vadd.f32 %v832, %v1094
      %v1149 = vadd.f32 %v835, %v1097
      %v1150 = vadd.f32 %v840, %v1102
      %v1151 = vadd.f32 %v843, %v1105
      %v1152 = vadd.f32 %v848, %v1110
      %v1153 = vadd.f32 %v851, %v1113
      %v1154 = vadd.f32 %v856, %v1118
      %v1155 = vadd.f32 %v859, %v1121
      %v1156 = vld [vmem:[%s304] sm:$0xff]
      %v1157 = vld [vmem:[%s304 + $0x8] sm:$0xff]
      %v1158 = vld [vmem:[%s304 + $0x18] sm:$0xff]
      %v1159 = vld [vmem:[%s304 + $0x20] sm:$0xff]
      %v1160 = vld [vmem:[%s304 + $0x30] sm:$0xff]
      %v1161 = vld [vmem:[%s304 + $0x38] sm:$0xff]
      %v1162 = vld [vmem:[%s304 + $0x48] sm:$0xff]
      %v1163 = vld [vmem:[%s304 + $0x50] sm:$0xff]
      %v1164 = vld [vmem:[%s304 + $0x60] sm:$0xff]
      %v1165 = vld [vmem:[%s304 + $0x68] sm:$0xff]
      %v1166 = vld [vmem:[%s304 + $0x78] sm:$0xff]
      %v1167 = vld [vmem:[%s304 + $0x80] sm:$0xff]
      %v1168 = vld [vmem:[%s304 + $0x90] sm:$0xff]
      %v1169 = vld [vmem:[%s304 + $0x98] sm:$0xff]
      %v1170 = vld [vmem:[%s304 + $0xa8] sm:$0xff]
      %v1171 = vld [vmem:[%s304 + $0xb0] sm:$0xff]
      %v1172 = vld [vmem:[%s304 + $0xc0] sm:$0xff]
      %v1173 = vld [vmem:[%s304 + $0xc8] sm:$0xff]
      %v1174 = vld [vmem:[%s304 + $0xd8] sm:$0xff]
      %v1175 = vld [vmem:[%s304 + $0xe0] sm:$0xff]
      %v1176 = vld [vmem:[%s304 + $0xf0] sm:$0xff]
      %v1177 = vld [vmem:[%s304 + $0xf8] sm:$0xff]
      %v1178 = vld [vmem:[%s304 + $0x108] sm:$0xff]
      %v1179 = vld [vmem:[%s304 + $0x110] sm:$0xff]
      %v1180 = vld [vmem:[%s304 + $0x120] sm:$0xff]
      %v1181 = vld [vmem:[%s304 + $0x128] sm:$0xff]
      %v1182 = vld [vmem:[%s304 + $0x138] sm:$0xff]
      %v1183 = vld [vmem:[%s304 + $0x140] sm:$0xff]
      %v1184 = vld [vmem:[%s304 + $0x150] sm:$0xff]
      %v1185 = vld [vmem:[%s304 + $0x158] sm:$0xff]
      %v1186 = vld [vmem:[%s304 + $0x168] sm:$0xff]
      %v1187 = vld [vmem:[%s304 + $0x170] sm:$0xff]
      %v1188 = vpack.c.bf16 %v1157, %v1156
      %v1189 = vpack.c.bf16 %v1159, %v1158
      %v1190 = vpack.c.bf16 %v1161, %v1160
      %v1191 = vpack.c.bf16 %v1163, %v1162
      %v1192 = vpack.c.bf16 %v1165, %v1164
      %v1193 = vpack.c.bf16 %v1167, %v1166
      %v1194 = vpack.c.bf16 %v1169, %v1168
      %v1195 = vpack.c.bf16 %v1171, %v1170
      %v1196 = vpack.c.bf16 %v1173, %v1172
      %v1197 = vpack.c.bf16 %v1175, %v1174
      %v1198 = vpack.c.bf16 %v1177, %v1176
      %v1199 = vpack.c.bf16 %v1179, %v1178
      %v1200 = vpack.c.bf16 %v1181, %v1180
      %v1201 = vpack.c.bf16 %v1183, %v1182
      %v1202 = vpack.c.bf16 %v1185, %v1184
      %v1203 = vpack.c.bf16 %v1187, %v1186
      %s1204 = scalar_lea.vmem %s1, 6
      %v1205 = vld [vmem:[%s1204] sm:$0x3]
      %v1207 = vsel %vm305, %v1188, 0
      %v1210 = vsel %vm305, %v1189, 0
      %v1213 = vsel %vm305, %v1190, 0
      %v1216 = vsel %vm305, %v1191, 0
      %v1219 = vsel %vm305, %v1192, 0
      %v1222 = vsel %vm305, %v1193, 0
      %v1225 = vsel %vm305, %v1194, 0
      %v1228 = vsel %vm305, %v1195, 0
      %v1231 = vsel %vm305, %v1196, 0
      %v1234 = vsel %vm305, %v1197, 0
      %v1237 = vsel %vm305, %v1198, 0
      %v1240 = vsel %vm305, %v1199, 0
      %v1243 = vsel %vm305, %v1200, 0
      %v1246 = vsel %vm305, %v1201, 0
      %v1249 = vsel %vm305, %v1202, 0
      %v1252 = vsel %vm305, %v1203, 0
      %v1255 = vsel %vm485, %v1205, 0
      %1257 = vmatprep.subr.bf16.mxu0 0
      %1258 = vmatpush1.bf16.msra.mxu0 %v1255
      %1259 = vmatprep.subr.bf16.mxu0 0
      %1260 = vmatpush1.bf16.msra.mxu0 0
      %1261 = vmatprep.subr.bf16.mxu0 0
      %1262 = vmatpush1.bf16.msra.mxu0 0
      %1263 = vmatprep.subr.bf16.mxu0 0
      %1264 = vmatpush1.bf16.msra.mxu0 0
      %1265 = vmatprep.subr.bf16.mxu0 0
      %1266 = vmatpush1.bf16.msra.mxu0 0
      %1267 = vmatprep.subr.bf16.mxu0 0
      %1268 = vmatpush1.bf16.msra.mxu0 0
      %1269 = vmatprep.subr.bf16.mxu0 0
      %1270 = vmatpush1.bf16.msra.mxu0 0
      %1271 = vmatprep.subr.bf16.mxu0 0
      %1272 = vmatpush1.bf16.msra.mxu0 0
      %1273 = vmatprep.subr.bf16.mxu0 0
      %1274 = vmatpush1.bf16.msra.mxu0 0
      %1275 = vmatprep.subr.bf16.mxu0 0
      %1276 = vmatpush1.bf16.msra.mxu0 0
      %1277 = vmatprep.subr.bf16.mxu0 0
      %1278 = vmatpush1.bf16.msra.mxu0 0
      %1279 = vmatprep.subr.bf16.mxu0 0
      %1280 = vmatpush1.bf16.msra.mxu0 0
      %1281 = vmatprep.subr.bf16.mxu0 0
      %1282 = vmatpush1.bf16.msra.mxu0 0
      %1283 = vmatprep.subr.bf16.mxu0 0
      %1284 = vmatpush1.bf16.msra.mxu0 0
      %1285 = vmatprep.subr.bf16.mxu0 0
      %1286 = vmatpush1.bf16.msra.mxu0 0
      %1287 = vmatprep.subr.bf16.mxu0 0
      %1288 = vmatpush1.bf16.msra.mxu0 0
      %1289 = vmatprep.mubr.bf16.mxu0 0
      %1290 = vmatmul.mubr.bf16.gmra.mrb[0].mxu0 %v1207
      %v1291 = vpop.f32.mrb[0].mxu0
      %v1292 = vadd.f32 0.0, %v1291
      %v1293 = vpop.f32.mrb[0].mxu0
      %v1294 = vpop.f32.mrb[0].mxu0
      %v1295 = vadd.f32 0.0, %v1294
      %v1296 = vpop.f32.mrb[0].mxu0
      %1297 = vmatprep.mubr.bf16.mxu0 0
      %1298 = vmatmul.mubr.bf16.gmra.mrb[0].mxu0 %v1210
      %v1299 = vpop.f32.mrb[0].mxu0
      %v1300 = vadd.f32 0.0, %v1299
      %v1301 = vpop.f32.mrb[0].mxu0
      %v1302 = vpop.f32.mrb[0].mxu0
      %v1303 = vadd.f32 0.0, %v1302
      %v1304 = vpop.f32.mrb[0].mxu0
      %1305 = vmatprep.mubr.bf16.mxu0 0
      %1306 = vmatmul.mubr.bf16.gmra.mrb[0].mxu0 %v1213
      %v1307 = vpop.f32.mrb[0].mxu0
      %v1308 = vadd.f32 0.0, %v1307
      %v1309 = vpop.f32.mrb[0].mxu0
      %v1310 = vpop.f32.mrb[0].mxu0
      %v1311 = vadd.f32 0.0, %v1310
      %v1312 = vpop.f32.mrb[0].mxu0
      %1313 = vmatprep.mubr.bf16.mxu0 0
      %1314 = vmatmul.mubr.bf16.gmra.mrb[0].mxu0 %v1216
      %v1315 = vpop.f32.mrb[0].mxu0
      %v1316 = vadd.f32 0.0, %v1315
      %v1317 = vpop.f32.mrb[0].mxu0
      %v1318 = vpop.f32.mrb[0].mxu0
      %v1319 = vadd.f32 0.0, %v1318
      %v1320 = vpop.f32.mrb[0].mxu0
      %1321 = vmatprep.mubr.bf16.mxu0 0
      %1322 = vmatmul.mubr.bf16.gmra.mrb[0].mxu0 %v1219
      %v1323 = vpop.f32.mrb[0].mxu0
      %v1324 = vadd.f32 0.0, %v1323
      %v1325 = vpop.f32.mrb[0].mxu0
      %v1326 = vpop.f32.mrb[0].mxu0
      %v1327 = vadd.f32 0.0, %v1326
      %v1328 = vpop.f32.mrb[0].mxu0
      %1329 = vmatprep.mubr.bf16.mxu0 0
      %1330 = vmatmul.mubr.bf16.gmra.mrb[0].mxu0 %v1222
      %v1331 = vpop.f32.mrb[0].mxu0
      %v1332 = vadd.f32 0.0, %v1331
      %v1333 = vpop.f32.mrb[0].mxu0
      %v1334 = vpop.f32.mrb[0].mxu0
      %v1335 = vadd.f32 0.0, %v1334
      %v1336 = vpop.f32.mrb[0].mxu0
      %1337 = vmatprep.mubr.bf16.mxu0 0
      %1338 = vmatmul.mubr.bf16.gmra.mrb[0].mxu0 %v1225
      %v1339 = vpop.f32.mrb[0].mxu0
      %v1340 = vadd.f32 0.0, %v1339
      %v1341 = vpop.f32.mrb[0].mxu0
      %v1342 = vpop.f32.mrb[0].mxu0
      %v1343 = vadd.f32 0.0, %v1342
      %v1344 = vpop.f32.mrb[0].mxu0
      %1345 = vmatprep.mubr.bf16.mxu0 0
      %1346 = vmatmul.mubr.bf16.gmra.mrb[0].mxu0 %v1228
      %v1347 = vpop.f32.mrb[0].mxu0
      %v1348 = vadd.f32 0.0, %v1347
      %v1349 = vpop.f32.mrb[0].mxu0
      %v1350 = vpop.f32.mrb[0].mxu0
      %v1351 = vadd.f32 0.0, %v1350
      %v1352 = vpop.f32.mrb[0].mxu0
      %1353 = vmatprep.mubr.bf16.mxu0 0
      %1354 = vmatmul.mubr.bf16.gmra.mrb[0].mxu0 %v1231
      %v1355 = vpop.f32.mrb[0].mxu0
      %v1356 = vadd.f32 0.0, %v1355
      %v1357 = vpop.f32.mrb[0].mxu0
      %v1358 = vpop.f32.mrb[0].mxu0
      %v1359 = vadd.f32 0.0, %v1358
      %v1360 = vpop.f32.mrb[0].mxu0
      %1361 = vmatprep.mubr.bf16.mxu0 0
      %1362 = vmatmul.mubr.bf16.gmra.mrb[0].mxu0 %v1234
      %v1363 = vpop.f32.mrb[0].mxu0
      %v1364 = vadd.f32 0.0, %v1363
      %v1365 = vpop.f32.mrb[0].mxu0
      %v1366 = vpop.f32.mrb[0].mxu0
      %v1367 = vadd.f32 0.0, %v1366
      %v1368 = vpop.f32.mrb[0].mxu0
      %1369 = vmatprep.mubr.bf16.mxu0 0
      %1370 = vmatmul.mubr.bf16.gmra.mrb[0].mxu0 %v1237
      %v1371 = vpop.f32.mrb[0].mxu0
      %v1372 = vadd.f32 0.0, %v1371
      %v1373 = vpop.f32.mrb[0].mxu0
      %v1374 = vpop.f32.mrb[0].mxu0
      %v1375 = vadd.f32 0.0, %v1374
      %v1376 = vpop.f32.mrb[0].mxu0
      %1377 = vmatprep.mubr.bf16.mxu0 0
      %1378 = vmatmul.mubr.bf16.gmra.mrb[0].mxu0 %v1240
      %v1379 = vpop.f32.mrb[0].mxu0
      %v1380 = vadd.f32 0.0, %v1379
      %v1381 = vpop.f32.mrb[0].mxu0
      %v1382 = vpop.f32.mrb[0].mxu0
      %v1383 = vadd.f32 0.0, %v1382
      %v1384 = vpop.f32.mrb[0].mxu0
      %1385 = vmatprep.mubr.bf16.mxu0 0
      %1386 = vmatmul.mubr.bf16.gmra.mrb[0].mxu0 %v1243
      %v1387 = vpop.f32.mrb[0].mxu0
      %v1388 = vadd.f32 0.0, %v1387
      %v1389 = vpop.f32.mrb[0].mxu0
      %v1390 = vpop.f32.mrb[0].mxu0
      %v1391 = vadd.f32 0.0, %v1390
      %v1392 = vpop.f32.mrb[0].mxu0
      %1393 = vmatprep.mubr.bf16.mxu0 0
      %1394 = vmatmul.mubr.bf16.gmra.mrb[0].mxu0 %v1246
      %v1395 = vpop.f32.mrb[0].mxu0
      %v1396 = vadd.f32 0.0, %v1395
      %v1397 = vpop.f32.mrb[0].mxu0
      %v1398 = vpop.f32.mrb[0].mxu0
      %v1399 = vadd.f32 0.0, %v1398
      %v1400 = vpop.f32.mrb[0].mxu0
      %1401 = vmatprep.mubr.bf16.mxu0 0
      %1402 = vmatmul.mubr.bf16.gmra.mrb[0].mxu0 %v1249
      %v1403 = vpop.f32.mrb[0].mxu0
      %v1404 = vadd.f32 0.0, %v1403
      %v1405 = vpop.f32.mrb[0].mxu0
      %v1406 = vpop.f32.mrb[0].mxu0
      %v1407 = vadd.f32 0.0, %v1406
      %v1408 = vpop.f32.mrb[0].mxu0
      %1409 = vmatprep.mubr.bf16.mxu0 0
      %1410 = vmatmul.mubr.bf16.gmra.mrb[0].mxu0 %v1252
      %v1411 = vpop.f32.mrb[0].mxu0
      %v1412 = vadd.f32 0.0, %v1411
      %v1413 = vpop.f32.mrb[0].mxu0
      %v1414 = vpop.f32.mrb[0].mxu0
      %v1415 = vadd.f32 0.0, %v1414
      %v1416 = vpop.f32.mrb[0].mxu0
      %1417 = vdwg.mxu0
      %v1418 = vadd.f32 %v1124, %v1292
      %v1419 = vadd.f32 %v1125, %v1295
      %v1420 = vadd.f32 %v1126, %v1300
      %v1421 = vadd.f32 %v1127, %v1303
      %v1422 = vadd.f32 %v1128, %v1308
      %v1423 = vadd.f32 %v1129, %v1311
      %v1424 = vadd.f32 %v1130, %v1316
      %v1425 = vadd.f32 %v1131, %v1319
      %v1426 = vadd.f32 %v1132, %v1324
      %v1427 = vadd.f32 %v1133, %v1327
      %v1428 = vadd.f32 %v1134, %v1332
      %v1429 = vadd.f32 %v1135, %v1335
      %v1430 = vadd.f32 %v1136, %v1340
      %v1431 = vadd.f32 %v1137, %v1343
      %v1432 = vadd.f32 %v1138, %v1348
      %v1433 = vadd.f32 %v1139, %v1351
      %v1434 = vadd.f32 %v1140, %v1356
      %v1435 = vadd.f32 %v1141, %v1359
      %v1436 = vadd.f32 %v1142, %v1364
      %v1437 = vadd.f32 %v1143, %v1367
      %v1438 = vadd.f32 %v1144, %v1372
      %v1439 = vadd.f32 %v1145, %v1375
      %v1440 = vadd.f32 %v1146, %v1380
      %v1441 = vadd.f32 %v1147, %v1383
      %v1442 = vadd.f32 %v1148, %v1388
      %v1443 = vadd.f32 %v1149, %v1391
      %v1444 = vadd.f32 %v1150, %v1396
      %v1445 = vadd.f32 %v1151, %v1399
      %v1446 = vadd.f32 %v1152, %v1404
      %v1447 = vadd.f32 %v1153, %v1407
      %v1448 = vadd.f32 %v1154, %v1412
      %v1449 = vadd.f32 %v1155, %v1415
      %v1450 = vld [vmem:[%s304 + $0x1] sm:$0xff]
      %v1451 = vld [vmem:[%s304 + $0x9] sm:$0xff]
      %v1452 = vld [vmem:[%s304 + $0x19] sm:$0xff]
      %v1453 = vld [vmem:[%s304 + $0x21] sm:$0xff]
      %v1454 = vld [vmem:[%s304 + $0x31] sm:$0xff]
      %v1455 = vld [vmem:[%s304 + $0x39] sm:$0xff]
      %v1456 = vld [vmem:[%s304 + $0x49] sm:$0xff]
      %v1457 = vld [vmem:[%s304 + $0x51] sm:$0xff]
      %v1458 = vld [vmem:[%s304 + $0x61] sm:$0xff]
      %v1459 = vld [vmem:[%s304 + $0x69] sm:$0xff]
      %v1460 = vld [vmem:[%s304 + $0x79] sm:$0xff]
      %v1461 = vld [vmem:[%s304 + $0x81] sm:$0xff]
      %v1462 = vld [vmem:[%s304 + $0x91] sm:$0xff]
      %v1463 = vld [vmem:[%s304 + $0x99] sm:$0xff]
      %v1464 = vld [vmem:[%s304 + $0xa9] sm:$0xff]
      %v1465 = vld [vmem:[%s304 + $0xb1] sm:$0xff]
      %v1466 = vld [vmem:[%s304 + $0xc1] sm:$0xff]
      %v1467 = vld [vmem:[%s304 + $0xc9] sm:$0xff]
      %v1468 = vld [vmem:[%s304 + $0xd9] sm:$0xff]
      %v1469 = vld [vmem:[%s304 + $0xe1] sm:$0xff]
      %v1470 = vld [vmem:[%s304 + $0xf1] sm:$0xff]
      %v1471 = vld [vmem:[%s304 + $0xf9] sm:$0xff]
      %v1472 = vld [vmem:[%s304 + $0x109] sm:$0xff]
      %v1473 = vld [vmem:[%s304 + $0x111] sm:$0xff]
      %v1474 = vld [vmem:[%s304 + $0x121] sm:$0xff]
      %v1475 = vld [vmem:[%s304 + $0x129] sm:$0xff]
      %v1476 = vld [vmem:[%s304 + $0x139] sm:$0xff]
      %v1477 = vld [vmem:[%s304 + $0x141] sm:$0xff]
      %v1478 = vld [vmem:[%s304 + $0x151] sm:$0xff]
      %v1479 = vld [vmem:[%s304 + $0x159] sm:$0xff]
      %v1480 = vld [vmem:[%s304 + $0x169] sm:$0xff]
      %v1481 = vld [vmem:[%s304 + $0x171] sm:$0xff]
      %v1482 = vpack.c.bf16 %v1451, %v1450
      %v1483 = vpack.c.bf16 %v1453, %v1452
      %v1484 = vpack.c.bf16 %v1455, %v1454
      %v1485 = vpack.c.bf16 %v1457, %v1456
      %v1486 = vpack.c.bf16 %v1459, %v1458
      %v1487 = vpack.c.bf16 %v1461, %v1460
      %v1488 = vpack.c.bf16 %v1463, %v1462
      %v1489 = vpack.c.bf16 %v1465, %v1464
      %v1490 = vpack.c.bf16 %v1467, %v1466
      %v1491 = vpack.c.bf16 %v1469, %v1468
      %v1492 = vpack.c.bf16 %v1471, %v1470
      %v1493 = vpack.c.bf16 %v1473, %v1472
      %v1494 = vpack.c.bf16 %v1475, %v1474
      %v1495 = vpack.c.bf16 %v1477, %v1476
      %v1496 = vpack.c.bf16 %v1479, %v1478
      %v1497 = vpack.c.bf16 %v1481, %v1480
      %s1498 = scalar_lea.vmem %s1, 8
      %v1499 = vld [vmem:[%s1498] sm:$0x3]
      %v1501 = vsel %vm305, %v1482, 0
      %v1504 = vsel %vm305, %v1483, 0
      %v1507 = vsel %vm305, %v1484, 0
      %v1510 = vsel %vm305, %v1485, 0
      %v1513 = vsel %vm305, %v1486, 0
      %v1516 = vsel %vm305, %v1487, 0
      %v1519 = vsel %vm305, %v1488, 0
      %v1522 = vsel %vm305, %v1489, 0
      %v1525 = vsel %vm305, %v1490, 0
      %v1528 = vsel %vm305, %v1491, 0
      %v1531 = vsel %vm305, %v1492, 0
      %v1534 = vsel %vm305, %v1493, 0
      %v1537 = vsel %vm305, %v1494, 0
      %v1540 = vsel %vm305, %v1495, 0
      %v1543 = vsel %vm305, %v1496, 0
      %v1546 = vsel %vm305, %v1497, 0
      %v1549 = vsel %vm485, %v1499, 0
      %1551 = vmatprep.subr.bf16.mxu0 0
      %1552 = vmatpush1.bf16.msra.mxu0 %v1549
      %1553 = vmatprep.subr.bf16.mxu0 0
      %1554 = vmatpush1.bf16.msra.mxu0 0
      %1555 = vmatprep.subr.bf16.mxu0 0
      %1556 = vmatpush1.bf16.msra.mxu0 0
      %1557 = vmatprep.subr.bf16.mxu0 0
      %1558 = vmatpush1.bf16.msra.mxu0 0
      %1559 = vmatprep.subr.bf16.mxu0 0
      %1560 = vmatpush1.bf16.msra.mxu0 0
      %1561 = vmatprep.subr.bf16.mxu0 0
      %1562 = vmatpush1.bf16.msra.mxu0 0
      %1563 = vmatprep.subr.bf16.mxu0 0
      %1564 = vmatpush1.bf16.msra.mxu0 0
      %1565 = vmatprep.subr.bf16.mxu0 0
      %1566 = vmatpush1.bf16.msra.mxu0 0
      %1567 = vmatprep.subr.bf16.mxu0 0
      %1568 = vmatpush1.bf16.msra.mxu0 0
      %1569 = vmatprep.subr.bf16.mxu0 0
      %1570 = vmatpush1.bf16.msra.mxu0 0
      %1571 = vmatprep.subr.bf16.mxu0 0
      %1572 = vmatpush1.bf16.msra.mxu0 0
      %1573 = vmatprep.subr.bf16.mxu0 0
      %1574 = vmatpush1.bf16.msra.mxu0 0
      %1575 = vmatprep.subr.bf16.mxu0 0
      %1576 = vmatpush1.bf16.msra.mxu0 0
      %1577 = vmatprep.subr.bf16.mxu0 0
      %1578 = vmatpush1.bf16.msra.mxu0 0
      %1579 = vmatprep.subr.bf16.mxu0 0
      %1580 = vmatpush1.bf16.msra.mxu0 0
      %1581 = vmatprep.subr.bf16.mxu0 0
      %1582 = vmatpush1.bf16.msra.mxu0 0
      %1583 = vmatprep.mubr.bf16.mxu0 0
      %1584 = vmatmul.mubr.bf16.gmra.mrb[0].mxu0 %v1501
      %v1585 = vpop.f32.mrb[0].mxu0
      %v1586 = vadd.f32 0.0, %v1585
      %v1587 = vpop.f32.mrb[0].mxu0
      %v1588 = vpop.f32.mrb[0].mxu0
      %v1589 = vadd.f32 0.0, %v1588
      %v1590 = vpop.f32.mrb[0].mxu0
      %1591 = vmatprep.mubr.bf16.mxu0 0
      %1592 = vmatmul.mubr.bf16.gmra.mrb[0].mxu0 %v1504
      %v1593 = vpop.f32.mrb[0].mxu0
      %v1594 = vadd.f32 0.0, %v1593
      %v1595 = vpop.f32.mrb[0].mxu0
      %v1596 = vpop.f32.mrb[0].mxu0
      %v1597 = vadd.f32 0.0, %v1596
      %v1598 = vpop.f32.mrb[0].mxu0
      %1599 = vmatprep.mubr.bf16.mxu0 0
      %1600 = vmatmul.mubr.bf16.gmra.mrb[0].mxu0 %v1507
      %v1601 = vpop.f32.mrb[0].mxu0
      %v1602 = vadd.f32 0.0, %v1601
      %v1603 = vpop.f32.mrb[0].mxu0
      %v1604 = vpop.f32.mrb[0].mxu0
      %v1605 = vadd.f32 0.0, %v1604
      %v1606 = vpop.f32.mrb[0].mxu0
      %1607 = vmatprep.mubr.bf16.mxu0 0
      %1608 = vmatmul.mubr.bf16.gmra.mrb[0].mxu0 %v1510
      %v1609 = vpop.f32.mrb[0].mxu0
      %v1610 = vadd.f32 0.0, %v1609
      %v1611 = vpop.f32.mrb[0].mxu0
      %v1612 = vpop.f32.mrb[0].mxu0
      %v1613 = vadd.f32 0.0, %v1612
      %v1614 = vpop.f32.mrb[0].mxu0
      %1615 = vmatprep.mubr.bf16.mxu0 0
      %1616 = vmatmul.mubr.bf16.gmra.mrb[0].mxu0 %v1513
      %v1617 = vpop.f32.mrb[0].mxu0
      %v1618 = vadd.f32 0.0, %v1617
      %v1619 = vpop.f32.mrb[0].mxu0
      %v1620 = vpop.f32.mrb[0].mxu0
      %v1621 = vadd.f32 0.0, %v1620
      %v1622 = vpop.f32.mrb[0].mxu0
      %1623 = vmatprep.mubr.bf16.mxu0 0
      %1624 = vmatmul.mubr.bf16.gmra.mrb[0].mxu0 %v1516
      %v1625 = vpop.f32.mrb[0].mxu0
      %v1626 = vadd.f32 0.0, %v1625
      %v1627 = vpop.f32.mrb[0].mxu0
      %v1628 = vpop.f32.mrb[0].mxu0
      %v1629 = vadd.f32 0.0, %v1628
      %v1630 = vpop.f32.mrb[0].mxu0
      %1631 = vmatprep.mubr.bf16.mxu0 0
      %1632 = vmatmul.mubr.bf16.gmra.mrb[0].mxu0 %v1519
      %v1633 = vpop.f32.mrb[0].mxu0
      %v1634 = vadd.f32 0.0, %v1633
      %v1635 = vpop.f32.mrb[0].mxu0
      %v1636 = vpop.f32.mrb[0].mxu0
      %v1637 = vadd.f32 0.0, %v1636
      %v1638 = vpop.f32.mrb[0].mxu0
      %1639 = vmatprep.mubr.bf16.mxu0 0
      %1640 = vmatmul.mubr.bf16.gmra.mrb[0].mxu0 %v1522
      %v1641 = vpop.f32.mrb[0].mxu0
      %v1642 = vadd.f32 0.0, %v1641
      %v1643 = vpop.f32.mrb[0].mxu0
      %v1644 = vpop.f32.mrb[0].mxu0
      %v1645 = vadd.f32 0.0, %v1644
      %v1646 = vpop.f32.mrb[0].mxu0
      %1647 = vmatprep.mubr.bf16.mxu0 0
      %1648 = vmatmul.mubr.bf16.gmra.mrb[0].mxu0 %v1525
      %v1649 = vpop.f32.mrb[0].mxu0
      %v1650 = vadd.f32 0.0, %v1649
      %v1651 = vpop.f32.mrb[0].mxu0
      %v1652 = vpop.f32.mrb[0].mxu0
      %v1653 = vadd.f32 0.0, %v1652
      %v1654 = vpop.f32.mrb[0].mxu0
      %1655 = vmatprep.mubr.bf16.mxu0 0
      %1656 = vmatmul.mubr.bf16.gmra.mrb[0].mxu0 %v1528
      %v1657 = vpop.f32.mrb[0].mxu0
      %v1658 = vadd.f32 0.0, %v1657
      %v1659 = vpop.f32.mrb[0].mxu0
      %v1660 = vpop.f32.mrb[0].mxu0
      %v1661 = vadd.f32 0.0, %v1660
      %v1662 = vpop.f32.mrb[0].mxu0
      %1663 = vmatprep.mubr.bf16.mxu0 0
      %1664 = vmatmul.mubr.bf16.gmra.mrb[0].mxu0 %v1531
      %v1665 = vpop.f32.mrb[0].mxu0
      %v1666 = vadd.f32 0.0, %v1665
      %v1667 = vpop.f32.mrb[0].mxu0
      %v1668 = vpop.f32.mrb[0].mxu0
      %v1669 = vadd.f32 0.0, %v1668
      %v1670 = vpop.f32.mrb[0].mxu0
      %1671 = vmatprep.mubr.bf16.mxu0 0
      %1672 = vmatmul.mubr.bf16.gmra.mrb[0].mxu0 %v1534
      %v1673 = vpop.f32.mrb[0].mxu0
      %v1674 = vadd.f32 0.0, %v1673
      %v1675 = vpop.f32.mrb[0].mxu0
      %v1676 = vpop.f32.mrb[0].mxu0
      %v1677 = vadd.f32 0.0, %v1676
      %v1678 = vpop.f32.mrb[0].mxu0
      %1679 = vmatprep.mubr.bf16.mxu0 0
      %1680 = vmatmul.mubr.bf16.gmra.mrb[0].mxu0 %v1537
      %v1681 = vpop.f32.mrb[0].mxu0
      %v1682 = vadd.f32 0.0, %v1681
      %v1683 = vpop.f32.mrb[0].mxu0
      %v1684 = vpop.f32.mrb[0].mxu0
      %v1685 = vadd.f32 0.0, %v1684
      %v1686 = vpop.f32.mrb[0].mxu0
      %1687 = vmatprep.mubr.bf16.mxu0 0
      %1688 = vmatmul.mubr.bf16.gmra.mrb[0].mxu0 %v1540
      %v1689 = vpop.f32.mrb[0].mxu0
      %v1690 = vadd.f32 0.0, %v1689
      %v1691 = vpop.f32.mrb[0].mxu0
      %v1692 = vpop.f32.mrb[0].mxu0
      %v1693 = vadd.f32 0.0, %v1692
      %v1694 = vpop.f32.mrb[0].mxu0
      %1695 = vmatprep.mubr.bf16.mxu0 0
      %1696 = vmatmul.mubr.bf16.gmra.mrb[0].mxu0 %v1543
      %v1697 = vpop.f32.mrb[0].mxu0
      %v1698 = vadd.f32 0.0, %v1697
      %v1699 = vpop.f32.mrb[0].mxu0
      %v1700 = vpop.f32.mrb[0].mxu0
      %v1701 = vadd.f32 0.0, %v1700
      %v1702 = vpop.f32.mrb[0].mxu0
      %1703 = vmatprep.mubr.bf16.mxu0 0
      %1704 = vmatmul.mubr.bf16.gmra.mrb[0].mxu0 %v1546
      %v1705 = vpop.f32.mrb[0].mxu0
      %v1706 = vadd.f32 0.0, %v1705
      %v1707 = vpop.f32.mrb[0].mxu0
      %v1708 = vpop.f32.mrb[0].mxu0
      %v1709 = vadd.f32 0.0, %v1708
      %v1710 = vpop.f32.mrb[0].mxu0
      %1711 = vdwg.mxu0
      %v1712 = vadd.f32 %v1418, %v1586
      %v1713 = vadd.f32 %v1419, %v1589
      %v1714 = vadd.f32 %v1420, %v1594
      %v1715 = vadd.f32 %v1421, %v1597
      %v1716 = vadd.f32 %v1422, %v1602
      %v1717 = vadd.f32 %v1423, %v1605
      %v1718 = vadd.f32 %v1424, %v1610
      %v1719 = vadd.f32 %v1425, %v1613
      %v1720 = vadd.f32 %v1426, %v1618
      %v1721 = vadd.f32 %v1427, %v1621
      %v1722 = vadd.f32 %v1428, %v1626
      %v1723 = vadd.f32 %v1429, %v1629
      %v1724 = vadd.f32 %v1430, %v1634
      %v1725 = vadd.f32 %v1431, %v1637
      %v1726 = vadd.f32 %v1432, %v1642
      %v1727 = vadd.f32 %v1433, %v1645
      %v1728 = vadd.f32 %v1434, %v1650
      %v1729 = vadd.f32 %v1435, %v1653
      %v1730 = vadd.f32 %v1436, %v1658
      %v1731 = vadd.f32 %v1437, %v1661
      %v1732 = vadd.f32 %v1438, %v1666
      %v1733 = vadd.f32 %v1439, %v1669
      %v1734 = vadd.f32 %v1440, %v1674
      %v1735 = vadd.f32 %v1441, %v1677
      %v1736 = vadd.f32 %v1442, %v1682
      %v1737 = vadd.f32 %v1443, %v1685
      %v1738 = vadd.f32 %v1444, %v1690
      %v1739 = vadd.f32 %v1445, %v1693
      %v1740 = vadd.f32 %v1446, %v1698
      %v1741 = vadd.f32 %v1447, %v1701
      %v1742 = vadd.f32 %v1448, %v1706
      %v1743 = vadd.f32 %v1449, %v1709
      %v1744 = vld [vmem:[%s304 + $0x2] sm:$0xff]
      %v1745 = vld [vmem:[%s304 + $0xa] sm:$0xff]
      %v1746 = vld [vmem:[%s304 + $0x1a] sm:$0xff]
      %v1747 = vld [vmem:[%s304 + $0x22] sm:$0xff]
      %v1748 = vld [vmem:[%s304 + $0x32] sm:$0xff]
      %v1749 = vld [vmem:[%s304 + $0x3a] sm:$0xff]
      %v1750 = vld [vmem:[%s304 + $0x4a] sm:$0xff]
      %v1751 = vld [vmem:[%s304 + $0x52] sm:$0xff]
      %v1752 = vld [vmem:[%s304 + $0x62] sm:$0xff]
      %v1753 = vld [vmem:[%s304 + $0x6a] sm:$0xff]
      %v1754 = vld [vmem:[%s304 + $0x7a] sm:$0xff]
      %v1755 = vld [vmem:[%s304 + $0x82] sm:$0xff]
      %v1756 = vld [vmem:[%s304 + $0x92] sm:$0xff]
      %v1757 = vld [vmem:[%s304 + $0x9a] sm:$0xff]
      %v1758 = vld [vmem:[%s304 + $0xaa] sm:$0xff]
      %v1759 = vld [vmem:[%s304 + $0xb2] sm:$0xff]
      %v1760 = vld [vmem:[%s304 + $0xc2] sm:$0xff]
      %v1761 = vld [vmem:[%s304 + $0xca] sm:$0xff]
      %v1762 = vld [vmem:[%s304 + $0xda] sm:$0xff]
      %v1763 = vld [vmem:[%s304 + $0xe2] sm:$0xff]
      %v1764 = vld [vmem:[%s304 + $0xf2] sm:$0xff]
      %v1765 = vld [vmem:[%s304 + $0xfa] sm:$0xff]
      %v1766 = vld [vmem:[%s304 + $0x10a] sm:$0xff]
      %v1767 = vld [vmem:[%s304 + $0x112] sm:$0xff]
      %v1768 = vld [vmem:[%s304 + $0x122] sm:$0xff]
      %v1769 = vld [vmem:[%s304 + $0x12a] sm:$0xff]
      %v1770 = vld [vmem:[%s304 + $0x13a] sm:$0xff]
      %v1771 = vld [vmem:[%s304 + $0x142] sm:$0xff]
      %v1772 = vld [vmem:[%s304 + $0x152] sm:$0xff]
      %v1773 = vld [vmem:[%s304 + $0x15a] sm:$0xff]
      %v1774 = vld [vmem:[%s304 + $0x16a] sm:$0xff]
      %v1775 = vld [vmem:[%s304 + $0x172] sm:$0xff]
      %v1776 = vpack.c.bf16 %v1745, %v1744
      %v1777 = vpack.c.bf16 %v1747, %v1746
      %v1778 = vpack.c.bf16 %v1749, %v1748
      %v1779 = vpack.c.bf16 %v1751, %v1750
      %v1780 = vpack.c.bf16 %v1753, %v1752
      %v1781 = vpack.c.bf16 %v1755, %v1754
      %v1782 = vpack.c.bf16 %v1757, %v1756
      %v1783 = vpack.c.bf16 %v1759, %v1758
      %v1784 = vpack.c.bf16 %v1761, %v1760
      %v1785 = vpack.c.bf16 %v1763, %v1762
      %v1786 = vpack.c.bf16 %v1765, %v1764
      %v1787 = vpack.c.bf16 %v1767, %v1766
      %v1788 = vpack.c.bf16 %v1769, %v1768
      %v1789 = vpack.c.bf16 %v1771, %v1770
      %v1790 = vpack.c.bf16 %v1773, %v1772
      %v1791 = vpack.c.bf16 %v1775, %v1774
      %s1792 = scalar_lea.vmem %s1, 10
      %v1793 = vld [vmem:[%s1792] sm:$0x3]
      %v1795 = vsel %vm305, %v1776, 0
      %v1798 = vsel %vm305, %v1777, 0
      %v1801 = vsel %vm305, %v1778, 0
      %v1804 = vsel %vm305, %v1779, 0
      %v1807 = vsel %vm305, %v1780, 0
      %v1810 = vsel %vm305, %v1781, 0
      %v1813 = vsel %vm305, %v1782, 0
      %v1816 = vsel %vm305, %v1783, 0
      %v1819 = vsel %vm305, %v1784, 0
      %v1822 = vsel %vm305, %v1785, 0
      %v1825 = vsel %vm305, %v1786, 0
      %v1828 = vsel %vm305, %v1787, 0
      %v1831 = vsel %vm305, %v1788, 0
      %v1834 = vsel %vm305, %v1789, 0
      %v1837 = vsel %vm305, %v1790, 0
      %v1840 = vsel %vm305, %v1791, 0
      %v1843 = vsel %vm485, %v1793, 0
      %1845 = vmatprep.subr.bf16.mxu0 0
      %1846 = vmatpush1.bf16.msra.mxu0 %v1843
      %1847 = vmatprep.subr.bf16.mxu0 0
      %1848 = vmatpush1.bf16.msra.mxu0 0
      %1849 = vmatprep.subr.bf16.mxu0 0
      %1850 = vmatpush1.bf16.msra.mxu0 0
      %1851 = vmatprep.subr.bf16.mxu0 0
      %1852 = vmatpush1.bf16.msra.mxu0 0
      %1853 = vmatprep.subr.bf16.mxu0 0
      %1854 = vmatpush1.bf16.msra.mxu0 0
      %1855 = vmatprep.subr.bf16.mxu0 0
      %1856 = vmatpush1.bf16.msra.mxu0 0
      %1857 = vmatprep.subr.bf16.mxu0 0
      %1858 = vmatpush1.bf16.msra.mxu0 0
      %1859 = vmatprep.subr.bf16.mxu0 0
      %1860 = vmatpush1.bf16.msra.mxu0 0
      %1861 = vmatprep.subr.bf16.mxu0 0
      %1862 = vmatpush1.bf16.msra.mxu0 0
      %1863 = vmatprep.subr.bf16.mxu0 0
      %1864 = vmatpush1.bf16.msra.mxu0 0
      %1865 = vmatprep.subr.bf16.mxu0 0
      %1866 = vmatpush1.bf16.msra.mxu0 0
      %1867 = vmatprep.subr.bf16.mxu0 0
      %1868 = vmatpush1.bf16.msra.mxu0 0
      %1869 = vmatprep.subr.bf16.mxu0 0
      %1870 = vmatpush1.bf16.msra.mxu0 0
      %1871 = vmatprep.subr.bf16.mxu0 0
      %1872 = vmatpush1.bf16.msra.mxu0 0
      %1873 = vmatprep.subr.bf16.mxu0 0
      %1874 = vmatpush1.bf16.msra.mxu0 0
      %1875 = vmatprep.subr.bf16.mxu0 0
      %1876 = vmatpush1.bf16.msra.mxu0 0
      %1877 = vmatprep.mubr.bf16.mxu0 0
      %1878 = vmatmul.mubr.bf16.gmra.mrb[0].mxu0 %v1795
      %v1879 = vpop.f32.mrb[0].mxu0
      %v1880 = vadd.f32 0.0, %v1879
      %v1881 = vpop.f32.mrb[0].mxu0
      %v1882 = vpop.f32.mrb[0].mxu0
      %v1883 = vadd.f32 0.0, %v1882
      %v1884 = vpop.f32.mrb[0].mxu0
      %1885 = vmatprep.mubr.bf16.mxu0 0
      %1886 = vmatmul.mubr.bf16.gmra.mrb[0].mxu0 %v1798
      %v1887 = vpop.f32.mrb[0].mxu0
      %v1888 = vadd.f32 0.0, %v1887
      %v1889 = vpop.f32.mrb[0].mxu0
      %v1890 = vpop.f32.mrb[0].mxu0
      %v1891 = vadd.f32 0.0, %v1890
      %v1892 = vpop.f32.mrb[0].mxu0
      %1893 = vmatprep.mubr.bf16.mxu0 0
      %1894 = vmatmul.mubr.bf16.gmra.mrb[0].mxu0 %v1801
      %v1895 = vpop.f32.mrb[0].mxu0
      %v1896 = vadd.f32 0.0, %v1895
      %v1897 = vpop.f32.mrb[0].mxu0
      %v1898 = vpop.f32.mrb[0].mxu0
      %v1899 = vadd.f32 0.0, %v1898
      %v1900 = vpop.f32.mrb[0].mxu0
      %1901 = vmatprep.mubr.bf16.mxu0 0
      %1902 = vmatmul.mubr.bf16.gmra.mrb[0].mxu0 %v1804
      %v1903 = vpop.f32.mrb[0].mxu0
      %v1904 = vadd.f32 0.0, %v1903
      %v1905 = vpop.f32.mrb[0].mxu0
      %v1906 = vpop.f32.mrb[0].mxu0
      %v1907 = vadd.f32 0.0, %v1906
      %v1908 = vpop.f32.mrb[0].mxu0
      %1909 = vmatprep.mubr.bf16.mxu0 0
      %1910 = vmatmul.mubr.bf16.gmra.mrb[0].mxu0 %v1807
      %v1911 = vpop.f32.mrb[0].mxu0
      %v1912 = vadd.f32 0.0, %v1911
      %v1913 = vpop.f32.mrb[0].mxu0
      %v1914 = vpop.f32.mrb[0].mxu0
      %v1915 = vadd.f32 0.0, %v1914
      %v1916 = vpop.f32.mrb[0].mxu0
      %1917 = vmatprep.mubr.bf16.mxu0 0
      %1918 = vmatmul.mubr.bf16.gmra.mrb[0].mxu0 %v1810
      %v1919 = vpop.f32.mrb[0].mxu0
      %v1920 = vadd.f32 0.0, %v1919
      %v1921 = vpop.f32.mrb[0].mxu0
      %v1922 = vpop.f32.mrb[0].mxu0
      %v1923 = vadd.f32 0.0, %v1922
      %v1924 = vpop.f32.mrb[0].mxu0
      %1925 = vmatprep.mubr.bf16.mxu0 0
      %1926 = vmatmul.mubr.bf16.gmra.mrb[0].mxu0 %v1813
      %v1927 = vpop.f32.mrb[0].mxu0
      %v1928 = vadd.f32 0.0, %v1927
      %v1929 = vpop.f32.mrb[0].mxu0
      %v1930 = vpop.f32.mrb[0].mxu0
      %v1931 = vadd.f32 0.0, %v1930
      %v1932 = vpop.f32.mrb[0].mxu0
      %1933 = vmatprep.mubr.bf16.mxu0 0
      %1934 = vmatmul.mubr.bf16.gmra.mrb[0].mxu0 %v1816
      %v1935 = vpop.f32.mrb[0].mxu0
      %v1936 = vadd.f32 0.0, %v1935
      %v1937 = vpop.f32.mrb[0].mxu0
      %v1938 = vpop.f32.mrb[0].mxu0
      %v1939 = vadd.f32 0.0, %v1938
      %v1940 = vpop.f32.mrb[0].mxu0
      %1941 = vmatprep.mubr.bf16.mxu0 0
      %1942 = vmatmul.mubr.bf16.gmra.mrb[0].mxu0 %v1819
      %v1943 = vpop.f32.mrb[0].mxu0
      %v1944 = vadd.f32 0.0, %v1943
      %v1945 = vpop.f32.mrb[0].mxu0
      %v1946 = vpop.f32.mrb[0].mxu0
      %v1947 = vadd.f32 0.0, %v1946
      %v1948 = vpop.f32.mrb[0].mxu0
      %1949 = vmatprep.mubr.bf16.mxu0 0
      %1950 = vmatmul.mubr.bf16.gmra.mrb[0].mxu0 %v1822
      %v1951 = vpop.f32.mrb[0].mxu0
      %v1952 = vadd.f32 0.0, %v1951
      %v1953 = vpop.f32.mrb[0].mxu0
      %v1954 = vpop.f32.mrb[0].mxu0
      %v1955 = vadd.f32 0.0, %v1954
      %v1956 = vpop.f32.mrb[0].mxu0
      %1957 = vmatprep.mubr.bf16.mxu0 0
      %1958 = vmatmul.mubr.bf16.gmra.mrb[0].mxu0 %v1825
      %v1959 = vpop.f32.mrb[0].mxu0
      %v1960 = vadd.f32 0.0, %v1959
      %v1961 = vpop.f32.mrb[0].mxu0
      %v1962 = vpop.f32.mrb[0].mxu0
      %v1963 = vadd.f32 0.0, %v1962
      %v1964 = vpop.f32.mrb[0].mxu0
      %1965 = vmatprep.mubr.bf16.mxu0 0
      %1966 = vmatmul.mubr.bf16.gmra.mrb[0].mxu0 %v1828
      %v1967 = vpop.f32.mrb[0].mxu0
      %v1968 = vadd.f32 0.0, %v1967
      %v1969 = vpop.f32.mrb[0].mxu0
      %v1970 = vpop.f32.mrb[0].mxu0
      %v1971 = vadd.f32 0.0, %v1970
      %v1972 = vpop.f32.mrb[0].mxu0
      %1973 = vmatprep.mubr.bf16.mxu0 0
      %1974 = vmatmul.mubr.bf16.gmra.mrb[0].mxu0 %v1831
      %v1975 = vpop.f32.mrb[0].mxu0
      %v1976 = vadd.f32 0.0, %v1975
      %v1977 = vpop.f32.mrb[0].mxu0
      %v1978 = vpop.f32.mrb[0].mxu0
      %v1979 = vadd.f32 0.0, %v1978
      %v1980 = vpop.f32.mrb[0].mxu0
      %1981 = vmatprep.mubr.bf16.mxu0 0
      %1982 = vmatmul.mubr.bf16.gmra.mrb[0].mxu0 %v1834
      %v1983 = vpop.f32.mrb[0].mxu0
      %v1984 = vadd.f32 0.0, %v1983
      %v1985 = vpop.f32.mrb[0].mxu0
      %v1986 = vpop.f32.mrb[0].mxu0
      %v1987 = vadd.f32 0.0, %v1986
      %v1988 = vpop.f32.mrb[0].mxu0
      %1989 = vmatprep.mubr.bf16.mxu0 0
      %1990 = vmatmul.mubr.bf16.gmra.mrb[0].mxu0 %v1837
      %v1991 = vpop.f32.mrb[0].mxu0
      %v1992 = vadd.f32 0.0, %v1991
      %v1993 = vpop.f32.mrb[0].mxu0
      %v1994 = vpop.f32.mrb[0].mxu0
      %v1995 = vadd.f32 0.0, %v1994
      %v1996 = vpop.f32.mrb[0].mxu0
      %1997 = vmatprep.mubr.bf16.mxu0 0
      %1998 = vmatmul.mubr.bf16.gmra.mrb[0].mxu0 %v1840
      %v1999 = vpop.f32.mrb[0].mxu0
      %v2000 = vadd.f32 0.0, %v1999
      %v2001 = vpop.f32.mrb[0].mxu0
      %v2002 = vpop.f32.mrb[0].mxu0
      %v2003 = vadd.f32 0.0, %v2002
      %v2004 = vpop.f32.mrb[0].mxu0
      %2005 = vdwg.mxu0
      %v2006 = vadd.f32 %v1712, %v1880
      %v2007 = vadd.f32 %v1713, %v1883
      %v2008 = vadd.f32 %v1714, %v1888
      %v2009 = vadd.f32 %v1715, %v1891
      %v2010 = vadd.f32 %v1716, %v1896
      %v2011 = vadd.f32 %v1717, %v1899
      %v2012 = vadd.f32 %v1718, %v1904
      %v2013 = vadd.f32 %v1719, %v1907
      %v2014 = vadd.f32 %v1720, %v1912
      %v2015 = vadd.f32 %v1721, %v1915
      %v2016 = vadd.f32 %v1722, %v1920
      %v2017 = vadd.f32 %v1723, %v1923
      %v2018 = vadd.f32 %v1724, %v1928
      %v2019 = vadd.f32 %v1725, %v1931
      %v2020 = vadd.f32 %v1726, %v1936
      %v2021 = vadd.f32 %v1727, %v1939
      %v2022 = vadd.f32 %v1728, %v1944
      %v2023 = vadd.f32 %v1729, %v1947
      %v2024 = vadd.f32 %v1730, %v1952
      %v2025 = vadd.f32 %v1731, %v1955
      %v2026 = vadd.f32 %v1732, %v1960
      %v2027 = vadd.f32 %v1733, %v1963
      %v2028 = vadd.f32 %v1734, %v1968
      %v2029 = vadd.f32 %v1735, %v1971
      %v2030 = vadd.f32 %v1736, %v1976
      %v2031 = vadd.f32 %v1737, %v1979
      %v2032 = vadd.f32 %v1738, %v1984
      %v2033 = vadd.f32 %v1739, %v1987
      %v2034 = vadd.f32 %v1740, %v1992
      %v2035 = vadd.f32 %v1741, %v1995
      %v2036 = vadd.f32 %v1742, %v2000
      %v2037 = vadd.f32 %v1743, %v2003
      %s2038 = scalar_lea.vmem [#allocation2], 48
      %v2039 = vld [vmem:[%s2038] sm:$0xff]
      %v2040 = vld [vmem:[%s2038 + $0x8] sm:$0xff]
      %v2041 = vld [vmem:[%s2038 + $0x18] sm:$0xff]
      %v2042 = vld [vmem:[%s2038 + $0x20] sm:$0xff]
      %v2043 = vld [vmem:[%s2038 + $0x30] sm:$0xff]
      %v2044 = vld [vmem:[%s2038 + $0x38] sm:$0xff]
      %v2045 = vld [vmem:[%s2038 + $0x48] sm:$0xff]
      %v2046 = vld [vmem:[%s2038 + $0x50] sm:$0xff]
      %v2047 = vld [vmem:[%s2038 + $0x60] sm:$0xff]
      %v2048 = vld [vmem:[%s2038 + $0x68] sm:$0xff]
      %v2049 = vld [vmem:[%s2038 + $0x78] sm:$0xff]
      %v2050 = vld [vmem:[%s2038 + $0x80] sm:$0xff]
      %v2051 = vld [vmem:[%s2038 + $0x90] sm:$0xff]
      %v2052 = vld [vmem:[%s2038 + $0x98] sm:$0xff]
      %v2053 = vld [vmem:[%s2038 + $0xa8] sm:$0xff]
      %v2054 = vld [vmem:[%s2038 + $0xb0] sm:$0xff]
      %v2055 = vld [vmem:[%s2038 + $0xc0] sm:$0xff]
      %v2056 = vld [vmem:[%s2038 + $0xc8] sm:$0xff]
      %v2057 = vld [vmem:[%s2038 + $0xd8] sm:$0xff]
      %v2058 = vld [vmem:[%s2038 + $0xe0] sm:$0xff]
      %v2059 = vld [vmem:[%s2038 + $0xf0] sm:$0xff]
      %v2060 = vld [vmem:[%s2038 + $0xf8] sm:$0xff]
      %v2061 = vld [vmem:[%s2038 + $0x108] sm:$0xff]
      %v2062 = vld [vmem:[%s2038 + $0x110] sm:$0xff]
      %v2063 = vld [vmem:[%s2038 + $0x120] sm:$0xff]
      %v2064 = vld [vmem:[%s2038 + $0x128] sm:$0xff]
      %v2065 = vld [vmem:[%s2038 + $0x138] sm:$0xff]
      %v2066 = vld [vmem:[%s2038 + $0x140] sm:$0xff]
      %v2067 = vld [vmem:[%s2038 + $0x150] sm:$0xff]
      %v2068 = vld [vmem:[%s2038 + $0x158] sm:$0xff]
      %v2069 = vld [vmem:[%s2038 + $0x168] sm:$0xff]
      %v2070 = vld [vmem:[%s2038 + $0x170] sm:$0xff]
      %v2071 = vpack.c.bf16 %v2040, %v2039
      %v2072 = vpack.c.bf16 %v2042, %v2041
      %v2073 = vpack.c.bf16 %v2044, %v2043
      %v2074 = vpack.c.bf16 %v2046, %v2045
      %v2075 = vpack.c.bf16 %v2048, %v2047
      %v2076 = vpack.c.bf16 %v2050, %v2049
      %v2077 = vpack.c.bf16 %v2052, %v2051
      %v2078 = vpack.c.bf16 %v2054, %v2053
      %v2079 = vpack.c.bf16 %v2056, %v2055
      %v2080 = vpack.c.bf16 %v2058, %v2057
      %v2081 = vpack.c.bf16 %v2060, %v2059
      %v2082 = vpack.c.bf16 %v2062, %v2061
      %v2083 = vpack.c.bf16 %v2064, %v2063
      %v2084 = vpack.c.bf16 %v2066, %v2065
      %v2085 = vpack.c.bf16 %v2068, %v2067
      %v2086 = vpack.c.bf16 %v2070, %v2069
      %s2087 = scalar_lea.vmem %s1, 12
      %v2088 = vld [vmem:[%s2087] sm:$0x3]
      %v2090 = vsel %vm305, %v2071, 0
      %v2093 = vsel %vm305, %v2072, 0
      %v2096 = vsel %vm305, %v2073, 0
      %v2099 = vsel %vm305, %v2074, 0
      %v2102 = vsel %vm305, %v2075, 0
      %v2105 = vsel %vm305, %v2076, 0
      %v2108 = vsel %vm305, %v2077, 0
      %v2111 = vsel %vm305, %v2078, 0
      %v2114 = vsel %vm305, %v2079, 0
      %v2117 = vsel %vm305, %v2080, 0
      %v2120 = vsel %vm305, %v2081, 0
      %v2123 = vsel %vm305, %v2082, 0
      %v2126 = vsel %vm305, %v2083, 0
      %v2129 = vsel %vm305, %v2084, 0
      %v2132 = vsel %vm305, %v2085, 0
      %v2135 = vsel %vm305, %v2086, 0
      %v2138 = vsel %vm485, %v2088, 0
      %2140 = vmatprep.subr.bf16.mxu0 0
      %2141 = vmatpush1.bf16.msra.mxu0 %v2138
      %2142 = vmatprep.subr.bf16.mxu0 0
      %2143 = vmatpush1.bf16.msra.mxu0 0
      %2144 = vmatprep.subr.bf16.mxu0 0
      %2145 = vmatpush1.bf16.msra.mxu0 0
      %2146 = vmatprep.subr.bf16.mxu0 0
      %2147 = vmatpush1.bf16.msra.mxu0 0
      %2148 = vmatprep.subr.bf16.mxu0 0
      %2149 = vmatpush1.bf16.msra.mxu0 0
      %2150 = vmatprep.subr.bf16.mxu0 0
      %2151 = vmatpush1.bf16.msra.mxu0 0
      %2152 = vmatprep.subr.bf16.mxu0 0
      %2153 = vmatpush1.bf16.msra.mxu0 0
      %2154 = vmatprep.subr.bf16.mxu0 0
      %2155 = vmatpush1.bf16.msra.mxu0 0
      %2156 = vmatprep.subr.bf16.mxu0 0
      %2157 = vmatpush1.bf16.msra.mxu0 0
      %2158 = vmatprep.subr.bf16.mxu0 0
      %2159 = vmatpush1.bf16.msra.mxu0 0
      %2160 = vmatprep.subr.bf16.mxu0 0
      %2161 = vmatpush1.bf16.msra.mxu0 0
      %2162 = vmatprep.subr.bf16.mxu0 0
      %2163 = vmatpush1.bf16.msra.mxu0 0
      %2164 = vmatprep.subr.bf16.mxu0 0
      %2165 = vmatpush1.bf16.msra.mxu0 0
      %2166 = vmatprep.subr.bf16.mxu0 0
      %2167 = vmatpush1.bf16.msra.mxu0 0
      %2168 = vmatprep.subr.bf16.mxu0 0
      %2169 = vmatpush1.bf16.msra.mxu0 0
      %2170 = vmatprep.subr.bf16.mxu0 0
      %2171 = vmatpush1.bf16.msra.mxu0 0
      %2172 = vmatprep.mubr.bf16.mxu0 0
      %2173 = vmatmul.mubr.bf16.gmra.mrb[0].mxu0 %v2090
      %v2174 = vpop.f32.mrb[0].mxu0
      %v2175 = vadd.f32 0.0, %v2174
      %v2176 = vpop.f32.mrb[0].mxu0
      %v2177 = vpop.f32.mrb[0].mxu0
      %v2178 = vadd.f32 0.0, %v2177
      %v2179 = vpop.f32.mrb[0].mxu0
      %2180 = vmatprep.mubr.bf16.mxu0 0
      %2181 = vmatmul.mubr.bf16.gmra.mrb[0].mxu0 %v2093
      %v2182 = vpop.f32.mrb[0].mxu0
      %v2183 = vadd.f32 0.0, %v2182
      %v2184 = vpop.f32.mrb[0].mxu0
      %v2185 = vpop.f32.mrb[0].mxu0
      %v2186 = vadd.f32 0.0, %v2185
      %v2187 = vpop.f32.mrb[0].mxu0
      %2188 = vmatprep.mubr.bf16.mxu0 0
      %2189 = vmatmul.mubr.bf16.gmra.mrb[0].mxu0 %v2096
      %v2190 = vpop.f32.mrb[0].mxu0
      %v2191 = vadd.f32 0.0, %v2190
      %v2192 = vpop.f32.mrb[0].mxu0
      %v2193 = vpop.f32.mrb[0].mxu0
      %v2194 = vadd.f32 0.0, %v2193
      %v2195 = vpop.f32.mrb[0].mxu0
      %2196 = vmatprep.mubr.bf16.mxu0 0
      %2197 = vmatmul.mubr.bf16.gmra.mrb[0].mxu0 %v2099
      %v2198 = vpop.f32.mrb[0].mxu0
      %v2199 = vadd.f32 0.0, %v2198
      %v2200 = vpop.f32.mrb[0].mxu0
      %v2201 = vpop.f32.mrb[0].mxu0
      %v2202 = vadd.f32 0.0, %v2201
      %v2203 = vpop.f32.mrb[0].mxu0
      %2204 = vmatprep.mubr.bf16.mxu0 0
      %2205 = vmatmul.mubr.bf16.gmra.mrb[0].mxu0 %v2102
      %v2206 = vpop.f32.mrb[0].mxu0
      %v2207 = vadd.f32 0.0, %v2206
      %v2208 = vpop.f32.mrb[0].mxu0
      %v2209 = vpop.f32.mrb[0].mxu0
      %v2210 = vadd.f32 0.0, %v2209
      %v2211 = vpop.f32.mrb[0].mxu0
      %2212 = vmatprep.mubr.bf16.mxu0 0
      %2213 = vmatmul.mubr.bf16.gmra.mrb[0].mxu0 %v2105
      %v2214 = vpop.f32.mrb[0].mxu0
      %v2215 = vadd.f32 0.0, %v2214
      %v2216 = vpop.f32.mrb[0].mxu0
      %v2217 = vpop.f32.mrb[0].mxu0
      %v2218 = vadd.f32 0.0, %v2217
      %v2219 = vpop.f32.mrb[0].mxu0
      %2220 = vmatprep.mubr.bf16.mxu0 0
      %2221 = vmatmul.mubr.bf16.gmra.mrb[0].mxu0 %v2108
      %v2222 = vpop.f32.mrb[0].mxu0
      %v2223 = vadd.f32 0.0, %v2222
      %v2224 = vpop.f32.mrb[0].mxu0
      %v2225 = vpop.f32.mrb[0].mxu0
      %v2226 = vadd.f32 0.0, %v2225
      %v2227 = vpop.f32.mrb[0].mxu0
      %2228 = vmatprep.mubr.bf16.mxu0 0
      %2229 = vmatmul.mubr.bf16.gmra.mrb[0].mxu0 %v2111
      %v2230 = vpop.f32.mrb[0].mxu0
      %v2231 = vadd.f32 0.0, %v2230
      %v2232 = vpop.f32.mrb[0].mxu0
      %v2233 = vpop.f32.mrb[0].mxu0
      %v2234 = vadd.f32 0.0, %v2233
      %v2235 = vpop.f32.mrb[0].mxu0
      %2236 = vmatprep.mubr.bf16.mxu0 0
      %2237 = vmatmul.mubr.bf16.gmra.mrb[0].mxu0 %v2114
      %v2238 = vpop.f32.mrb[0].mxu0
      %v2239 = vadd.f32 0.0, %v2238
      %v2240 = vpop.f32.mrb[0].mxu0
      %v2241 = vpop.f32.mrb[0].mxu0
      %v2242 = vadd.f32 0.0, %v2241
      %v2243 = vpop.f32.mrb[0].mxu0
      %2244 = vmatprep.mubr.bf16.mxu0 0
      %2245 = vmatmul.mubr.bf16.gmra.mrb[0].mxu0 %v2117
      %v2246 = vpop.f32.mrb[0].mxu0
      %v2247 = vadd.f32 0.0, %v2246
      %v2248 = vpop.f32.mrb[0].mxu0
      %v2249 = vpop.f32.mrb[0].mxu0
      %v2250 = vadd.f32 0.0, %v2249
      %v2251 = vpop.f32.mrb[0].mxu0
      %2252 = vmatprep.mubr.bf16.mxu0 0
      %2253 = vmatmul.mubr.bf16.gmra.mrb[0].mxu0 %v2120
      %v2254 = vpop.f32.mrb[0].mxu0
      %v2255 = vadd.f32 0.0, %v2254
      %v2256 = vpop.f32.mrb[0].mxu0
      %v2257 = vpop.f32.mrb[0].mxu0
      %v2258 = vadd.f32 0.0, %v2257
      %v2259 = vpop.f32.mrb[0].mxu0
      %2260 = vmatprep.mubr.bf16.mxu0 0
      %2261 = vmatmul.mubr.bf16.gmra.mrb[0].mxu0 %v2123
      %v2262 = vpop.f32.mrb[0].mxu0
      %v2263 = vadd.f32 0.0, %v2262
      %v2264 = vpop.f32.mrb[0].mxu0
      %v2265 = vpop.f32.mrb[0].mxu0
      %v2266 = vadd.f32 0.0, %v2265
      %v2267 = vpop.f32.mrb[0].mxu0
      %2268 = vmatprep.mubr.bf16.mxu0 0
      %2269 = vmatmul.mubr.bf16.gmra.mrb[0].mxu0 %v2126
      %v2270 = vpop.f32.mrb[0].mxu0
      %v2271 = vadd.f32 0.0, %v2270
      %v2272 = vpop.f32.mrb[0].mxu0
      %v2273 = vpop.f32.mrb[0].mxu0
      %v2274 = vadd.f32 0.0, %v2273
      %v2275 = vpop.f32.mrb[0].mxu0
      %2276 = vmatprep.mubr.bf16.mxu0 0
      %2277 = vmatmul.mubr.bf16.gmra.mrb[0].mxu0 %v2129
      %v2278 = vpop.f32.mrb[0].mxu0
      %v2279 = vadd.f32 0.0, %v2278
      %v2280 = vpop.f32.mrb[0].mxu0
      %v2281 = vpop.f32.mrb[0].mxu0
      %v2282 = vadd.f32 0.0, %v2281
      %v2283 = vpop.f32.mrb[0].mxu0
      %2284 = vmatprep.mubr.bf16.mxu0 0
      %2285 = vmatmul.mubr.bf16.gmra.mrb[0].mxu0 %v2132
      %v2286 = vpop.f32.mrb[0].mxu0
      %v2287 = vadd.f32 0.0, %v2286
      %v2288 = vpop.f32.mrb[0].mxu0
      %v2289 = vpop.f32.mrb[0].mxu0
      %v2290 = vadd.f32 0.0, %v2289
      %v2291 = vpop.f32.mrb[0].mxu0
      %2292 = vmatprep.mubr.bf16.mxu0 0
      %2293 = vmatmul.mubr.bf16.gmra.mrb[0].mxu0 %v2135
      %v2294 = vpop.f32.mrb[0].mxu0
      %v2295 = vadd.f32 0.0, %v2294
      %v2296 = vpop.f32.mrb[0].mxu0
      %v2297 = vpop.f32.mrb[0].mxu0
      %v2298 = vadd.f32 0.0, %v2297
      %v2299 = vpop.f32.mrb[0].mxu0
      %2300 = vdwg.mxu0
      %v2301 = vadd.f32 %v2006, %v2175
      %v2302 = vadd.f32 %v2007, %v2178
      %v2303 = vadd.f32 %v2008, %v2183
      %v2304 = vadd.f32 %v2009, %v2186
      %v2305 = vadd.f32 %v2010, %v2191
      %v2306 = vadd.f32 %v2011, %v2194
      %v2307 = vadd.f32 %v2012, %v2199
      %v2308 = vadd.f32 %v2013, %v2202
      %v2309 = vadd.f32 %v2014, %v2207
      %v2310 = vadd.f32 %v2015, %v2210
      %v2311 = vadd.f32 %v2016, %v2215
      %v2312 = vadd.f32 %v2017, %v2218
      %v2313 = vadd.f32 %v2018, %v2223
      %v2314 = vadd.f32 %v2019, %v2226
      %v2315 = vadd.f32 %v2020, %v2231
      %v2316 = vadd.f32 %v2021, %v2234
      %v2317 = vadd.f32 %v2022, %v2239
      %v2318 = vadd.f32 %v2023, %v2242
      %v2319 = vadd.f32 %v2024, %v2247
      %v2320 = vadd.f32 %v2025, %v2250
      %v2321 = vadd.f32 %v2026, %v2255
      %v2322 = vadd.f32 %v2027, %v2258
      %v2323 = vadd.f32 %v2028, %v2263
      %v2324 = vadd.f32 %v2029, %v2266
      %v2325 = vadd.f32 %v2030, %v2271
      %v2326 = vadd.f32 %v2031, %v2274
      %v2327 = vadd.f32 %v2032, %v2279
      %v2328 = vadd.f32 %v2033, %v2282
      %v2329 = vadd.f32 %v2034, %v2287
      %v2330 = vadd.f32 %v2035, %v2290
      %v2331 = vadd.f32 %v2036, %v2295
      %v2332 = vadd.f32 %v2037, %v2298
      %v2333 = vld [vmem:[%s2038 + $0x1] sm:$0xff]
      %v2334 = vld [vmem:[%s2038 + $0x9] sm:$0xff]
      %v2335 = vld [vmem:[%s2038 + $0x19] sm:$0xff]
      %v2336 = vld [vmem:[%s2038 + $0x21] sm:$0xff]
      %v2337 = vld [vmem:[%s2038 + $0x31] sm:$0xff]
      %v2338 = vld [vmem:[%s2038 + $0x39] sm:$0xff]
      %v2339 = vld [vmem:[%s2038 + $0x49] sm:$0xff]
      %v2340 = vld [vmem:[%s2038 + $0x51] sm:$0xff]
      %v2341 = vld [vmem:[%s2038 + $0x61] sm:$0xff]
      %v2342 = vld [vmem:[%s2038 + $0x69] sm:$0xff]
      %v2343 = vld [vmem:[%s2038 + $0x79] sm:$0xff]
      %v2344 = vld [vmem:[%s2038 + $0x81] sm:$0xff]
      %v2345 = vld [vmem:[%s2038 + $0x91] sm:$0xff]
      %v2346 = vld [vmem:[%s2038 + $0x99] sm:$0xff]
      %v2347 = vld [vmem:[%s2038 + $0xa9] sm:$0xff]
      %v2348 = vld [vmem:[%s2038 + $0xb1] sm:$0xff]
      %v2349 = vld [vmem:[%s2038 + $0xc1] sm:$0xff]
      %v2350 = vld [vmem:[%s2038 + $0xc9] sm:$0xff]
      %v2351 = vld [vmem:[%s2038 + $0xd9] sm:$0xff]
      %v2352 = vld [vmem:[%s2038 + $0xe1] sm:$0xff]
      %v2353 = vld [vmem:[%s2038 + $0xf1] sm:$0xff]
      %v2354 = vld [vmem:[%s2038 + $0xf9] sm:$0xff]
      %v2355 = vld [vmem:[%s2038 + $0x109] sm:$0xff]
      %v2356 = vld [vmem:[%s2038 + $0x111] sm:$0xff]
      %v2357 = vld [vmem:[%s2038 + $0x121] sm:$0xff]
      %v2358 = vld [vmem:[%s2038 + $0x129] sm:$0xff]
      %v2359 = vld [vmem:[%s2038 + $0x139] sm:$0xff]
      %v2360 = vld [vmem:[%s2038 + $0x141] sm:$0xff]
      %v2361 = vld [vmem:[%s2038 + $0x151] sm:$0xff]
      %v2362 = vld [vmem:[%s2038 + $0x159] sm:$0xff]
      %v2363 = vld [vmem:[%s2038 + $0x169] sm:$0xff]
      %v2364 = vld [vmem:[%s2038 + $0x171] sm:$0xff]
      %v2365 = vpack.c.bf16 %v2334, %v2333
      %v2366 = vpack.c.bf16 %v2336, %v2335
      %v2367 = vpack.c.bf16 %v2338, %v2337
      %v2368 = vpack.c.bf16 %v2340, %v2339
      %v2369 = vpack.c.bf16 %v2342, %v2341
      %v2370 = vpack.c.bf16 %v2344, %v2343
      %v2371 = vpack.c.bf16 %v2346, %v2345
      %v2372 = vpack.c.bf16 %v2348, %v2347
      %v2373 = vpack.c.bf16 %v2350, %v2349
      %v2374 = vpack.c.bf16 %v2352, %v2351
      %v2375 = vpack.c.bf16 %v2354, %v2353
      %v2376 = vpack.c.bf16 %v2356, %v2355
      %v2377 = vpack.c.bf16 %v2358, %v2357
      %v2378 = vpack.c.bf16 %v2360, %v2359
      %v2379 = vpack.c.bf16 %v2362, %v2361
      %v2380 = vpack.c.bf16 %v2364, %v2363
      %s2381 = scalar_lea.vmem %s1, 14
      %v2382 = vld [vmem:[%s2381] sm:$0x3]
      %v2384 = vsel %vm305, %v2365, 0
      %v2387 = vsel %vm305, %v2366, 0
      %v2390 = vsel %vm305, %v2367, 0
      %v2393 = vsel %vm305, %v2368, 0
      %v2396 = vsel %vm305, %v2369, 0
      %v2399 = vsel %vm305, %v2370, 0
      %v2402 = vsel %vm305, %v2371, 0
      %v2405 = vsel %vm305, %v2372, 0
      %v2408 = vsel %vm305, %v2373, 0
      %v2411 = vsel %vm305, %v2374, 0
      %v2414 = vsel %vm305, %v2375, 0
      %v2417 = vsel %vm305, %v2376, 0
      %v2420 = vsel %vm305, %v2377, 0
      %v2423 = vsel %vm305, %v2378, 0
      %v2426 = vsel %vm305, %v2379, 0
      %v2429 = vsel %vm305, %v2380, 0
      %v2432 = vsel %vm485, %v2382, 0
      %2434 = vmatprep.subr.bf16.mxu0 0
      %2435 = vmatpush1.bf16.msra.mxu0 %v2432
      %2436 = vmatprep.subr.bf16.mxu0 0
      %2437 = vmatpush1.bf16.msra.mxu0 0
      %2438 = vmatprep.subr.bf16.mxu0 0
      %2439 = vmatpush1.bf16.msra.mxu0 0
      %2440 = vmatprep.subr.bf16.mxu0 0
      %2441 = vmatpush1.bf16.msra.mxu0 0
      %2442 = vmatprep.subr.bf16.mxu0 0
      %2443 = vmatpush1.bf16.msra.mxu0 0
      %2444 = vmatprep.subr.bf16.mxu0 0
      %2445 = vmatpush1.bf16.msra.mxu0 0
      %2446 = vmatprep.subr.bf16.mxu0 0
      %2447 = vmatpush1.bf16.msra.mxu0 0
      %2448 = vmatprep.subr.bf16.mxu0 0
      %2449 = vmatpush1.bf16.msra.mxu0 0
      %2450 = vmatprep.subr.bf16.mxu0 0
      %2451 = vmatpush1.bf16.msra.mxu0 0
      %2452 = vmatprep.subr.bf16.mxu0 0
      %2453 = vmatpush1.bf16.msra.mxu0 0
      %2454 = vmatprep.subr.bf16.mxu0 0
      %2455 = vmatpush1.bf16.msra.mxu0 0
      %2456 = vmatprep.subr.bf16.mxu0 0
      %2457 = vmatpush1.bf16.msra.mxu0 0
      %2458 = vmatprep.subr.bf16.mxu0 0
      %2459 = vmatpush1.bf16.msra.mxu0 0
      %2460 = vmatprep.subr.bf16.mxu0 0
      %2461 = vmatpush1.bf16.msra.mxu0 0
      %2462 = vmatprep.subr.bf16.mxu0 0
      %2463 = vmatpush1.bf16.msra.mxu0 0
      %2464 = vmatprep.subr.bf16.mxu0 0
      %2465 = vmatpush1.bf16.msra.mxu0 0
      %2466 = vmatprep.mubr.bf16.mxu0 0
      %2467 = vmatmul.mubr.bf16.gmra.mrb[0].mxu0 %v2384
      %v2468 = vpop.f32.mrb[0].mxu0
      %v2469 = vadd.f32 0.0, %v2468
      %v2470 = vpop.f32.mrb[0].mxu0
      %v2471 = vpop.f32.mrb[0].mxu0
      %v2472 = vadd.f32 0.0, %v2471
      %v2473 = vpop.f32.mrb[0].mxu0
      %2474 = vmatprep.mubr.bf16.mxu0 0
      %2475 = vmatmul.mubr.bf16.gmra.mrb[0].mxu0 %v2387
      %v2476 = vpop.f32.mrb[0].mxu0
      %v2477 = vadd.f32 0.0, %v2476
      %v2478 = vpop.f32.mrb[0].mxu0
      %v2479 = vpop.f32.mrb[0].mxu0
      %v2480 = vadd.f32 0.0, %v2479
      %v2481 = vpop.f32.mrb[0].mxu0
      %2482 = vmatprep.mubr.bf16.mxu0 0
      %2483 = vmatmul.mubr.bf16.gmra.mrb[0].mxu0 %v2390
      %v2484 = vpop.f32.mrb[0].mxu0
      %v2485 = vadd.f32 0.0, %v2484
      %v2486 = vpop.f32.mrb[0].mxu0
      %v2487 = vpop.f32.mrb[0].mxu0
      %v2488 = vadd.f32 0.0, %v2487
      %v2489 = vpop.f32.mrb[0].mxu0
      %2490 = vmatprep.mubr.bf16.mxu0 0
      %2491 = vmatmul.mubr.bf16.gmra.mrb[0].mxu0 %v2393
      %v2492 = vpop.f32.mrb[0].mxu0
      %v2493 = vadd.f32 0.0, %v2492
      %v2494 = vpop.f32.mrb[0].mxu0
      %v2495 = vpop.f32.mrb[0].mxu0
      %v2496 = vadd.f32 0.0, %v2495
      %v2497 = vpop.f32.mrb[0].mxu0
      %2498 = vmatprep.mubr.bf16.mxu0 0
      %2499 = vmatmul.mubr.bf16.gmra.mrb[0].mxu0 %v2396
      %v2500 = vpop.f32.mrb[0].mxu0
      %v2501 = vadd.f32 0.0, %v2500
      %v2502 = vpop.f32.mrb[0].mxu0
      %v2503 = vpop.f32.mrb[0].mxu0
      %v2504 = vadd.f32 0.0, %v2503
      %v2505 = vpop.f32.mrb[0].mxu0
      %2506 = vmatprep.mubr.bf16.mxu0 0
      %2507 = vmatmul.mubr.bf16.gmra.mrb[0].mxu0 %v2399
      %v2508 = vpop.f32.mrb[0].mxu0
      %v2509 = vadd.f32 0.0, %v2508
      %v2510 = vpop.f32.mrb[0].mxu0
      %v2511 = vpop.f32.mrb[0].mxu0
      %v2512 = vadd.f32 0.0, %v2511
      %v2513 = vpop.f32.mrb[0].mxu0
      %2514 = vmatprep.mubr.bf16.mxu0 0
      %2515 = vmatmul.mubr.bf16.gmra.mrb[0].mxu0 %v2402
      %v2516 = vpop.f32.mrb[0].mxu0
      %v2517 = vadd.f32 0.0, %v2516
      %v2518 = vpop.f32.mrb[0].mxu0
      %v2519 = vpop.f32.mrb[0].mxu0
      %v2520 = vadd.f32 0.0, %v2519
      %v2521 = vpop.f32.mrb[0].mxu0
      %2522 = vmatprep.mubr.bf16.mxu0 0
      %2523 = vmatmul.mubr.bf16.gmra.mrb[0].mxu0 %v2405
      %v2524 = vpop.f32.mrb[0].mxu0
      %v2525 = vadd.f32 0.0, %v2524
      %v2526 = vpop.f32.mrb[0].mxu0
      %v2527 = vpop.f32.mrb[0].mxu0
      %v2528 = vadd.f32 0.0, %v2527
      %v2529 = vpop.f32.mrb[0].mxu0
      %2530 = vmatprep.mubr.bf16.mxu0 0
      %2531 = vmatmul.mubr.bf16.gmra.mrb[0].mxu0 %v2408
      %v2532 = vpop.f32.mrb[0].mxu0
      %v2533 = vadd.f32 0.0, %v2532
      %v2534 = vpop.f32.mrb[0].mxu0
      %v2535 = vpop.f32.mrb[0].mxu0
      %v2536 = vadd.f32 0.0, %v2535
      %v2537 = vpop.f32.mrb[0].mxu0
      %2538 = vmatprep.mubr.bf16.mxu0 0
      %2539 = vmatmul.mubr.bf16.gmra.mrb[0].mxu0 %v2411
      %v2540 = vpop.f32.mrb[0].mxu0
      %v2541 = vadd.f32 0.0, %v2540
      %v2542 = vpop.f32.mrb[0].mxu0
      %v2543 = vpop.f32.mrb[0].mxu0
      %v2544 = vadd.f32 0.0, %v2543
      %v2545 = vpop.f32.mrb[0].mxu0
      %2546 = vmatprep.mubr.bf16.mxu0 0
      %2547 = vmatmul.mubr.bf16.gmra.mrb[0].mxu0 %v2414
      %v2548 = vpop.f32.mrb[0].mxu0
      %v2549 = vadd.f32 0.0, %v2548
      %v2550 = vpop.f32.mrb[0].mxu0
      %v2551 = vpop.f32.mrb[0].mxu0
      %v2552 = vadd.f32 0.0, %v2551
      %v2553 = vpop.f32.mrb[0].mxu0
      %2554 = vmatprep.mubr.bf16.mxu0 0
      %2555 = vmatmul.mubr.bf16.gmra.mrb[0].mxu0 %v2417
      %v2556 = vpop.f32.mrb[0].mxu0
      %v2557 = vadd.f32 0.0, %v2556
      %v2558 = vpop.f32.mrb[0].mxu0
      %v2559 = vpop.f32.mrb[0].mxu0
      %v2560 = vadd.f32 0.0, %v2559
      %v2561 = vpop.f32.mrb[0].mxu0
      %2562 = vmatprep.mubr.bf16.mxu0 0
      %2563 = vmatmul.mubr.bf16.gmra.mrb[0].mxu0 %v2420
      %v2564 = vpop.f32.mrb[0].mxu0
      %v2565 = vadd.f32 0.0, %v2564
      %v2566 = vpop.f32.mrb[0].mxu0
      %v2567 = vpop.f32.mrb[0].mxu0
      %v2568 = vadd.f32 0.0, %v2567
      %v2569 = vpop.f32.mrb[0].mxu0
      %2570 = vmatprep.mubr.bf16.mxu0 0
      %2571 = vmatmul.mubr.bf16.gmra.mrb[0].mxu0 %v2423
      %v2572 = vpop.f32.mrb[0].mxu0
      %v2573 = vadd.f32 0.0, %v2572
      %v2574 = vpop.f32.mrb[0].mxu0
      %v2575 = vpop.f32.mrb[0].mxu0
      %v2576 = vadd.f32 0.0, %v2575
      %v2577 = vpop.f32.mrb[0].mxu0
      %2578 = vmatprep.mubr.bf16.mxu0 0
      %2579 = vmatmul.mubr.bf16.gmra.mrb[0].mxu0 %v2426
      %v2580 = vpop.f32.mrb[0].mxu0
      %v2581 = vadd.f32 0.0, %v2580
      %v2582 = vpop.f32.mrb[0].mxu0
      %v2583 = vpop.f32.mrb[0].mxu0
      %v2584 = vadd.f32 0.0, %v2583
      %v2585 = vpop.f32.mrb[0].mxu0
      %2586 = vmatprep.mubr.bf16.mxu0 0
      %2587 = vmatmul.mubr.bf16.gmra.mrb[0].mxu0 %v2429
      %v2588 = vpop.f32.mrb[0].mxu0
      %v2589 = vadd.f32 0.0, %v2588
      %v2590 = vpop.f32.mrb[0].mxu0
      %v2591 = vpop.f32.mrb[0].mxu0
      %v2592 = vadd.f32 0.0, %v2591
      %v2593 = vpop.f32.mrb[0].mxu0
      %2594 = vdwg.mxu0
      %v2595 = vadd.f32 %v2301, %v2469
      %v2596 = vadd.f32 %v2302, %v2472
      %v2597 = vadd.f32 %v2303, %v2477
      %v2598 = vadd.f32 %v2304, %v2480
      %v2599 = vadd.f32 %v2305, %v2485
      %v2600 = vadd.f32 %v2306, %v2488
      %v2601 = vadd.f32 %v2307, %v2493
      %v2602 = vadd.f32 %v2308, %v2496
      %v2603 = vadd.f32 %v2309, %v2501
      %v2604 = vadd.f32 %v2310, %v2504
      %v2605 = vadd.f32 %v2311, %v2509
      %v2606 = vadd.f32 %v2312, %v2512
      %v2607 = vadd.f32 %v2313, %v2517
      %v2608 = vadd.f32 %v2314, %v2520
      %v2609 = vadd.f32 %v2315, %v2525
      %v2610 = vadd.f32 %v2316, %v2528
      %v2611 = vadd.f32 %v2317, %v2533
      %v2612 = vadd.f32 %v2318, %v2536
      %v2613 = vadd.f32 %v2319, %v2541
      %v2614 = vadd.f32 %v2320, %v2544
      %v2615 = vadd.f32 %v2321, %v2549
      %v2616 = vadd.f32 %v2322, %v2552
      %v2617 = vadd.f32 %v2323, %v2557
      %v2618 = vadd.f32 %v2324, %v2560
      %v2619 = vadd.f32 %v2325, %v2565
      %v2620 = vadd.f32 %v2326, %v2568
      %v2621 = vadd.f32 %v2327, %v2573
      %v2622 = vadd.f32 %v2328, %v2576
      %v2623 = vadd.f32 %v2329, %v2581
      %v2624 = vadd.f32 %v2330, %v2584
      %v2625 = vadd.f32 %v2331, %v2589
      %v2626 = vadd.f32 %v2332, %v2592
      %v2627 = vld [vmem:[%s2038 + $0x2] sm:$0xff]
      %v2628 = vld [vmem:[%s2038 + $0xa] sm:$0xff]
      %v2629 = vld [vmem:[%s2038 + $0x1a] sm:$0xff]
      %v2630 = vld [vmem:[%s2038 + $0x22] sm:$0xff]
      %v2631 = vld [vmem:[%s2038 + $0x32] sm:$0xff]
      %v2632 = vld [vmem:[%s2038 + $0x3a] sm:$0xff]
      %v2633 = vld [vmem:[%s2038 + $0x4a] sm:$0xff]
      %v2634 = vld [vmem:[%s2038 + $0x52] sm:$0xff]
      %v2635 = vld [vmem:[%s2038 + $0x62] sm:$0xff]
      %v2636 = vld [vmem:[%s2038 + $0x6a] sm:$0xff]
      %v2637 = vld [vmem:[%s2038 + $0x7a] sm:$0xff]
      %v2638 = vld [vmem:[%s2038 + $0x82] sm:$0xff]
      %v2639 = vld [vmem:[%s2038 + $0x92] sm:$0xff]
      %v2640 = vld [vmem:[%s2038 + $0x9a] sm:$0xff]
      %v2641 = vld [vmem:[%s2038 + $0xaa] sm:$0xff]
      %v2642 = vld [vmem:[%s2038 + $0xb2] sm:$0xff]
      %v2643 = vld [vmem:[%s2038 + $0xc2] sm:$0xff]
      %v2644 = vld [vmem:[%s2038 + $0xca] sm:$0xff]
      %v2645 = vld [vmem:[%s2038 + $0xda] sm:$0xff]
      %v2646 = vld [vmem:[%s2038 + $0xe2] sm:$0xff]
      %v2647 = vld [vmem:[%s2038 + $0xf2] sm:$0xff]
      %v2648 = vld [vmem:[%s2038 + $0xfa] sm:$0xff]
      %v2649 = vld [vmem:[%s2038 + $0x10a] sm:$0xff]
      %v2650 = vld [vmem:[%s2038 + $0x112] sm:$0xff]
      %v2651 = vld [vmem:[%s2038 + $0x122] sm:$0xff]
      %v2652 = vld [vmem:[%s2038 + $0x12a] sm:$0xff]
      %v2653 = vld [vmem:[%s2038 + $0x13a] sm:$0xff]
      %v2654 = vld [vmem:[%s2038 + $0x142] sm:$0xff]
      %v2655 = vld [vmem:[%s2038 + $0x152] sm:$0xff]
      %v2656 = vld [vmem:[%s2038 + $0x15a] sm:$0xff]
      %v2657 = vld [vmem:[%s2038 + $0x16a] sm:$0xff]
      %v2658 = vld [vmem:[%s2038 + $0x172] sm:$0xff]
      %v2659 = vpack.c.bf16 %v2628, %v2627
      %v2660 = vpack.c.bf16 %v2630, %v2629
      %v2661 = vpack.c.bf16 %v2632, %v2631
      %v2662 = vpack.c.bf16 %v2634, %v2633
      %v2663 = vpack.c.bf16 %v2636, %v2635
      %v2664 = vpack.c.bf16 %v2638, %v2637
      %v2665 = vpack.c.bf16 %v2640, %v2639
      %v2666 = vpack.c.bf16 %v2642, %v2641
      %v2667 = vpack.c.bf16 %v2644, %v2643
      %v2668 = vpack.c.bf16 %v2646, %v2645
      %v2669 = vpack.c.bf16 %v2648, %v2647
      %v2670 = vpack.c.bf16 %v2650, %v2649
      %v2671 = vpack.c.bf16 %v2652, %v2651
      %v2672 = vpack.c.bf16 %v2654, %v2653
      %v2673 = vpack.c.bf16 %v2656, %v2655
      %v2674 = vpack.c.bf16 %v2658, %v2657
      %s2675 = scalar_lea.vmem %s1, 16
      %v2676 = vld [vmem:[%s2675] sm:$0x3]
      %v2678 = vsel %vm305, %v2659, 0
      %v2681 = vsel %vm305, %v2660, 0
      %v2684 = vsel %vm305, %v2661, 0
      %v2687 = vsel %vm305, %v2662, 0
      %v2690 = vsel %vm305, %v2663, 0
      %v2693 = vsel %vm305, %v2664, 0
      %v2696 = vsel %vm305, %v2665, 0
      %v2699 = vsel %vm305, %v2666, 0
      %v2702 = vsel %vm305, %v2667, 0
      %v2705 = vsel %vm305, %v2668, 0
      %v2708 = vsel %vm305, %v2669, 0
      %v2711 = vsel %vm305, %v2670, 0
      %v2714 = vsel %vm305, %v2671, 0
      %v2717 = vsel %vm305, %v2672, 0
      %v2720 = vsel %vm305, %v2673, 0
      %v2723 = vsel %vm305, %v2674, 0
      %v2726 = vsel %vm485, %v2676, 0
      %2728 = vmatprep.subr.bf16.mxu0 0
      %2729 = vmatpush1.bf16.msra.mxu0 %v2726
      %2730 = vmatprep.subr.bf16.mxu0 0
      %2731 = vmatpush1.bf16.msra.mxu0 0
      %2732 = vmatprep.subr.bf16.mxu0 0
      %2733 = vmatpush1.bf16.msra.mxu0 0
      %2734 = vmatprep.subr.bf16.mxu0 0
      %2735 = vmatpush1.bf16.msra.mxu0 0
      %2736 = vmatprep.subr.bf16.mxu0 0
      %2737 = vmatpush1.bf16.msra.mxu0 0
      %2738 = vmatprep.subr.bf16.mxu0 0
      %2739 = vmatpush1.bf16.msra.mxu0 0
      %2740 = vmatprep.subr.bf16.mxu0 0
      %2741 = vmatpush1.bf16.msra.mxu0 0
      %2742 = vmatprep.subr.bf16.mxu0 0
      %2743 = vmatpush1.bf16.msra.mxu0 0
      %2744 = vmatprep.subr.bf16.mxu0 0
      %2745 = vmatpush1.bf16.msra.mxu0 0
      %2746 = vmatprep.subr.bf16.mxu0 0
      %2747 = vmatpush1.bf16.msra.mxu0 0
      %2748 = vmatprep.subr.bf16.mxu0 0
      %2749 = vmatpush1.bf16.msra.mxu0 0
      %2750 = vmatprep.subr.bf16.mxu0 0
      %2751 = vmatpush1.bf16.msra.mxu0 0
      %2752 = vmatprep.subr.bf16.mxu0 0
      %2753 = vmatpush1.bf16.msra.mxu0 0
      %2754 = vmatprep.subr.bf16.mxu0 0
      %2755 = vmatpush1.bf16.msra.mxu0 0
      %2756 = vmatprep.subr.bf16.mxu0 0
      %2757 = vmatpush1.bf16.msra.mxu0 0
      %2758 = vmatprep.subr.bf16.mxu0 0
      %2759 = vmatpush1.bf16.msra.mxu0 0
      %2760 = vmatprep.mubr.bf16.mxu0 0
      %2761 = vmatmul.mubr.bf16.gmra.mrb[0].mxu0 %v2678
      %v2762 = vpop.f32.mrb[0].mxu0
      %v2763 = vadd.f32 0.0, %v2762
      %v2764 = vpop.f32.mrb[0].mxu0
      %v2765 = vpop.f32.mrb[0].mxu0
      %v2766 = vadd.f32 0.0, %v2765
      %v2767 = vpop.f32.mrb[0].mxu0
      %2768 = vmatprep.mubr.bf16.mxu0 0
      %2769 = vmatmul.mubr.bf16.gmra.mrb[0].mxu0 %v2681
      %v2770 = vpop.f32.mrb[0].mxu0
      %v2771 = vadd.f32 0.0, %v2770
      %v2772 = vpop.f32.mrb[0].mxu0
      %v2773 = vpop.f32.mrb[0].mxu0
      %v2774 = vadd.f32 0.0, %v2773
      %v2775 = vpop.f32.mrb[0].mxu0
      %2776 = vmatprep.mubr.bf16.mxu0 0
      %2777 = vmatmul.mubr.bf16.gmra.mrb[0].mxu0 %v2684
      %v2778 = vpop.f32.mrb[0].mxu0
      %v2779 = vadd.f32 0.0, %v2778
      %v2780 = vpop.f32.mrb[0].mxu0
      %v2781 = vpop.f32.mrb[0].mxu0
      %v2782 = vadd.f32 0.0, %v2781
      %v2783 = vpop.f32.mrb[0].mxu0
      %2784 = vmatprep.mubr.bf16.mxu0 0
      %2785 = vmatmul.mubr.bf16.gmra.mrb[0].mxu0 %v2687
      %v2786 = vpop.f32.mrb[0].mxu0
      %v2787 = vadd.f32 0.0, %v2786
      %v2788 = vpop.f32.mrb[0].mxu0
      %v2789 = vpop.f32.mrb[0].mxu0
      %v2790 = vadd.f32 0.0, %v2789
      %v2791 = vpop.f32.mrb[0].mxu0
      %2792 = vmatprep.mubr.bf16.mxu0 0
      %2793 = vmatmul.mubr.bf16.gmra.mrb[0].mxu0 %v2690
      %v2794 = vpop.f32.mrb[0].mxu0
      %v2795 = vadd.f32 0.0, %v2794
      %v2796 = vpop.f32.mrb[0].mxu0
      %v2797 = vpop.f32.mrb[0].mxu0
      %v2798 = vadd.f32 0.0, %v2797
      %v2799 = vpop.f32.mrb[0].mxu0
      %2800 = vmatprep.mubr.bf16.mxu0 0
      %2801 = vmatmul.mubr.bf16.gmra.mrb[0].mxu0 %v2693
      %v2802 = vpop.f32.mrb[0].mxu0
      %v2803 = vadd.f32 0.0, %v2802
      %v2804 = vpop.f32.mrb[0].mxu0
      %v2805 = vpop.f32.mrb[0].mxu0
      %v2806 = vadd.f32 0.0, %v2805
      %v2807 = vpop.f32.mrb[0].mxu0
      %2808 = vmatprep.mubr.bf16.mxu0 0
      %2809 = vmatmul.mubr.bf16.gmra.mrb[0].mxu0 %v2696
      %v2810 = vpop.f32.mrb[0].mxu0
      %v2811 = vadd.f32 0.0, %v2810
      %v2812 = vpop.f32.mrb[0].mxu0
      %v2813 = vpop.f32.mrb[0].mxu0
      %v2814 = vadd.f32 0.0, %v2813
      %v2815 = vpop.f32.mrb[0].mxu0
      %2816 = vmatprep.mubr.bf16.mxu0 0
      %2817 = vmatmul.mubr.bf16.gmra.mrb[0].mxu0 %v2699
      %v2818 = vpop.f32.mrb[0].mxu0
      %v2819 = vadd.f32 0.0, %v2818
      %v2820 = vpop.f32.mrb[0].mxu0
      %v2821 = vpop.f32.mrb[0].mxu0
      %v2822 = vadd.f32 0.0, %v2821
      %v2823 = vpop.f32.mrb[0].mxu0
      %2824 = vmatprep.mubr.bf16.mxu0 0
      %2825 = vmatmul.mubr.bf16.gmra.mrb[0].mxu0 %v2702
      %v2826 = vpop.f32.mrb[0].mxu0
      %v2827 = vadd.f32 0.0, %v2826
      %v2828 = vpop.f32.mrb[0].mxu0
      %v2829 = vpop.f32.mrb[0].mxu0
      %v2830 = vadd.f32 0.0, %v2829
      %v2831 = vpop.f32.mrb[0].mxu0
      %2832 = vmatprep.mubr.bf16.mxu0 0
      %2833 = vmatmul.mubr.bf16.gmra.mrb[0].mxu0 %v2705
      %v2834 = vpop.f32.mrb[0].mxu0
      %v2835 = vadd.f32 0.0, %v2834
      %v2836 = vpop.f32.mrb[0].mxu0
      %v2837 = vpop.f32.mrb[0].mxu0
      %v2838 = vadd.f32 0.0, %v2837
      %v2839 = vpop.f32.mrb[0].mxu0
      %2840 = vmatprep.mubr.bf16.mxu0 0
      %2841 = vmatmul.mubr.bf16.gmra.mrb[0].mxu0 %v2708
      %v2842 = vpop.f32.mrb[0].mxu0
      %v2843 = vadd.f32 0.0, %v2842
      %v2844 = vpop.f32.mrb[0].mxu0
      %v2845 = vpop.f32.mrb[0].mxu0
      %v2846 = vadd.f32 0.0, %v2845
      %v2847 = vpop.f32.mrb[0].mxu0
      %2848 = vmatprep.mubr.bf16.mxu0 0
      %2849 = vmatmul.mubr.bf16.gmra.mrb[0].mxu0 %v2711
      %v2850 = vpop.f32.mrb[0].mxu0
      %v2851 = vadd.f32 0.0, %v2850
      %v2852 = vpop.f32.mrb[0].mxu0
      %v2853 = vpop.f32.mrb[0].mxu0
      %v2854 = vadd.f32 0.0, %v2853
      %v2855 = vpop.f32.mrb[0].mxu0
      %2856 = vmatprep.mubr.bf16.mxu0 0
      %2857 = vmatmul.mubr.bf16.gmra.mrb[0].mxu0 %v2714
      %v2858 = vpop.f32.mrb[0].mxu0
      %v2859 = vadd.f32 0.0, %v2858
      %v2860 = vpop.f32.mrb[0].mxu0
      %v2861 = vpop.f32.mrb[0].mxu0
      %v2862 = vadd.f32 0.0, %v2861
      %v2863 = vpop.f32.mrb[0].mxu0
      %2864 = vmatprep.mubr.bf16.mxu0 0
      %2865 = vmatmul.mubr.bf16.gmra.mrb[0].mxu0 %v2717
      %v2866 = vpop.f32.mrb[0].mxu0
      %v2867 = vadd.f32 0.0, %v2866
      %v2868 = vpop.f32.mrb[0].mxu0
      %v2869 = vpop.f32.mrb[0].mxu0
      %v2870 = vadd.f32 0.0, %v2869
      %v2871 = vpop.f32.mrb[0].mxu0
      %2872 = vmatprep.mubr.bf16.mxu0 0
      %2873 = vmatmul.mubr.bf16.gmra.mrb[0].mxu0 %v2720
      %v2874 = vpop.f32.mrb[0].mxu0
      %v2875 = vadd.f32 0.0, %v2874
      %v2876 = vpop.f32.mrb[0].mxu0
      %v2877 = vpop.f32.mrb[0].mxu0
      %v2878 = vadd.f32 0.0, %v2877
      %v2879 = vpop.f32.mrb[0].mxu0
      %2880 = vmatprep.mubr.bf16.mxu0 0
      %2881 = vmatmul.mubr.bf16.gmra.mrb[0].mxu0 %v2723
      %v2882 = vpop.f32.mrb[0].mxu0
      %v2883 = vadd.f32 0.0, %v2882
      %v2884 = vpop.f32.mrb[0].mxu0
      %v2885 = vpop.f32.mrb[0].mxu0
      %v2886 = vadd.f32 0.0, %v2885
      %v2887 = vpop.f32.mrb[0].mxu0
      %2888 = vdwg.mxu0
      %v2889 = vadd.f32 %v2595, %v2763
      %v2890 = vadd.f32 %v2596, %v2766
      %v2891 = vadd.f32 %v2597, %v2771
      %v2892 = vadd.f32 %v2598, %v2774
      %v2893 = vadd.f32 %v2599, %v2779
      %v2894 = vadd.f32 %v2600, %v2782
      %v2895 = vadd.f32 %v2601, %v2787
      %v2896 = vadd.f32 %v2602, %v2790
      %v2897 = vadd.f32 %v2603, %v2795
      %v2898 = vadd.f32 %v2604, %v2798
      %v2899 = vadd.f32 %v2605, %v2803
      %v2900 = vadd.f32 %v2606, %v2806
      %v2901 = vadd.f32 %v2607, %v2811
      %v2902 = vadd.f32 %v2608, %v2814
      %v2903 = vadd.f32 %v2609, %v2819
      %v2904 = vadd.f32 %v2610, %v2822
      %v2905 = vadd.f32 %v2611, %v2827
      %v2906 = vadd.f32 %v2612, %v2830
      %v2907 = vadd.f32 %v2613, %v2835
      %v2908 = vadd.f32 %v2614, %v2838
      %v2909 = vadd.f32 %v2615, %v2843
      %v2910 = vadd.f32 %v2616, %v2846
      %v2911 = vadd.f32 %v2617, %v2851
      %v2912 = vadd.f32 %v2618, %v2854
      %v2913 = vadd.f32 %v2619, %v2859
      %v2914 = vadd.f32 %v2620, %v2862
      %v2915 = vadd.f32 %v2621, %v2867
      %v2916 = vadd.f32 %v2622, %v2870
      %v2917 = vadd.f32 %v2623, %v2875
      %v2918 = vadd.f32 %v2624, %v2878
      %v2919 = vadd.f32 %v2625, %v2883
      %v2920 = vadd.f32 %v2626, %v2886
      %v2921 = vld [vmem:[%s2] sm:$0x1]
      %v2923 = vlaneseq
      %v2924 = vshrl.u32 %v2923, 7
      %v2925 = vsub.s32 0, %v2924
      %v2926 = vrot.slane %v2921, %v2925
      %v2928 = vadd.f32 %v2889, %v2926
      %v2929 = vadd.f32 %v2890, %v2926
      %v2930 = vadd.f32 %v2891, %v2926
      %v2931 = vadd.f32 %v2892, %v2926
      %v2932 = vadd.f32 %v2893, %v2926
      %v2933 = vadd.f32 %v2894, %v2926
      %v2934 = vadd.f32 %v2895, %v2926
      %v2935 = vadd.f32 %v2896, %v2926
      %v2936 = vadd.f32 %v2897, %v2926
      %v2937 = vadd.f32 %v2898, %v2926
      %v2938 = vadd.f32 %v2899, %v2926
      %v2939 = vadd.f32 %v2900, %v2926
      %v2940 = vadd.f32 %v2901, %v2926
      %v2941 = vadd.f32 %v2902, %v2926
      %v2942 = vadd.f32 %v2903, %v2926
      %v2943 = vadd.f32 %v2904, %v2926
      %v2944 = vadd.f32 %v2905, %v2926
      %v2945 = vadd.f32 %v2906, %v2926
      %v2946 = vadd.f32 %v2907, %v2926
      %v2947 = vadd.f32 %v2908, %v2926
      %v2948 = vadd.f32 %v2909, %v2926
      %v2949 = vadd.f32 %v2910, %v2926
      %v2950 = vadd.f32 %v2911, %v2926
      %v2951 = vadd.f32 %v2912, %v2926
      %v2952 = vadd.f32 %v2913, %v2926
      %v2953 = vadd.f32 %v2914, %v2926
      %v2954 = vadd.f32 %v2915, %v2926
      %v2955 = vadd.f32 %v2916, %v2926
      %v2956 = vadd.f32 %v2917, %v2926
      %v2957 = vadd.f32 %v2918, %v2926
      %v2958 = vadd.f32 %v2919, %v2926
      %v2959 = vadd.f32 %v2920, %v2926
      %vm2960 = vcmp.gt.f32.partialorder %v2928, 0.0
      %vm2961 = vcmp.gt.f32.partialorder %v2929, 0.0
      %vm2962 = vcmp.gt.f32.partialorder %v2930, 0.0
      %vm2963 = vcmp.gt.f32.partialorder %v2931, 0.0
      %vm2964 = vcmp.gt.f32.partialorder %v2932, 0.0
      %vm2965 = vcmp.gt.f32.partialorder %v2933, 0.0
      %vm2966 = vcmp.gt.f32.partialorder %v2934, 0.0
      %vm2967 = vcmp.gt.f32.partialorder %v2935, 0.0
      %vm2968 = vcmp.gt.f32.partialorder %v2936, 0.0
      %vm2969 = vcmp.gt.f32.partialorder %v2937, 0.0
      %vm2970 = vcmp.gt.f32.partialorder %v2938, 0.0
      %vm2971 = vcmp.gt.f32.partialorder %v2939, 0.0
      %vm2972 = vcmp.gt.f32.partialorder %v2940, 0.0
      %vm2973 = vcmp.gt.f32.partialorder %v2941, 0.0
      %vm2974 = vcmp.gt.f32.partialorder %v2942, 0.0
      %vm2975 = vcmp.gt.f32.partialorder %v2943, 0.0
      %vm2976 = vcmp.gt.f32.partialorder %v2944, 0.0
      %vm2977 = vcmp.gt.f32.partialorder %v2945, 0.0
      %vm2978 = vcmp.gt.f32.partialorder %v2946, 0.0
      %vm2979 = vcmp.gt.f32.partialorder %v2947, 0.0
      %vm2980 = vcmp.gt.f32.partialorder %v2948, 0.0
      %vm2981 = vcmp.gt.f32.partialorder %v2949, 0.0
      %vm2982 = vcmp.gt.f32.partialorder %v2950, 0.0
      %vm2983 = vcmp.gt.f32.partialorder %v2951, 0.0
      %vm2984 = vcmp.gt.f32.partialorder %v2952, 0.0
      %vm2985 = vcmp.gt.f32.partialorder %v2953, 0.0
      %vm2986 = vcmp.gt.f32.partialorder %v2954, 0.0
      %vm2987 = vcmp.gt.f32.partialorder %v2955, 0.0
      %vm2988 = vcmp.gt.f32.partialorder %v2956, 0.0
      %vm2989 = vcmp.gt.f32.partialorder %v2957, 0.0
      %vm2990 = vcmp.gt.f32.partialorder %v2958, 0.0
      %vm2991 = vcmp.gt.f32.partialorder %v2959, 0.0
      %v2992 = vmul.f32 %v2928, 0.2
      %v2993 = vmul.f32 %v2929, 0.2
      %v2994 = vmul.f32 %v2930, 0.2
      %v2995 = vmul.f32 %v2931, 0.2
      %v2996 = vmul.f32 %v2932, 0.2
      %v2997 = vmul.f32 %v2933, 0.2
      %v2998 = vmul.f32 %v2934, 0.2
      %v2999 = vmul.f32 %v2935, 0.2
      %v3000 = vmul.f32 %v2936, 0.2
      %v3001 = vmul.f32 %v2937, 0.2
      %v3002 = vmul.f32 %v2938, 0.2
      %v3003 = vmul.f32 %v2939, 0.2
      %v3004 = vmul.f32 %v2940, 0.2
      %v3005 = vmul.f32 %v2941, 0.2
      %v3006 = vmul.f32 %v2942, 0.2
      %v3007 = vmul.f32 %v2943, 0.2
      %v3008 = vmul.f32 %v2944, 0.2
      %v3009 = vmul.f32 %v2945, 0.2
      %v3010 = vmul.f32 %v2946, 0.2
      %v3011 = vmul.f32 %v2947, 0.2
      %v3012 = vmul.f32 %v2948, 0.2
      %v3013 = vmul.f32 %v2949, 0.2
      %v3014 = vmul.f32 %v2950, 0.2
      %v3015 = vmul.f32 %v2951, 0.2
      %v3016 = vmul.f32 %v2952, 0.2
      %v3017 = vmul.f32 %v2953, 0.2
      %v3018 = vmul.f32 %v2954, 0.2
      %v3019 = vmul.f32 %v2955, 0.2
      %v3020 = vmul.f32 %v2956, 0.2
      %v3021 = vmul.f32 %v2957, 0.2
      %v3022 = vmul.f32 %v2958, 0.2
      %v3023 = vmul.f32 %v2959, 0.2
      %v3024 = vsel %vm2960, %v2928, %v2992
      %v3025 = vsel %vm2961, %v2929, %v2993
      %v3026 = vsel %vm2962, %v2930, %v2994
      %v3027 = vsel %vm2963, %v2931, %v2995
      %v3028 = vsel %vm2964, %v2932, %v2996
      %v3029 = vsel %vm2965, %v2933, %v2997
      %v3030 = vsel %vm2966, %v2934, %v2998
      %v3031 = vsel %vm2967, %v2935, %v2999
      %v3032 = vsel %vm2968, %v2936, %v3000
      %v3033 = vsel %vm2969, %v2937, %v3001
      %v3034 = vsel %vm2970, %v2938, %v3002
      %v3035 = vsel %vm2971, %v2939, %v3003
      %v3036 = vsel %vm2972, %v2940, %v3004
      %v3037 = vsel %vm2973, %v2941, %v3005
      %v3038 = vsel %vm2974, %v2942, %v3006
      %v3039 = vsel %vm2975, %v2943, %v3007
      %v3040 = vsel %vm2976, %v2944, %v3008
      %v3041 = vsel %vm2977, %v2945, %v3009
      %v3042 = vsel %vm2978, %v2946, %v3010
      %v3043 = vsel %vm2979, %v2947, %v3011
      %v3044 = vsel %vm2980, %v2948, %v3012
      %v3045 = vsel %vm2981, %v2949, %v3013
      %v3046 = vsel %vm2982, %v2950, %v3014
      %v3047 = vsel %vm2983, %v2951, %v3015
      %v3048 = vsel %vm2984, %v2952, %v3016
      %v3049 = vsel %vm2985, %v2953, %v3017
      %v3050 = vsel %vm2986, %v2954, %v3018
      %v3051 = vsel %vm2987, %v2955, %v3019
      %v3052 = vsel %vm2988, %v2956, %v3020
      %v3053 = vsel %vm2989, %v2957, %v3021
      %v3054 = vsel %vm2990, %v2958, %v3022
      %v3055 = vsel %vm2991, %v2959, %v3023
      %3088 = vrot.lane.b32.xlu0 %v3024, 4
      %v3089 = vpop.permute.xlu0 %3088
      %3090 = vrot.lane.b32.xlu0 %v3025, 4
      %v3091 = vpop.permute.xlu0 %3090
      %3092 = vrot.lane.b32.xlu0 %v3026, 4
      %v3093 = vpop.permute.xlu0 %3092
      %3094 = vrot.lane.b32.xlu0 %v3027, 4
      %v3095 = vpop.permute.xlu0 %3094
      %3096 = vrot.lane.b32.xlu0 %v3028, 4
      %v3097 = vpop.permute.xlu0 %3096
      %3098 = vrot.lane.b32.xlu0 %v3029, 4
      %v3099 = vpop.permute.xlu0 %3098
      %3100 = vrot.lane.b32.xlu0 %v3030, 4
      %v3101 = vpop.permute.xlu0 %3100
      %3102 = vrot.lane.b32.xlu0 %v3031, 4
      %v3103 = vpop.permute.xlu0 %3102
      %3104 = vrot.lane.b32.xlu0 %v3032, 4
      %v3105 = vpop.permute.xlu0 %3104
      %3106 = vrot.lane.b32.xlu0 %v3033, 4
      %v3107 = vpop.permute.xlu0 %3106
      %3108 = vrot.lane.b32.xlu0 %v3034, 4
      %v3109 = vpop.permute.xlu0 %3108
      %3110 = vrot.lane.b32.xlu0 %v3035, 4
      %v3111 = vpop.permute.xlu0 %3110
      %3112 = vrot.lane.b32.xlu0 %v3036, 4
      %v3113 = vpop.permute.xlu0 %3112
      %3114 = vrot.lane.b32.xlu0 %v3037, 4
      %v3115 = vpop.permute.xlu0 %3114
      %3116 = vrot.lane.b32.xlu0 %v3038, 4
      %v3117 = vpop.permute.xlu0 %3116
      %3118 = vrot.lane.b32.xlu0 %v3039, 4
      %v3119 = vpop.permute.xlu0 %3118
      %3120 = vrot.lane.b32.xlu0 %v3040, 4
      %v3121 = vpop.permute.xlu0 %3120
      %3122 = vrot.lane.b32.xlu0 %v3041, 4
      %v3123 = vpop.permute.xlu0 %3122
      %3124 = vrot.lane.b32.xlu0 %v3042, 4
      %v3125 = vpop.permute.xlu0 %3124
      %3126 = vrot.lane.b32.xlu0 %v3043, 4
      %v3127 = vpop.permute.xlu0 %3126
      %3128 = vrot.lane.b32.xlu0 %v3044, 4
      %v3129 = vpop.permute.xlu0 %3128
      %3130 = vrot.lane.b32.xlu0 %v3045, 4
      %v3131 = vpop.permute.xlu0 %3130
      %3132 = vrot.lane.b32.xlu0 %v3046, 4
      %v3133 = vpop.permute.xlu0 %3132
      %3134 = vrot.lane.b32.xlu0 %v3047, 4
      %v3135 = vpop.permute.xlu0 %3134
      %3136 = vrot.lane.b32.xlu0 %v3048, 4
      %v3137 = vpop.permute.xlu0 %3136
      %3138 = vrot.lane.b32.xlu0 %v3049, 4
      %v3139 = vpop.permute.xlu0 %3138
      %3140 = vrot.lane.b32.xlu0 %v3050, 4
      %v3141 = vpop.permute.xlu0 %3140
      %3142 = vrot.lane.b32.xlu0 %v3051, 4
      %v3143 = vpop.permute.xlu0 %3142
      %3144 = vrot.lane.b32.xlu0 %v3052, 4
      %v3145 = vpop.permute.xlu0 %3144
      %3146 = vrot.lane.b32.xlu0 %v3053, 4
      %v3147 = vpop.permute.xlu0 %3146
      %3148 = vrot.lane.b32.xlu0 %v3054, 4
      %v3149 = vpop.permute.xlu0 %3148
      %3150 = vrot.lane.b32.xlu0 %v3055, 4
      %v3151 = vpop.permute.xlu0 %3150
      %vm3184 = vcmask 64544
      %3185 = vst.msk [vmem:[%s304 + $0x1] sm:$0xff] %vm3184, %v3089
      %3186 = vst.msk [vmem:[%s304 + $0x9] sm:$0xff] %vm3184, %v3091
      %3187 = vst.msk [vmem:[%s304 + $0x19] sm:$0xff] %vm3184, %v3093
      %3188 = vst.msk [vmem:[%s304 + $0x21] sm:$0xff] %vm3184, %v3095
      %3189 = vst.msk [vmem:[%s304 + $0x31] sm:$0xff] %vm3184, %v3097
      %3190 = vst.msk [vmem:[%s304 + $0x39] sm:$0xff] %vm3184, %v3099
      %3191 = vst.msk [vmem:[%s304 + $0x49] sm:$0xff] %vm3184, %v3101
      %3192 = vst.msk [vmem:[%s304 + $0x51] sm:$0xff] %vm3184, %v3103
      %3193 = vst.msk [vmem:[%s304 + $0x61] sm:$0xff] %vm3184, %v3105
      %3194 = vst.msk [vmem:[%s304 + $0x69] sm:$0xff] %vm3184, %v3107
      %3195 = vst.msk [vmem:[%s304 + $0x79] sm:$0xff] %vm3184, %v3109
      %3196 = vst.msk [vmem:[%s304 + $0x81] sm:$0xff] %vm3184, %v3111
      %3197 = vst.msk [vmem:[%s304 + $0x91] sm:$0xff] %vm3184, %v3113
      %3198 = vst.msk [vmem:[%s304 + $0x99] sm:$0xff] %vm3184, %v3115
      %3199 = vst.msk [vmem:[%s304 + $0xa9] sm:$0xff] %vm3184, %v3117
      %3200 = vst.msk [vmem:[%s304 + $0xb1] sm:$0xff] %vm3184, %v3119
      %3201 = vst.msk [vmem:[%s304 + $0xc1] sm:$0xff] %vm3184, %v3121
      %3202 = vst.msk [vmem:[%s304 + $0xc9] sm:$0xff] %vm3184, %v3123
      %3203 = vst.msk [vmem:[%s304 + $0xd9] sm:$0xff] %vm3184, %v3125
      %3204 = vst.msk [vmem:[%s304 + $0xe1] sm:$0xff] %vm3184, %v3127
      %3205 = vst.msk [vmem:[%s304 + $0xf1] sm:$0xff] %vm3184, %v3129
      %3206 = vst.msk [vmem:[%s304 + $0xf9] sm:$0xff] %vm3184, %v3131
      %3207 = vst.msk [vmem:[%s304 + $0x109] sm:$0xff] %vm3184, %v3133
      %3208 = vst.msk [vmem:[%s304 + $0x111] sm:$0xff] %vm3184, %v3135
      %3209 = vst.msk [vmem:[%s304 + $0x121] sm:$0xff] %vm3184, %v3137
      %3210 = vst.msk [vmem:[%s304 + $0x129] sm:$0xff] %vm3184, %v3139
      %3211 = vst.msk [vmem:[%s304 + $0x139] sm:$0xff] %vm3184, %v3141
      %3212 = vst.msk [vmem:[%s304 + $0x141] sm:$0xff] %vm3184, %v3143
      %3213 = vst.msk [vmem:[%s304 + $0x151] sm:$0xff] %vm3184, %v3145
      %3214 = vst.msk [vmem:[%s304 + $0x159] sm:$0xff] %vm3184, %v3147
      %3215 = vst.msk [vmem:[%s304 + $0x169] sm:$0xff] %vm3184, %v3149
      %3216 = vst.msk [vmem:[%s304 + $0x171] sm:$0xff] %vm3184, %v3151
      %v3217 = vld [vmem:[#allocation2] sm:$0xff]
      %v3218 = vld [vmem:[#allocation2 + $0x8] sm:$0xff]
      %v3219 = vld [vmem:[#allocation2 + $0x18] sm:$0xff]
      %v3220 = vld [vmem:[#allocation2 + $0x20] sm:$0xff]
      %v3221 = vld [vmem:[#allocation2 + $0x30] sm:$0xff]
      %v3222 = vld [vmem:[#allocation2 + $0x38] sm:$0xff]
      %v3223 = vld [vmem:[#allocation2 + $0x48] sm:$0xff]
      %v3224 = vld [vmem:[#allocation2 + $0x50] sm:$0xff]
      %v3225 = vld [vmem:[#allocation2 + $0x60] sm:$0xff]
      %v3226 = vld [vmem:[#allocation2 + $0x68] sm:$0xff]
      %v3227 = vld [vmem:[#allocation2 + $0x78] sm:$0xff]
      %v3228 = vld [vmem:[#allocation2 + $0x80] sm:$0xff]
      %v3229 = vld [vmem:[#allocation2 + $0x90] sm:$0xff]
      %v3230 = vld [vmem:[#allocation2 + $0x98] sm:$0xff]
      %v3231 = vld [vmem:[#allocation2 + $0xa8] sm:$0xff]
      %v3232 = vld [vmem:[#allocation2 + $0xb0] sm:$0xff]
      %v3233 = vld [vmem:[#allocation2 + $0xc0] sm:$0xff]
      %v3234 = vld [vmem:[#allocation2 + $0xc8] sm:$0xff]
      %v3235 = vld [vmem:[#allocation2 + $0xd8] sm:$0xff]
      %v3236 = vld [vmem:[#allocation2 + $0xe0] sm:$0xff]
      %v3237 = vld [vmem:[#allocation2 + $0xf0] sm:$0xff]
      %v3238 = vld [vmem:[#allocation2 + $0xf8] sm:$0xff]
      %v3239 = vld [vmem:[#allocation2 + $0x108] sm:$0xff]
      %v3240 = vld [vmem:[#allocation2 + $0x110] sm:$0xff]
      %v3241 = vld [vmem:[#allocation2 + $0x120] sm:$0xff]
      %v3242 = vld [vmem:[#allocation2 + $0x128] sm:$0xff]
      %v3243 = vld [vmem:[#allocation2 + $0x138] sm:$0xff]
      %v3244 = vld [vmem:[#allocation2 + $0x140] sm:$0xff]
      %v3245 = vld [vmem:[#allocation2 + $0x150] sm:$0xff]
      %v3246 = vld [vmem:[#allocation2 + $0x158] sm:$0xff]
      %v3247 = vld [vmem:[#allocation2 + $0x168] sm:$0xff]
      %v3248 = vld [vmem:[#allocation2 + $0x170] sm:$0xff]
      %v3249 = vpack.c.bf16 %v3218, %v3217
      %v3250 = vpack.c.bf16 %v3220, %v3219
      %v3251 = vpack.c.bf16 %v3222, %v3221
      %v3252 = vpack.c.bf16 %v3224, %v3223
      %v3253 = vpack.c.bf16 %v3226, %v3225
      %v3254 = vpack.c.bf16 %v3228, %v3227
      %v3255 = vpack.c.bf16 %v3230, %v3229
      %v3256 = vpack.c.bf16 %v3232, %v3231
      %v3257 = vpack.c.bf16 %v3234, %v3233
      %v3258 = vpack.c.bf16 %v3236, %v3235
      %v3259 = vpack.c.bf16 %v3238, %v3237
      %v3260 = vpack.c.bf16 %v3240, %v3239
      %v3261 = vpack.c.bf16 %v3242, %v3241
      %v3262 = vpack.c.bf16 %v3244, %v3243
      %v3263 = vpack.c.bf16 %v3246, %v3245
      %v3264 = vpack.c.bf16 %v3248, %v3247
      %v3265 = vld [vmem:[%s3] sm:$0xf]
      %v3266 = vld [vmem:[#allocation2 + $0x1] sm:$0xff]
      %v3267 = vld [vmem:[#allocation2 + $0x9] sm:$0xff]
      %v3268 = vld [vmem:[#allocation2 + $0x19] sm:$0xff]
      %v3269 = vld [vmem:[#allocation2 + $0x21] sm:$0xff]
      %v3270 = vld [vmem:[#allocation2 + $0x31] sm:$0xff]
      %v3271 = vld [vmem:[#allocation2 + $0x39] sm:$0xff]
      %v3272 = vld [vmem:[#allocation2 + $0x49] sm:$0xff]
      %v3273 = vld [vmem:[#allocation2 + $0x51] sm:$0xff]
      %v3274 = vld [vmem:[#allocation2 + $0x61] sm:$0xff]
      %v3275 = vld [vmem:[#allocation2 + $0x69] sm:$0xff]
      %v3276 = vld [vmem:[#allocation2 + $0x79] sm:$0xff]
      %v3277 = vld [vmem:[#allocation2 + $0x81] sm:$0xff]
      %v3278 = vld [vmem:[#allocation2 + $0x91] sm:$0xff]
      %v3279 = vld [vmem:[#allocation2 + $0x99] sm:$0xff]
      %v3280 = vld [vmem:[#allocation2 + $0xa9] sm:$0xff]
      %v3281 = vld [vmem:[#allocation2 + $0xb1] sm:$0xff]
      %v3282 = vld [vmem:[#allocation2 + $0xc1] sm:$0xff]
      %v3283 = vld [vmem:[#allocation2 + $0xc9] sm:$0xff]
      %v3284 = vld [vmem:[#allocation2 + $0xd9] sm:$0xff]
      %v3285 = vld [vmem:[#allocation2 + $0xe1] sm:$0xff]
      %v3286 = vld [vmem:[#allocation2 + $0xf1] sm:$0xff]
      %v3287 = vld [vmem:[#allocation2 + $0xf9] sm:$0xff]
      %v3288 = vld [vmem:[#allocation2 + $0x109] sm:$0xff]
      %v3289 = vld [vmem:[#allocation2 + $0x111] sm:$0xff]
      %v3290 = vld [vmem:[#allocation2 + $0x121] sm:$0xff]
      %v3291 = vld [vmem:[#allocation2 + $0x129] sm:$0xff]
      %v3292 = vld [vmem:[#allocation2 + $0x139] sm:$0xff]
      %v3293 = vld [vmem:[#allocation2 + $0x141] sm:$0xff]
      %v3294 = vld [vmem:[#allocation2 + $0x151] sm:$0xff]
      %v3295 = vld [vmem:[#allocation2 + $0x159] sm:$0xff]
      %v3296 = vld [vmem:[#allocation2 + $0x169] sm:$0xff]
      %v3297 = vld [vmem:[#allocation2 + $0x171] sm:$0xff]
      %v3298 = vpack.c.bf16 %v3267, %v3266
      %v3299 = vpack.c.bf16 %v3269, %v3268
      %v3300 = vpack.c.bf16 %v3271, %v3270
      %v3301 = vpack.c.bf16 %v3273, %v3272
      %v3302 = vpack.c.bf16 %v3275, %v3274
      %v3303 = vpack.c.bf16 %v3277, %v3276
      %v3304 = vpack.c.bf16 %v3279, %v3278
      %v3305 = vpack.c.bf16 %v3281, %v3280
      %v3306 = vpack.c.bf16 %v3283, %v3282
      %v3307 = vpack.c.bf16 %v3285, %v3284
      %v3308 = vpack.c.bf16 %v3287, %v3286
      %v3309 = vpack.c.bf16 %v3289, %v3288
      %v3310 = vpack.c.bf16 %v3291, %v3290
      %v3311 = vpack.c.bf16 %v3293, %v3292
      %v3312 = vpack.c.bf16 %v3295, %v3294
      %v3313 = vpack.c.bf16 %v3297, %v3296
      %s3314 = scalar_lea.vmem %s3, 4
      %v3315 = vld [vmem:[%s3314] sm:$0xf]
      %v3317 = vsel %vm226, %v3298, 0
      %v3320 = vsel %vm226, %v3299, 0
      %v3323 = vsel %vm226, %v3300, 0
      %v3326 = vsel %vm226, %v3301, 0
      %v3329 = vsel %vm226, %v3302, 0
      %v3332 = vsel %vm226, %v3303, 0
      %v3335 = vsel %vm226, %v3304, 0
      %v3338 = vsel %vm226, %v3305, 0
      %v3341 = vsel %vm226, %v3306, 0
      %v3344 = vsel %vm226, %v3307, 0
      %v3347 = vsel %vm226, %v3308, 0
      %v3350 = vsel %vm226, %v3309, 0
      %v3353 = vsel %vm226, %v3310, 0
      %v3356 = vsel %vm226, %v3311, 0
      %v3359 = vsel %vm226, %v3312, 0
      %v3362 = vsel %vm226, %v3313, 0
      %vm3364 = vcmask 1043456
      %v3366 = vsel %vm3364, %v3315, 0
      %3368 = vmatprep.subr.bf16.mxu0 0
      %3369 = vmatpush1.bf16.msra.mxu0 %v3366
      %3370 = vmatprep.subr.bf16.mxu0 0
      %3371 = vmatpush1.bf16.msra.mxu0 0
      %3372 = vmatprep.subr.bf16.mxu0 0
      %3373 = vmatpush1.bf16.msra.mxu0 0
      %3374 = vmatprep.subr.bf16.mxu0 0
      %3375 = vmatpush1.bf16.msra.mxu0 0
      %3376 = vmatprep.subr.bf16.mxu0 0
      %3377 = vmatpush1.bf16.msra.mxu0 0
      %3378 = vmatprep.subr.bf16.mxu0 0
      %3379 = vmatpush1.bf16.msra.mxu0 0
      %3380 = vmatprep.subr.bf16.mxu0 0
      %3381 = vmatpush1.bf16.msra.mxu0 0
      %3382 = vmatprep.subr.bf16.mxu0 0
      %3383 = vmatpush1.bf16.msra.mxu0 0
      %3384 = vmatprep.subr.bf16.mxu0 0
      %3385 = vmatpush1.bf16.msra.mxu0 0
      %3386 = vmatprep.subr.bf16.mxu0 0
      %3387 = vmatpush1.bf16.msra.mxu0 0
      %3388 = vmatprep.subr.bf16.mxu0 0
      %3389 = vmatpush1.bf16.msra.mxu0 0
      %3390 = vmatprep.subr.bf16.mxu0 0
      %3391 = vmatpush1.bf16.msra.mxu0 0
      %3392 = vmatprep.subr.bf16.mxu0 0
      %3393 = vmatpush1.bf16.msra.mxu0 0
      %3394 = vmatprep.subr.bf16.mxu0 0
      %3395 = vmatpush1.bf16.msra.mxu0 0
      %3396 = vmatprep.subr.bf16.mxu0 0
      %3397 = vmatpush1.bf16.msra.mxu0 0
      %3398 = vmatprep.subr.bf16.mxu0 0
      %3399 = vmatpush1.bf16.msra.mxu0 0
      %3400 = vmatprep.mubr.bf16.mxu0 0
      %3401 = vmatmul.mubr.bf16.gmra.mrb[0].mxu0 %v3317
      %v3402 = vpop.f32.mrb[0].mxu0
      %v3403 = vadd.f32 0.0, %v3402
      %v3404 = vpop.f32.mrb[0].mxu0
      %v3405 = vpop.f32.mrb[0].mxu0
      %v3406 = vadd.f32 0.0, %v3405
      %v3407 = vpop.f32.mrb[0].mxu0
      %3408 = vmatprep.mubr.bf16.mxu0 0
      %3409 = vmatmul.mubr.bf16.gmra.mrb[0].mxu0 %v3320
      %v3410 = vpop.f32.mrb[0].mxu0
      %v3411 = vadd.f32 0.0, %v3410
      %v3412 = vpop.f32.mrb[0].mxu0
      %v3413 = vpop.f32.mrb[0].mxu0
      %v3414 = vadd.f32 0.0, %v3413
      %v3415 = vpop.f32.mrb[0].mxu0
      %3416 = vmatprep.mubr.bf16.mxu0 0
      %3417 = vmatmul.mubr.bf16.gmra.mrb[0].mxu0 %v3323
      %v3418 = vpop.f32.mrb[0].mxu0
      %v3419 = vadd.f32 0.0, %v3418
      %v3420 = vpop.f32.mrb[0].mxu0
      %v3421 = vpop.f32.mrb[0].mxu0
      %v3422 = vadd.f32 0.0, %v3421
      %v3423 = vpop.f32.mrb[0].mxu0
      %3424 = vmatprep.mubr.bf16.mxu0 0
      %3425 = vmatmul.mubr.bf16.gmra.mrb[0].mxu0 %v3326
      %v3426 = vpop.f32.mrb[0].mxu0
      %v3427 = vadd.f32 0.0, %v3426
      %v3428 = vpop.f32.mrb[0].mxu0
      %v3429 = vpop.f32.mrb[0].mxu0
      %v3430 = vadd.f32 0.0, %v3429
      %v3431 = vpop.f32.mrb[0].mxu0
      %3432 = vmatprep.mubr.bf16.mxu0 0
      %3433 = vmatmul.mubr.bf16.gmra.mrb[0].mxu0 %v3329
      %v3434 = vpop.f32.mrb[0].mxu0
      %v3435 = vadd.f32 0.0, %v3434
      %v3436 = vpop.f32.mrb[0].mxu0
      %v3437 = vpop.f32.mrb[0].mxu0
      %v3438 = vadd.f32 0.0, %v3437
      %v3439 = vpop.f32.mrb[0].mxu0
      %3440 = vmatprep.mubr.bf16.mxu0 0
      %3441 = vmatmul.mubr.bf16.gmra.mrb[0].mxu0 %v3332
      %v3442 = vpop.f32.mrb[0].mxu0
      %v3443 = vadd.f32 0.0, %v3442
      %v3444 = vpop.f32.mrb[0].mxu0
      %v3445 = vpop.f32.mrb[0].mxu0
      %v3446 = vadd.f32 0.0, %v3445
      %v3447 = vpop.f32.mrb[0].mxu0
      %3448 = vmatprep.mubr.bf16.mxu0 0
      %3449 = vmatmul.mubr.bf16.gmra.mrb[0].mxu0 %v3335
      %v3450 = vpop.f32.mrb[0].mxu0
      %v3451 = vadd.f32 0.0, %v3450
      %v3452 = vpop.f32.mrb[0].mxu0
      %v3453 = vpop.f32.mrb[0].mxu0
      %v3454 = vadd.f32 0.0, %v3453
      %v3455 = vpop.f32.mrb[0].mxu0
      %3456 = vmatprep.mubr.bf16.mxu0 0
      %3457 = vmatmul.mubr.bf16.gmra.mrb[0].mxu0 %v3338
      %v3458 = vpop.f32.mrb[0].mxu0
      %v3459 = vadd.f32 0.0, %v3458
      %v3460 = vpop.f32.mrb[0].mxu0
      %v3461 = vpop.f32.mrb[0].mxu0
      %v3462 = vadd.f32 0.0, %v3461
      %v3463 = vpop.f32.mrb[0].mxu0
      %3464 = vmatprep.mubr.bf16.mxu0 0
      %3465 = vmatmul.mubr.bf16.gmra.mrb[0].mxu0 %v3341
      %v3466 = vpop.f32.mrb[0].mxu0
      %v3467 = vadd.f32 0.0, %v3466
      %v3468 = vpop.f32.mrb[0].mxu0
      %v3469 = vpop.f32.mrb[0].mxu0
      %v3470 = vadd.f32 0.0, %v3469
      %v3471 = vpop.f32.mrb[0].mxu0
      %3472 = vmatprep.mubr.bf16.mxu0 0
      %3473 = vmatmul.mubr.bf16.gmra.mrb[0].mxu0 %v3344
      %v3474 = vpop.f32.mrb[0].mxu0
      %v3475 = vadd.f32 0.0, %v3474
      %v3476 = vpop.f32.mrb[0].mxu0
      %v3477 = vpop.f32.mrb[0].mxu0
      %v3478 = vadd.f32 0.0, %v3477
      %v3479 = vpop.f32.mrb[0].mxu0
      %3480 = vmatprep.mubr.bf16.mxu0 0
      %3481 = vmatmul.mubr.bf16.gmra.mrb[0].mxu0 %v3347
      %v3482 = vpop.f32.mrb[0].mxu0
      %v3483 = vadd.f32 0.0, %v3482
      %v3484 = vpop.f32.mrb[0].mxu0
      %v3485 = vpop.f32.mrb[0].mxu0
      %v3486 = vadd.f32 0.0, %v3485
      %v3487 = vpop.f32.mrb[0].mxu0
      %3488 = vmatprep.mubr.bf16.mxu0 0
      %3489 = vmatmul.mubr.bf16.gmra.mrb[0].mxu0 %v3350
      %v3490 = vpop.f32.mrb[0].mxu0
      %v3491 = vadd.f32 0.0, %v3490
      %v3492 = vpop.f32.mrb[0].mxu0
      %v3493 = vpop.f32.mrb[0].mxu0
      %v3494 = vadd.f32 0.0, %v3493
      %v3495 = vpop.f32.mrb[0].mxu0
      %3496 = vmatprep.mubr.bf16.mxu0 0
      %3497 = vmatmul.mubr.bf16.gmra.mrb[0].mxu0 %v3353
      %v3498 = vpop.f32.mrb[0].mxu0
      %v3499 = vadd.f32 0.0, %v3498
      %v3500 = vpop.f32.mrb[0].mxu0
      %v3501 = vpop.f32.mrb[0].mxu0
      %v3502 = vadd.f32 0.0, %v3501
      %v3503 = vpop.f32.mrb[0].mxu0
      %3504 = vmatprep.mubr.bf16.mxu0 0
      %3505 = vmatmul.mubr.bf16.gmra.mrb[0].mxu0 %v3356
      %v3506 = vpop.f32.mrb[0].mxu0
      %v3507 = vadd.f32 0.0, %v3506
      %v3508 = vpop.f32.mrb[0].mxu0
      %v3509 = vpop.f32.mrb[0].mxu0
      %v3510 = vadd.f32 0.0, %v3509
      %v3511 = vpop.f32.mrb[0].mxu0
      %3512 = vmatprep.mubr.bf16.mxu0 0
      %3513 = vmatmul.mubr.bf16.gmra.mrb[0].mxu0 %v3359
      %v3514 = vpop.f32.mrb[0].mxu0
      %v3515 = vadd.f32 0.0, %v3514
      %v3516 = vpop.f32.mrb[0].mxu0
      %v3517 = vpop.f32.mrb[0].mxu0
      %v3518 = vadd.f32 0.0, %v3517
      %v3519 = vpop.f32.mrb[0].mxu0
      %3520 = vmatprep.mubr.bf16.mxu0 0
      %3521 = vmatmul.mubr.bf16.gmra.mrb[0].mxu0 %v3362
      %v3522 = vpop.f32.mrb[0].mxu0
      %v3523 = vadd.f32 0.0, %v3522
      %v3524 = vpop.f32.mrb[0].mxu0
      %v3525 = vpop.f32.mrb[0].mxu0
      %v3526 = vadd.f32 0.0, %v3525
      %v3527 = vpop.f32.mrb[0].mxu0
      %3528 = vdwg.mxu0
      %v3530 = vsel %vm226, %v3249, 0
      %v3533 = vsel %vm226, %v3250, 0
      %v3536 = vsel %vm226, %v3251, 0
      %v3539 = vsel %vm226, %v3252, 0
      %v3542 = vsel %vm226, %v3253, 0
      %v3545 = vsel %vm226, %v3254, 0
      %v3548 = vsel %vm226, %v3255, 0
      %v3551 = vsel %vm226, %v3256, 0
      %v3554 = vsel %vm226, %v3257, 0
      %v3557 = vsel %vm226, %v3258, 0
      %v3560 = vsel %vm226, %v3259, 0
      %v3563 = vsel %vm226, %v3260, 0
      %v3566 = vsel %vm226, %v3261, 0
      %v3569 = vsel %vm226, %v3262, 0
      %v3572 = vsel %vm226, %v3263, 0
      %v3575 = vsel %vm226, %v3264, 0
      %v3578 = vsel %vm3364, %v3265, 0
      %3580 = vmatprep.subr.bf16.mxu0 0
      %3581 = vmatpush1.bf16.msra.mxu0 %v3578
      %3582 = vmatprep.subr.bf16.mxu0 0
      %3583 = vmatpush1.bf16.msra.mxu0 0
      %3584 = vmatprep.subr.bf16.mxu0 0
      %3585 = vmatpush1.bf16.msra.mxu0 0
      %3586 = vmatprep.subr.bf16.mxu0 0
      %3587 = vmatpush1.bf16.msra.mxu0 0
      %3588 = vmatprep.subr.bf16.mxu0 0
      %3589 = vmatpush1.bf16.msra.mxu0 0
      %3590 = vmatprep.subr.bf16.mxu0 0
      %3591 = vmatpush1.bf16.msra.mxu0 0
      %3592 = vmatprep.subr.bf16.mxu0 0
      %3593 = vmatpush1.bf16.msra.mxu0 0
      %3594 = vmatprep.subr.bf16.mxu0 0
      %3595 = vmatpush1.bf16.msra.mxu0 0
      %3596 = vmatprep.subr.bf16.mxu0 0
      %3597 = vmatpush1.bf16.msra.mxu0 0
      %3598 = vmatprep.subr.bf16.mxu0 0
      %3599 = vmatpush1.bf16.msra.mxu0 0
      %3600 = vmatprep.subr.bf16.mxu0 0
      %3601 = vmatpush1.bf16.msra.mxu0 0
      %3602 = vmatprep.subr.bf16.mxu0 0
      %3603 = vmatpush1.bf16.msra.mxu0 0
      %3604 = vmatprep.subr.bf16.mxu0 0
      %3605 = vmatpush1.bf16.msra.mxu0 0
      %3606 = vmatprep.subr.bf16.mxu0 0
      %3607 = vmatpush1.bf16.msra.mxu0 0
      %3608 = vmatprep.subr.bf16.mxu0 0
      %3609 = vmatpush1.bf16.msra.mxu0 0
      %3610 = vmatprep.subr.bf16.mxu0 0
      %3611 = vmatpush1.bf16.msra.mxu0 0
      %3612 = vmatprep.mubr.bf16.mxu0 0
      %3613 = vmatmul.mubr.bf16.gmra.mrb[0].mxu0 %v3530
      %v3614 = vpop.f32.mrb[0].mxu0
      %v3615 = vadd.f32 %v3403, %v3614
      %v3616 = vpop.f32.mrb[0].mxu0
      %v3617 = vpop.f32.mrb[0].mxu0
      %v3618 = vadd.f32 %v3406, %v3617
      %v3619 = vpop.f32.mrb[0].mxu0
      %3620 = vmatprep.mubr.bf16.mxu0 0
      %3621 = vmatmul.mubr.bf16.gmra.mrb[0].mxu0 %v3533
      %v3622 = vpop.f32.mrb[0].mxu0
      %v3623 = vadd.f32 %v3411, %v3622
      %v3624 = vpop.f32.mrb[0].mxu0
      %v3625 = vpop.f32.mrb[0].mxu0
      %v3626 = vadd.f32 %v3414, %v3625
      %v3627 = vpop.f32.mrb[0].mxu0
      %3628 = vmatprep.mubr.bf16.mxu0 0
      %3629 = vmatmul.mubr.bf16.gmra.mrb[0].mxu0 %v3536
      %v3630 = vpop.f32.mrb[0].mxu0
      %v3631 = vadd.f32 %v3419, %v3630
      %v3632 = vpop.f32.mrb[0].mxu0
      %v3633 = vpop.f32.mrb[0].mxu0
      %v3634 = vadd.f32 %v3422, %v3633
      %v3635 = vpop.f32.mrb[0].mxu0
      %3636 = vmatprep.mubr.bf16.mxu0 0
      %3637 = vmatmul.mubr.bf16.gmra.mrb[0].mxu0 %v3539
      %v3638 = vpop.f32.mrb[0].mxu0
      %v3639 = vadd.f32 %v3427, %v3638
      %v3640 = vpop.f32.mrb[0].mxu0
      %v3641 = vpop.f32.mrb[0].mxu0
      %v3642 = vadd.f32 %v3430, %v3641
      %v3643 = vpop.f32.mrb[0].mxu0
      %3644 = vmatprep.mubr.bf16.mxu0 0
      %3645 = vmatmul.mubr.bf16.gmra.mrb[0].mxu0 %v3542
      %v3646 = vpop.f32.mrb[0].mxu0
      %v3647 = vadd.f32 %v3435, %v3646
      %v3648 = vpop.f32.mrb[0].mxu0
      %v3649 = vpop.f32.mrb[0].mxu0
      %v3650 = vadd.f32 %v3438, %v3649
      %v3651 = vpop.f32.mrb[0].mxu0
      %3652 = vmatprep.mubr.bf16.mxu0 0
      %3653 = vmatmul.mubr.bf16.gmra.mrb[0].mxu0 %v3545
      %v3654 = vpop.f32.mrb[0].mxu0
      %v3655 = vadd.f32 %v3443, %v3654
      %v3656 = vpop.f32.mrb[0].mxu0
      %v3657 = vpop.f32.mrb[0].mxu0
      %v3658 = vadd.f32 %v3446, %v3657
      %v3659 = vpop.f32.mrb[0].mxu0
      %3660 = vmatprep.mubr.bf16.mxu0 0
      %3661 = vmatmul.mubr.bf16.gmra.mrb[0].mxu0 %v3548
      %v3662 = vpop.f32.mrb[0].mxu0
      %v3663 = vadd.f32 %v3451, %v3662
      %v3664 = vpop.f32.mrb[0].mxu0
      %v3665 = vpop.f32.mrb[0].mxu0
      %v3666 = vadd.f32 %v3454, %v3665
      %v3667 = vpop.f32.mrb[0].mxu0
      %3668 = vmatprep.mubr.bf16.mxu0 0
      %3669 = vmatmul.mubr.bf16.gmra.mrb[0].mxu0 %v3551
      %v3670 = vpop.f32.mrb[0].mxu0
      %v3671 = vadd.f32 %v3459, %v3670
      %v3672 = vpop.f32.mrb[0].mxu0
      %v3673 = vpop.f32.mrb[0].mxu0
      %v3674 = vadd.f32 %v3462, %v3673
      %v3675 = vpop.f32.mrb[0].mxu0
      %3676 = vmatprep.mubr.bf16.mxu0 0
      %3677 = vmatmul.mubr.bf16.gmra.mrb[0].mxu0 %v3554
      %v3678 = vpop.f32.mrb[0].mxu0
      %v3679 = vadd.f32 %v3467, %v3678
      %v3680 = vpop.f32.mrb[0].mxu0
      %v3681 = vpop.f32.mrb[0].mxu0
      %v3682 = vadd.f32 %v3470, %v3681
      %v3683 = vpop.f32.mrb[0].mxu0
      %3684 = vmatprep.mubr.bf16.mxu0 0
      %3685 = vmatmul.mubr.bf16.gmra.mrb[0].mxu0 %v3557
      %v3686 = vpop.f32.mrb[0].mxu0
      %v3687 = vadd.f32 %v3475, %v3686
      %v3688 = vpop.f32.mrb[0].mxu0
      %v3689 = vpop.f32.mrb[0].mxu0
      %v3690 = vadd.f32 %v3478, %v3689
      %v3691 = vpop.f32.mrb[0].mxu0
      %3692 = vmatprep.mubr.bf16.mxu0 0
      %3693 = vmatmul.mubr.bf16.gmra.mrb[0].mxu0 %v3560
      %v3694 = vpop.f32.mrb[0].mxu0
      %v3695 = vadd.f32 %v3483, %v3694
      %v3696 = vpop.f32.mrb[0].mxu0
      %v3697 = vpop.f32.mrb[0].mxu0
      %v3698 = vadd.f32 %v3486, %v3697
      %v3699 = vpop.f32.mrb[0].mxu0
      %3700 = vmatprep.mubr.bf16.mxu0 0
      %3701 = vmatmul.mubr.bf16.gmra.mrb[0].mxu0 %v3563
      %v3702 = vpop.f32.mrb[0].mxu0
      %v3703 = vadd.f32 %v3491, %v3702
      %v3704 = vpop.f32.mrb[0].mxu0
      %v3705 = vpop.f32.mrb[0].mxu0
      %v3706 = vadd.f32 %v3494, %v3705
      %v3707 = vpop.f32.mrb[0].mxu0
      %3708 = vmatprep.mubr.bf16.mxu0 0
      %3709 = vmatmul.mubr.bf16.gmra.mrb[0].mxu0 %v3566
      %v3710 = vpop.f32.mrb[0].mxu0
      %v3711 = vadd.f32 %v3499, %v3710
      %v3712 = vpop.f32.mrb[0].mxu0
      %v3713 = vpop.f32.mrb[0].mxu0
      %v3714 = vadd.f32 %v3502, %v3713
      %v3715 = vpop.f32.mrb[0].mxu0
      %3716 = vmatprep.mubr.bf16.mxu0 0
      %3717 = vmatmul.mubr.bf16.gmra.mrb[0].mxu0 %v3569
      %v3718 = vpop.f32.mrb[0].mxu0
      %v3719 = vadd.f32 %v3507, %v3718
      %v3720 = vpop.f32.mrb[0].mxu0
      %v3721 = vpop.f32.mrb[0].mxu0
      %v3722 = vadd.f32 %v3510, %v3721
      %v3723 = vpop.f32.mrb[0].mxu0
      %3724 = vmatprep.mubr.bf16.mxu0 0
      %3725 = vmatmul.mubr.bf16.gmra.mrb[0].mxu0 %v3572
      %v3726 = vpop.f32.mrb[0].mxu0
      %v3727 = vadd.f32 %v3515, %v3726
      %v3728 = vpop.f32.mrb[0].mxu0
      %v3729 = vpop.f32.mrb[0].mxu0
      %v3730 = vadd.f32 %v3518, %v3729
      %v3731 = vpop.f32.mrb[0].mxu0
      %3732 = vmatprep.mubr.bf16.mxu0 0
      %3733 = vmatmul.mubr.bf16.gmra.mrb[0].mxu0 %v3575
      %v3734 = vpop.f32.mrb[0].mxu0
      %v3735 = vadd.f32 %v3523, %v3734
      %v3736 = vpop.f32.mrb[0].mxu0
      %v3737 = vpop.f32.mrb[0].mxu0
      %v3738 = vadd.f32 %v3526, %v3737
      %v3739 = vpop.f32.mrb[0].mxu0
      %3740 = vdwg.mxu0
      %v3741 = vld [vmem:[#allocation2 + $0x2] sm:$0xff]
      %v3742 = vld [vmem:[#allocation2 + $0xa] sm:$0xff]
      %v3743 = vld [vmem:[#allocation2 + $0x1a] sm:$0xff]
      %v3744 = vld [vmem:[#allocation2 + $0x22] sm:$0xff]
      %v3745 = vld [vmem:[#allocation2 + $0x32] sm:$0xff]
      %v3746 = vld [vmem:[#allocation2 + $0x3a] sm:$0xff]
      %v3747 = vld [vmem:[#allocation2 + $0x4a] sm:$0xff]
      %v3748 = vld [vmem:[#allocation2 + $0x52] sm:$0xff]
      %v3749 = vld [vmem:[#allocation2 + $0x62] sm:$0xff]
      %v3750 = vld [vmem:[#allocation2 + $0x6a] sm:$0xff]
      %v3751 = vld [vmem:[#allocation2 + $0x7a] sm:$0xff]
      %v3752 = vld [vmem:[#allocation2 + $0x82] sm:$0xff]
      %v3753 = vld [vmem:[#allocation2 + $0x92] sm:$0xff]
      %v3754 = vld [vmem:[#allocation2 + $0x9a] sm:$0xff]
      %v3755 = vld [vmem:[#allocation2 + $0xaa] sm:$0xff]
      %v3756 = vld [vmem:[#allocation2 + $0xb2] sm:$0xff]
      %v3757 = vld [vmem:[#allocation2 + $0xc2] sm:$0xff]
      %v3758 = vld [vmem:[#allocation2 + $0xca] sm:$0xff]
      %v3759 = vld [vmem:[#allocation2 + $0xda] sm:$0xff]
      %v3760 = vld [vmem:[#allocation2 + $0xe2] sm:$0xff]
      %v3761 = vld [vmem:[#allocation2 + $0xf2] sm:$0xff]
      %v3762 = vld [vmem:[#allocation2 + $0xfa] sm:$0xff]
      %v3763 = vld [vmem:[#allocation2 + $0x10a] sm:$0xff]
      %v3764 = vld [vmem:[#allocation2 + $0x112] sm:$0xff]
      %v3765 = vld [vmem:[#allocation2 + $0x122] sm:$0xff]
      %v3766 = vld [vmem:[#allocation2 + $0x12a] sm:$0xff]
      %v3767 = vld [vmem:[#allocation2 + $0x13a] sm:$0xff]
      %v3768 = vld [vmem:[#allocation2 + $0x142] sm:$0xff]
      %v3769 = vld [vmem:[#allocation2 + $0x152] sm:$0xff]
      %v3770 = vld [vmem:[#allocation2 + $0x15a] sm:$0xff]
      %v3771 = vld [vmem:[#allocation2 + $0x16a] sm:$0xff]
      %v3772 = vld [vmem:[#allocation2 + $0x172] sm:$0xff]
      %v3773 = vpack.c.bf16 %v3742, %v3741
      %v3774 = vpack.c.bf16 %v3744, %v3743
      %v3775 = vpack.c.bf16 %v3746, %v3745
      %v3776 = vpack.c.bf16 %v3748, %v3747
      %v3777 = vpack.c.bf16 %v3750, %v3749
      %v3778 = vpack.c.bf16 %v3752, %v3751
      %v3779 = vpack.c.bf16 %v3754, %v3753
      %v3780 = vpack.c.bf16 %v3756, %v3755
      %v3781 = vpack.c.bf16 %v3758, %v3757
      %v3782 = vpack.c.bf16 %v3760, %v3759
      %v3783 = vpack.c.bf16 %v3762, %v3761
      %v3784 = vpack.c.bf16 %v3764, %v3763
      %v3785 = vpack.c.bf16 %v3766, %v3765
      %v3786 = vpack.c.bf16 %v3768, %v3767
      %v3787 = vpack.c.bf16 %v3770, %v3769
      %v3788 = vpack.c.bf16 %v3772, %v3771
      %s3789 = scalar_lea.vmem %s3, 8
      %v3790 = vld [vmem:[%s3789] sm:$0xf]
      %v3792 = vsel %vm226, %v3773, 0
      %v3795 = vsel %vm226, %v3774, 0
      %v3798 = vsel %vm226, %v3775, 0
      %v3801 = vsel %vm226, %v3776, 0
      %v3804 = vsel %vm226, %v3777, 0
      %v3807 = vsel %vm226, %v3778, 0
      %v3810 = vsel %vm226, %v3779, 0
      %v3813 = vsel %vm226, %v3780, 0
      %v3816 = vsel %vm226, %v3781, 0
      %v3819 = vsel %vm226, %v3782, 0
      %v3822 = vsel %vm226, %v3783, 0
      %v3825 = vsel %vm226, %v3784, 0
      %v3828 = vsel %vm226, %v3785, 0
      %v3831 = vsel %vm226, %v3786, 0
      %v3834 = vsel %vm226, %v3787, 0
      %v3837 = vsel %vm226, %v3788, 0
      %v3840 = vsel %vm3364, %v3790, 0
      %3842 = vmatprep.subr.bf16.mxu0 0
      %3843 = vmatpush1.bf16.msra.mxu0 %v3840
      %3844 = vmatprep.subr.bf16.mxu0 0
      %3845 = vmatpush1.bf16.msra.mxu0 0
      %3846 = vmatprep.subr.bf16.mxu0 0
      %3847 = vmatpush1.bf16.msra.mxu0 0
      %3848 = vmatprep.subr.bf16.mxu0 0
      %3849 = vmatpush1.bf16.msra.mxu0 0
      %3850 = vmatprep.subr.bf16.mxu0 0
      %3851 = vmatpush1.bf16.msra.mxu0 0
      %3852 = vmatprep.subr.bf16.mxu0 0
      %3853 = vmatpush1.bf16.msra.mxu0 0
      %3854 = vmatprep.subr.bf16.mxu0 0
      %3855 = vmatpush1.bf16.msra.mxu0 0
      %3856 = vmatprep.subr.bf16.mxu0 0
      %3857 = vmatpush1.bf16.msra.mxu0 0
      %3858 = vmatprep.subr.bf16.mxu0 0
      %3859 = vmatpush1.bf16.msra.mxu0 0
      %3860 = vmatprep.subr.bf16.mxu0 0
      %3861 = vmatpush1.bf16.msra.mxu0 0
      %3862 = vmatprep.subr.bf16.mxu0 0
      %3863 = vmatpush1.bf16.msra.mxu0 0
      %3864 = vmatprep.subr.bf16.mxu0 0
      %3865 = vmatpush1.bf16.msra.mxu0 0
      %3866 = vmatprep.subr.bf16.mxu0 0
      %3867 = vmatpush1.bf16.msra.mxu0 0
      %3868 = vmatprep.subr.bf16.mxu0 0
      %3869 = vmatpush1.bf16.msra.mxu0 0
      %3870 = vmatprep.subr.bf16.mxu0 0
      %3871 = vmatpush1.bf16.msra.mxu0 0
      %3872 = vmatprep.subr.bf16.mxu0 0
      %3873 = vmatpush1.bf16.msra.mxu0 0
      %3874 = vmatprep.mubr.bf16.mxu0 0
      %3875 = vmatmul.mubr.bf16.gmra.mrb[0].mxu0 %v3792
      %v3876 = vpop.f32.mrb[0].mxu0
      %v3877 = vadd.f32 0.0, %v3876
      %v3878 = vpop.f32.mrb[0].mxu0
      %v3879 = vpop.f32.mrb[0].mxu0
      %v3880 = vadd.f32 0.0, %v3879
      %v3881 = vpop.f32.mrb[0].mxu0
      %3882 = vmatprep.mubr.bf16.mxu0 0
      %3883 = vmatmul.mubr.bf16.gmra.mrb[0].mxu0 %v3795
      %v3884 = vpop.f32.mrb[0].mxu0
      %v3885 = vadd.f32 0.0, %v3884
      %v3886 = vpop.f32.mrb[0].mxu0
      %v3887 = vpop.f32.mrb[0].mxu0
      %v3888 = vadd.f32 0.0, %v3887
      %v3889 = vpop.f32.mrb[0].mxu0
      %3890 = vmatprep.mubr.bf16.mxu0 0
      %3891 = vmatmul.mubr.bf16.gmra.mrb[0].mxu0 %v3798
      %v3892 = vpop.f32.mrb[0].mxu0
      %v3893 = vadd.f32 0.0, %v3892
      %v3894 = vpop.f32.mrb[0].mxu0
      %v3895 = vpop.f32.mrb[0].mxu0
      %v3896 = vadd.f32 0.0, %v3895
      %v3897 = vpop.f32.mrb[0].mxu0
      %3898 = vmatprep.mubr.bf16.mxu0 0
      %3899 = vmatmul.mubr.bf16.gmra.mrb[0].mxu0 %v3801
      %v3900 = vpop.f32.mrb[0].mxu0
      %v3901 = vadd.f32 0.0, %v3900
      %v3902 = vpop.f32.mrb[0].mxu0
      %v3903 = vpop.f32.mrb[0].mxu0
      %v3904 = vadd.f32 0.0, %v3903
      %v3905 = vpop.f32.mrb[0].mxu0
      %3906 = vmatprep.mubr.bf16.mxu0 0
      %3907 = vmatmul.mubr.bf16.gmra.mrb[0].mxu0 %v3804
      %v3908 = vpop.f32.mrb[0].mxu0
      %v3909 = vadd.f32 0.0, %v3908
      %v3910 = vpop.f32.mrb[0].mxu0
      %v3911 = vpop.f32.mrb[0].mxu0
      %v3912 = vadd.f32 0.0, %v3911
      %v3913 = vpop.f32.mrb[0].mxu0
      %3914 = vmatprep.mubr.bf16.mxu0 0
      %3915 = vmatmul.mubr.bf16.gmra.mrb[0].mxu0 %v3807
      %v3916 = vpop.f32.mrb[0].mxu0
      %v3917 = vadd.f32 0.0, %v3916
      %v3918 = vpop.f32.mrb[0].mxu0
      %v3919 = vpop.f32.mrb[0].mxu0
      %v3920 = vadd.f32 0.0, %v3919
      %v3921 = vpop.f32.mrb[0].mxu0
      %3922 = vmatprep.mubr.bf16.mxu0 0
      %3923 = vmatmul.mubr.bf16.gmra.mrb[0].mxu0 %v3810
      %v3924 = vpop.f32.mrb[0].mxu0
      %v3925 = vadd.f32 0.0, %v3924
      %v3926 = vpop.f32.mrb[0].mxu0
      %v3927 = vpop.f32.mrb[0].mxu0
      %v3928 = vadd.f32 0.0, %v3927
      %v3929 = vpop.f32.mrb[0].mxu0
      %3930 = vmatprep.mubr.bf16.mxu0 0
      %3931 = vmatmul.mubr.bf16.gmra.mrb[0].mxu0 %v3813
      %v3932 = vpop.f32.mrb[0].mxu0
      %v3933 = vadd.f32 0.0, %v3932
      %v3934 = vpop.f32.mrb[0].mxu0
      %v3935 = vpop.f32.mrb[0].mxu0
      %v3936 = vadd.f32 0.0, %v3935
      %v3937 = vpop.f32.mrb[0].mxu0
      %3938 = vmatprep.mubr.bf16.mxu0 0
      %3939 = vmatmul.mubr.bf16.gmra.mrb[0].mxu0 %v3816
      %v3940 = vpop.f32.mrb[0].mxu0
      %v3941 = vadd.f32 0.0, %v3940
      %v3942 = vpop.f32.mrb[0].mxu0
      %v3943 = vpop.f32.mrb[0].mxu0
      %v3944 = vadd.f32 0.0, %v3943
      %v3945 = vpop.f32.mrb[0].mxu0
      %3946 = vmatprep.mubr.bf16.mxu0 0
      %3947 = vmatmul.mubr.bf16.gmra.mrb[0].mxu0 %v3819
      %v3948 = vpop.f32.mrb[0].mxu0
      %v3949 = vadd.f32 0.0, %v3948
      %v3950 = vpop.f32.mrb[0].mxu0
      %v3951 = vpop.f32.mrb[0].mxu0
      %v3952 = vadd.f32 0.0, %v3951
      %v3953 = vpop.f32.mrb[0].mxu0
      %3954 = vmatprep.mubr.bf16.mxu0 0
      %3955 = vmatmul.mubr.bf16.gmra.mrb[0].mxu0 %v3822
      %v3956 = vpop.f32.mrb[0].mxu0
      %v3957 = vadd.f32 0.0, %v3956
      %v3958 = vpop.f32.mrb[0].mxu0
      %v3959 = vpop.f32.mrb[0].mxu0
      %v3960 = vadd.f32 0.0, %v3959
      %v3961 = vpop.f32.mrb[0].mxu0
      %3962 = vmatprep.mubr.bf16.mxu0 0
      %3963 = vmatmul.mubr.bf16.gmra.mrb[0].mxu0 %v3825
      %v3964 = vpop.f32.mrb[0].mxu0
      %v3965 = vadd.f32 0.0, %v3964
      %v3966 = vpop.f32.mrb[0].mxu0
      %v3967 = vpop.f32.mrb[0].mxu0
      %v3968 = vadd.f32 0.0, %v3967
      %v3969 = vpop.f32.mrb[0].mxu0
      %3970 = vmatprep.mubr.bf16.mxu0 0
      %3971 = vmatmul.mubr.bf16.gmra.mrb[0].mxu0 %v3828
      %v3972 = vpop.f32.mrb[0].mxu0
      %v3973 = vadd.f32 0.0, %v3972
      %v3974 = vpop.f32.mrb[0].mxu0
      %v3975 = vpop.f32.mrb[0].mxu0
      %v3976 = vadd.f32 0.0, %v3975
      %v3977 = vpop.f32.mrb[0].mxu0
      %3978 = vmatprep.mubr.bf16.mxu0 0
      %3979 = vmatmul.mubr.bf16.gmra.mrb[0].mxu0 %v3831
      %v3980 = vpop.f32.mrb[0].mxu0
      %v3981 = vadd.f32 0.0, %v3980
      %v3982 = vpop.f32.mrb[0].mxu0
      %v3983 = vpop.f32.mrb[0].mxu0
      %v3984 = vadd.f32 0.0, %v3983
      %v3985 = vpop.f32.mrb[0].mxu0
      %3986 = vmatprep.mubr.bf16.mxu0 0
      %3987 = vmatmul.mubr.bf16.gmra.mrb[0].mxu0 %v3834
      %v3988 = vpop.f32.mrb[0].mxu0
      %v3989 = vadd.f32 0.0, %v3988
      %v3990 = vpop.f32.mrb[0].mxu0
      %v3991 = vpop.f32.mrb[0].mxu0
      %v3992 = vadd.f32 0.0, %v3991
      %v3993 = vpop.f32.mrb[0].mxu0
      %3994 = vmatprep.mubr.bf16.mxu0 0
      %3995 = vmatmul.mubr.bf16.gmra.mrb[0].mxu0 %v3837
      %v3996 = vpop.f32.mrb[0].mxu0
      %v3997 = vadd.f32 0.0, %v3996
      %v3998 = vpop.f32.mrb[0].mxu0
      %v3999 = vpop.f32.mrb[0].mxu0
      %v4000 = vadd.f32 0.0, %v3999
      %v4001 = vpop.f32.mrb[0].mxu0
      %4002 = vdwg.mxu0
      %v4003 = vadd.f32 %v3615, %v3877
      %v4004 = vadd.f32 %v3618, %v3880
      %v4005 = vadd.f32 %v3623, %v3885
      %v4006 = vadd.f32 %v3626, %v3888
      %v4007 = vadd.f32 %v3631, %v3893
      %v4008 = vadd.f32 %v3634, %v3896
      %v4009 = vadd.f32 %v3639, %v3901
      %v4010 = vadd.f32 %v3642, %v3904
      %v4011 = vadd.f32 %v3647, %v3909
      %v4012 = vadd.f32 %v3650, %v3912
      %v4013 = vadd.f32 %v3655, %v3917
      %v4014 = vadd.f32 %v3658, %v3920
      %v4015 = vadd.f32 %v3663, %v3925
      %v4016 = vadd.f32 %v3666, %v3928
      %v4017 = vadd.f32 %v3671, %v3933
      %v4018 = vadd.f32 %v3674, %v3936
      %v4019 = vadd.f32 %v3679, %v3941
      %v4020 = vadd.f32 %v3682, %v3944
      %v4021 = vadd.f32 %v3687, %v3949
      %v4022 = vadd.f32 %v3690, %v3952
      %v4023 = vadd.f32 %v3695, %v3957
      %v4024 = vadd.f32 %v3698, %v3960
      %v4025 = vadd.f32 %v3703, %v3965
      %v4026 = vadd.f32 %v3706, %v3968
      %v4027 = vadd.f32 %v3711, %v3973
      %v4028 = vadd.f32 %v3714, %v3976
      %v4029 = vadd.f32 %v3719, %v3981
      %v4030 = vadd.f32 %v3722, %v3984
      %v4031 = vadd.f32 %v3727, %v3989
      %v4032 = vadd.f32 %v3730, %v3992
      %v4033 = vadd.f32 %v3735, %v3997
      %v4034 = vadd.f32 %v3738, %v4000
      %v4035 = vld [vmem:[%s304] sm:$0xff]
      %v4036 = vld [vmem:[%s304 + $0x8] sm:$0xff]
      %v4037 = vld [vmem:[%s304 + $0x18] sm:$0xff]
      %v4038 = vld [vmem:[%s304 + $0x20] sm:$0xff]
      %v4039 = vld [vmem:[%s304 + $0x30] sm:$0xff]
      %v4040 = vld [vmem:[%s304 + $0x38] sm:$0xff]
      %v4041 = vld [vmem:[%s304 + $0x48] sm:$0xff]
      %v4042 = vld [vmem:[%s304 + $0x50] sm:$0xff]
      %v4043 = vld [vmem:[%s304 + $0x60] sm:$0xff]
      %v4044 = vld [vmem:[%s304 + $0x68] sm:$0xff]
      %v4045 = vld [vmem:[%s304 + $0x78] sm:$0xff]
      %v4046 = vld [vmem:[%s304 + $0x80] sm:$0xff]
      %v4047 = vld [vmem:[%s304 + $0x90] sm:$0xff]
      %v4048 = vld [vmem:[%s304 + $0x98] sm:$0xff]
      %v4049 = vld [vmem:[%s304 + $0xa8] sm:$0xff]
      %v4050 = vld [vmem:[%s304 + $0xb0] sm:$0xff]
      %v4051 = vld [vmem:[%s304 + $0xc0] sm:$0xff]
      %v4052 = vld [vmem:[%s304 + $0xc8] sm:$0xff]
      %v4053 = vld [vmem:[%s304 + $0xd8] sm:$0xff]
      %v4054 = vld [vmem:[%s304 + $0xe0] sm:$0xff]
      %v4055 = vld [vmem:[%s304 + $0xf0] sm:$0xff]
      %v4056 = vld [vmem:[%s304 + $0xf8] sm:$0xff]
      %v4057 = vld [vmem:[%s304 + $0x108] sm:$0xff]
      %v4058 = vld [vmem:[%s304 + $0x110] sm:$0xff]
      %v4059 = vld [vmem:[%s304 + $0x120] sm:$0xff]
      %v4060 = vld [vmem:[%s304 + $0x128] sm:$0xff]
      %v4061 = vld [vmem:[%s304 + $0x138] sm:$0xff]
      %v4062 = vld [vmem:[%s304 + $0x140] sm:$0xff]
      %v4063 = vld [vmem:[%s304 + $0x150] sm:$0xff]
      %v4064 = vld [vmem:[%s304 + $0x158] sm:$0xff]
      %v4065 = vld [vmem:[%s304 + $0x168] sm:$0xff]
      %v4066 = vld [vmem:[%s304 + $0x170] sm:$0xff]
      %v4067 = vpack.c.bf16 %v4036, %v4035
      %v4068 = vpack.c.bf16 %v4038, %v4037
      %v4069 = vpack.c.bf16 %v4040, %v4039
      %v4070 = vpack.c.bf16 %v4042, %v4041
      %v4071 = vpack.c.bf16 %v4044, %v4043
      %v4072 = vpack.c.bf16 %v4046, %v4045
      %v4073 = vpack.c.bf16 %v4048, %v4047
      %v4074 = vpack.c.bf16 %v4050, %v4049
      %v4075 = vpack.c.bf16 %v4052, %v4051
      %v4076 = vpack.c.bf16 %v4054, %v4053
      %v4077 = vpack.c.bf16 %v4056, %v4055
      %v4078 = vpack.c.bf16 %v4058, %v4057
      %v4079 = vpack.c.bf16 %v4060, %v4059
      %v4080 = vpack.c.bf16 %v4062, %v4061
      %v4081 = vpack.c.bf16 %v4064, %v4063
      %v4082 = vpack.c.bf16 %v4066, %v4065
      %s4083 = scalar_lea.vmem %s3, 12
      %v4084 = vld [vmem:[%s4083] sm:$0xf]
      %v4086 = vsel %vm226, %v4067, 0
      %v4089 = vsel %vm226, %v4068, 0
      %v4092 = vsel %vm226, %v4069, 0
      %v4095 = vsel %vm226, %v4070, 0
      %v4098 = vsel %vm226, %v4071, 0
      %v4101 = vsel %vm226, %v4072, 0
      %v4104 = vsel %vm226, %v4073, 0
      %v4107 = vsel %vm226, %v4074, 0
      %v4110 = vsel %vm226, %v4075, 0
      %v4113 = vsel %vm226, %v4076, 0
      %v4116 = vsel %vm226, %v4077, 0
      %v4119 = vsel %vm226, %v4078, 0
      %v4122 = vsel %vm226, %v4079, 0
      %v4125 = vsel %vm226, %v4080, 0
      %v4128 = vsel %vm226, %v4081, 0
      %v4131 = vsel %vm226, %v4082, 0
      %v4134 = vsel %vm3364, %v4084, 0
      %4136 = vmatprep.subr.bf16.mxu0 0
      %4137 = vmatpush1.bf16.msra.mxu0 %v4134
      %4138 = vmatprep.subr.bf16.mxu0 0
      %4139 = vmatpush1.bf16.msra.mxu0 0
      %4140 = vmatprep.subr.bf16.mxu0 0
      %4141 = vmatpush1.bf16.msra.mxu0 0
      %4142 = vmatprep.subr.bf16.mxu0 0
      %4143 = vmatpush1.bf16.msra.mxu0 0
      %4144 = vmatprep.subr.bf16.mxu0 0
      %4145 = vmatpush1.bf16.msra.mxu0 0
      %4146 = vmatprep.subr.bf16.mxu0 0
      %4147 = vmatpush1.bf16.msra.mxu0 0
      %4148 = vmatprep.subr.bf16.mxu0 0
      %4149 = vmatpush1.bf16.msra.mxu0 0
      %4150 = vmatprep.subr.bf16.mxu0 0
      %4151 = vmatpush1.bf16.msra.mxu0 0
      %4152 = vmatprep.subr.bf16.mxu0 0
      %4153 = vmatpush1.bf16.msra.mxu0 0
      %4154 = vmatprep.subr.bf16.mxu0 0
      %4155 = vmatpush1.bf16.msra.mxu0 0
      %4156 = vmatprep.subr.bf16.mxu0 0
      %4157 = vmatpush1.bf16.msra.mxu0 0
      %4158 = vmatprep.subr.bf16.mxu0 0
      %4159 = vmatpush1.bf16.msra.mxu0 0
      %4160 = vmatprep.subr.bf16.mxu0 0
      %4161 = vmatpush1.bf16.msra.mxu0 0
      %4162 = vmatprep.subr.bf16.mxu0 0
      %4163 = vmatpush1.bf16.msra.mxu0 0
      %4164 = vmatprep.subr.bf16.mxu0 0
      %4165 = vmatpush1.bf16.msra.mxu0 0
      %4166 = vmatprep.subr.bf16.mxu0 0
      %4167 = vmatpush1.bf16.msra.mxu0 0
      %4168 = vmatprep.mubr.bf16.mxu0 0
      %4169 = vmatmul.mubr.bf16.gmra.mrb[0].mxu0 %v4086
      %v4170 = vpop.f32.mrb[0].mxu0
      %v4171 = vadd.f32 0.0, %v4170
      %v4172 = vpop.f32.mrb[0].mxu0
      %v4173 = vpop.f32.mrb[0].mxu0
      %v4174 = vadd.f32 0.0, %v4173
      %v4175 = vpop.f32.mrb[0].mxu0
      %4176 = vmatprep.mubr.bf16.mxu0 0
      %4177 = vmatmul.mubr.bf16.gmra.mrb[0].mxu0 %v4089
      %v4178 = vpop.f32.mrb[0].mxu0
      %v4179 = vadd.f32 0.0, %v4178
      %v4180 = vpop.f32.mrb[0].mxu0
      %v4181 = vpop.f32.mrb[0].mxu0
      %v4182 = vadd.f32 0.0, %v4181
      %v4183 = vpop.f32.mrb[0].mxu0
      %4184 = vmatprep.mubr.bf16.mxu0 0
      %4185 = vmatmul.mubr.bf16.gmra.mrb[0].mxu0 %v4092
      %v4186 = vpop.f32.mrb[0].mxu0
      %v4187 = vadd.f32 0.0, %v4186
      %v4188 = vpop.f32.mrb[0].mxu0
      %v4189 = vpop.f32.mrb[0].mxu0
      %v4190 = vadd.f32 0.0, %v4189
      %v4191 = vpop.f32.mrb[0].mxu0
      %4192 = vmatprep.mubr.bf16.mxu0 0
      %4193 = vmatmul.mubr.bf16.gmra.mrb[0].mxu0 %v4095
      %v4194 = vpop.f32.mrb[0].mxu0
      %v4195 = vadd.f32 0.0, %v4194
      %v4196 = vpop.f32.mrb[0].mxu0
      %v4197 = vpop.f32.mrb[0].mxu0
      %v4198 = vadd.f32 0.0, %v4197
      %v4199 = vpop.f32.mrb[0].mxu0
      %4200 = vmatprep.mubr.bf16.mxu0 0
      %4201 = vmatmul.mubr.bf16.gmra.mrb[0].mxu0 %v4098
      %v4202 = vpop.f32.mrb[0].mxu0
      %v4203 = vadd.f32 0.0, %v4202
      %v4204 = vpop.f32.mrb[0].mxu0
      %v4205 = vpop.f32.mrb[0].mxu0
      %v4206 = vadd.f32 0.0, %v4205
      %v4207 = vpop.f32.mrb[0].mxu0
      %4208 = vmatprep.mubr.bf16.mxu0 0
      %4209 = vmatmul.mubr.bf16.gmra.mrb[0].mxu0 %v4101
      %v4210 = vpop.f32.mrb[0].mxu0
      %v4211 = vadd.f32 0.0, %v4210
      %v4212 = vpop.f32.mrb[0].mxu0
      %v4213 = vpop.f32.mrb[0].mxu0
      %v4214 = vadd.f32 0.0, %v4213
      %v4215 = vpop.f32.mrb[0].mxu0
      %4216 = vmatprep.mubr.bf16.mxu0 0
      %4217 = vmatmul.mubr.bf16.gmra.mrb[0].mxu0 %v4104
      %v4218 = vpop.f32.mrb[0].mxu0
      %v4219 = vadd.f32 0.0, %v4218
      %v4220 = vpop.f32.mrb[0].mxu0
      %v4221 = vpop.f32.mrb[0].mxu0
      %v4222 = vadd.f32 0.0, %v4221
      %v4223 = vpop.f32.mrb[0].mxu0
      %4224 = vmatprep.mubr.bf16.mxu0 0
      %4225 = vmatmul.mubr.bf16.gmra.mrb[0].mxu0 %v4107
      %v4226 = vpop.f32.mrb[0].mxu0
      %v4227 = vadd.f32 0.0, %v4226
      %v4228 = vpop.f32.mrb[0].mxu0
      %v4229 = vpop.f32.mrb[0].mxu0
      %v4230 = vadd.f32 0.0, %v4229
      %v4231 = vpop.f32.mrb[0].mxu0
      %4232 = vmatprep.mubr.bf16.mxu0 0
      %4233 = vmatmul.mubr.bf16.gmra.mrb[0].mxu0 %v4110
      %v4234 = vpop.f32.mrb[0].mxu0
      %v4235 = vadd.f32 0.0, %v4234
      %v4236 = vpop.f32.mrb[0].mxu0
      %v4237 = vpop.f32.mrb[0].mxu0
      %v4238 = vadd.f32 0.0, %v4237
      %v4239 = vpop.f32.mrb[0].mxu0
      %4240 = vmatprep.mubr.bf16.mxu0 0
      %4241 = vmatmul.mubr.bf16.gmra.mrb[0].mxu0 %v4113
      %v4242 = vpop.f32.mrb[0].mxu0
      %v4243 = vadd.f32 0.0, %v4242
      %v4244 = vpop.f32.mrb[0].mxu0
      %v4245 = vpop.f32.mrb[0].mxu0
      %v4246 = vadd.f32 0.0, %v4245
      %v4247 = vpop.f32.mrb[0].mxu0
      %4248 = vmatprep.mubr.bf16.mxu0 0
      %4249 = vmatmul.mubr.bf16.gmra.mrb[0].mxu0 %v4116
      %v4250 = vpop.f32.mrb[0].mxu0
      %v4251 = vadd.f32 0.0, %v4250
      %v4252 = vpop.f32.mrb[0].mxu0
      %v4253 = vpop.f32.mrb[0].mxu0
      %v4254 = vadd.f32 0.0, %v4253
      %v4255 = vpop.f32.mrb[0].mxu0
      %4256 = vmatprep.mubr.bf16.mxu0 0
      %4257 = vmatmul.mubr.bf16.gmra.mrb[0].mxu0 %v4119
      %v4258 = vpop.f32.mrb[0].mxu0
      %v4259 = vadd.f32 0.0, %v4258
      %v4260 = vpop.f32.mrb[0].mxu0
      %v4261 = vpop.f32.mrb[0].mxu0
      %v4262 = vadd.f32 0.0, %v4261
      %v4263 = vpop.f32.mrb[0].mxu0
      %4264 = vmatprep.mubr.bf16.mxu0 0
      %4265 = vmatmul.mubr.bf16.gmra.mrb[0].mxu0 %v4122
      %v4266 = vpop.f32.mrb[0].mxu0
      %v4267 = vadd.f32 0.0, %v4266
      %v4268 = vpop.f32.mrb[0].mxu0
      %v4269 = vpop.f32.mrb[0].mxu0
      %v4270 = vadd.f32 0.0, %v4269
      %v4271 = vpop.f32.mrb[0].mxu0
      %4272 = vmatprep.mubr.bf16.mxu0 0
      %4273 = vmatmul.mubr.bf16.gmra.mrb[0].mxu0 %v4125
      %v4274 = vpop.f32.mrb[0].mxu0
      %v4275 = vadd.f32 0.0, %v4274
      %v4276 = vpop.f32.mrb[0].mxu0
      %v4277 = vpop.f32.mrb[0].mxu0
      %v4278 = vadd.f32 0.0, %v4277
      %v4279 = vpop.f32.mrb[0].mxu0
      %4280 = vmatprep.mubr.bf16.mxu0 0
      %4281 = vmatmul.mubr.bf16.gmra.mrb[0].mxu0 %v4128
      %v4282 = vpop.f32.mrb[0].mxu0
      %v4283 = vadd.f32 0.0, %v4282
      %v4284 = vpop.f32.mrb[0].mxu0
      %v4285 = vpop.f32.mrb[0].mxu0
      %v4286 = vadd.f32 0.0, %v4285
      %v4287 = vpop.f32.mrb[0].mxu0
      %4288 = vmatprep.mubr.bf16.mxu0 0
      %4289 = vmatmul.mubr.bf16.gmra.mrb[0].mxu0 %v4131
      %v4290 = vpop.f32.mrb[0].mxu0
      %v4291 = vadd.f32 0.0, %v4290
      %v4292 = vpop.f32.mrb[0].mxu0
      %v4293 = vpop.f32.mrb[0].mxu0
      %v4294 = vadd.f32 0.0, %v4293
      %v4295 = vpop.f32.mrb[0].mxu0
      %4296 = vdwg.mxu0
      %v4297 = vadd.f32 %v4003, %v4171
      %v4298 = vadd.f32 %v4004, %v4174
      %v4299 = vadd.f32 %v4005, %v4179
      %v4300 = vadd.f32 %v4006, %v4182
      %v4301 = vadd.f32 %v4007, %v4187
      %v4302 = vadd.f32 %v4008, %v4190
      %v4303 = vadd.f32 %v4009, %v4195
      %v4304 = vadd.f32 %v4010, %v4198
      %v4305 = vadd.f32 %v4011, %v4203
      %v4306 = vadd.f32 %v4012, %v4206
      %v4307 = vadd.f32 %v4013, %v4211
      %v4308 = vadd.f32 %v4014, %v4214
      %v4309 = vadd.f32 %v4015, %v4219
      %v4310 = vadd.f32 %v4016, %v4222
      %v4311 = vadd.f32 %v4017, %v4227
      %v4312 = vadd.f32 %v4018, %v4230
      %v4313 = vadd.f32 %v4019, %v4235
      %v4314 = vadd.f32 %v4020, %v4238
      %v4315 = vadd.f32 %v4021, %v4243
      %v4316 = vadd.f32 %v4022, %v4246
      %v4317 = vadd.f32 %v4023, %v4251
      %v4318 = vadd.f32 %v4024, %v4254
      %v4319 = vadd.f32 %v4025, %v4259
      %v4320 = vadd.f32 %v4026, %v4262
      %v4321 = vadd.f32 %v4027, %v4267
      %v4322 = vadd.f32 %v4028, %v4270
      %v4323 = vadd.f32 %v4029, %v4275
      %v4324 = vadd.f32 %v4030, %v4278
      %v4325 = vadd.f32 %v4031, %v4283
      %v4326 = vadd.f32 %v4032, %v4286
      %v4327 = vadd.f32 %v4033, %v4291
      %v4328 = vadd.f32 %v4034, %v4294
      %v4329 = vld [vmem:[%s304 + $0x1] sm:$0xff]
      %v4330 = vld [vmem:[%s304 + $0x9] sm:$0xff]
      %v4331 = vld [vmem:[%s304 + $0x19] sm:$0xff]
      %v4332 = vld [vmem:[%s304 + $0x21] sm:$0xff]
      %v4333 = vld [vmem:[%s304 + $0x31] sm:$0xff]
      %v4334 = vld [vmem:[%s304 + $0x39] sm:$0xff]
      %v4335 = vld [vmem:[%s304 + $0x49] sm:$0xff]
      %v4336 = vld [vmem:[%s304 + $0x51] sm:$0xff]
      %v4337 = vld [vmem:[%s304 + $0x61] sm:$0xff]
      %v4338 = vld [vmem:[%s304 + $0x69] sm:$0xff]
      %v4339 = vld [vmem:[%s304 + $0x79] sm:$0xff]
      %v4340 = vld [vmem:[%s304 + $0x81] sm:$0xff]
      %v4341 = vld [vmem:[%s304 + $0x91] sm:$0xff]
      %v4342 = vld [vmem:[%s304 + $0x99] sm:$0xff]
      %v4343 = vld [vmem:[%s304 + $0xa9] sm:$0xff]
      %v4344 = vld [vmem:[%s304 + $0xb1] sm:$0xff]
      %v4345 = vld [vmem:[%s304 + $0xc1] sm:$0xff]
      %v4346 = vld [vmem:[%s304 + $0xc9] sm:$0xff]
      %v4347 = vld [vmem:[%s304 + $0xd9] sm:$0xff]
      %v4348 = vld [vmem:[%s304 + $0xe1] sm:$0xff]
      %v4349 = vld [vmem:[%s304 + $0xf1] sm:$0xff]
      %v4350 = vld [vmem:[%s304 + $0xf9] sm:$0xff]
      %v4351 = vld [vmem:[%s304 + $0x109] sm:$0xff]
      %v4352 = vld [vmem:[%s304 + $0x111] sm:$0xff]
      %v4353 = vld [vmem:[%s304 + $0x121] sm:$0xff]
      %v4354 = vld [vmem:[%s304 + $0x129] sm:$0xff]
      %v4355 = vld [vmem:[%s304 + $0x139] sm:$0xff]
      %v4356 = vld [vmem:[%s304 + $0x141] sm:$0xff]
      %v4357 = vld [vmem:[%s304 + $0x151] sm:$0xff]
      %v4358 = vld [vmem:[%s304 + $0x159] sm:$0xff]
      %v4359 = vld [vmem:[%s304 + $0x169] sm:$0xff]
      %v4360 = vld [vmem:[%s304 + $0x171] sm:$0xff]
      %v4361 = vpack.c.bf16 %v4330, %v4329
      %v4362 = vpack.c.bf16 %v4332, %v4331
      %v4363 = vpack.c.bf16 %v4334, %v4333
      %v4364 = vpack.c.bf16 %v4336, %v4335
      %v4365 = vpack.c.bf16 %v4338, %v4337
      %v4366 = vpack.c.bf16 %v4340, %v4339
      %v4367 = vpack.c.bf16 %v4342, %v4341
      %v4368 = vpack.c.bf16 %v4344, %v4343
      %v4369 = vpack.c.bf16 %v4346, %v4345
      %v4370 = vpack.c.bf16 %v4348, %v4347
      %v4371 = vpack.c.bf16 %v4350, %v4349
      %v4372 = vpack.c.bf16 %v4352, %v4351
      %v4373 = vpack.c.bf16 %v4354, %v4353
      %v4374 = vpack.c.bf16 %v4356, %v4355
      %v4375 = vpack.c.bf16 %v4358, %v4357
      %v4376 = vpack.c.bf16 %v4360, %v4359
      %s4377 = scalar_lea.vmem %s3, 16
      %v4378 = vld [vmem:[%s4377] sm:$0xf]
      %v4380 = vsel %vm226, %v4361, 0
      %v4383 = vsel %vm226, %v4362, 0
      %v4386 = vsel %vm226, %v4363, 0
      %v4389 = vsel %vm226, %v4364, 0
      %v4392 = vsel %vm226, %v4365, 0
      %v4395 = vsel %vm226, %v4366, 0
      %v4398 = vsel %vm226, %v4367, 0
      %v4401 = vsel %vm226, %v4368, 0
      %v4404 = vsel %vm226, %v4369, 0
      %v4407 = vsel %vm226, %v4370, 0
      %v4410 = vsel %vm226, %v4371, 0
      %v4413 = vsel %vm226, %v4372, 0
      %v4416 = vsel %vm226, %v4373, 0
      %v4419 = vsel %vm226, %v4374, 0
      %v4422 = vsel %vm226, %v4375, 0
      %v4425 = vsel %vm226, %v4376, 0
      %v4428 = vsel %vm3364, %v4378, 0
      %4430 = vmatprep.subr.bf16.mxu0 0
      %4431 = vmatpush1.bf16.msra.mxu0 %v4428
      %4432 = vmatprep.subr.bf16.mxu0 0
      %4433 = vmatpush1.bf16.msra.mxu0 0
      %4434 = vmatprep.subr.bf16.mxu0 0
      %4435 = vmatpush1.bf16.msra.mxu0 0
      %4436 = vmatprep.subr.bf16.mxu0 0
      %4437 = vmatpush1.bf16.msra.mxu0 0
      %4438 = vmatprep.subr.bf16.mxu0 0
      %4439 = vmatpush1.bf16.msra.mxu0 0
      %4440 = vmatprep.subr.bf16.mxu0 0
      %4441 = vmatpush1.bf16.msra.mxu0 0
      %4442 = vmatprep.subr.bf16.mxu0 0
      %4443 = vmatpush1.bf16.msra.mxu0 0
      %4444 = vmatprep.subr.bf16.mxu0 0
      %4445 = vmatpush1.bf16.msra.mxu0 0
      %4446 = vmatprep.subr.bf16.mxu0 0
      %4447 = vmatpush1.bf16.msra.mxu0 0
      %4448 = vmatprep.subr.bf16.mxu0 0
      %4449 = vmatpush1.bf16.msra.mxu0 0
      %4450 = vmatprep.subr.bf16.mxu0 0
      %4451 = vmatpush1.bf16.msra.mxu0 0
      %4452 = vmatprep.subr.bf16.mxu0 0
      %4453 = vmatpush1.bf16.msra.mxu0 0
      %4454 = vmatprep.subr.bf16.mxu0 0
      %4455 = vmatpush1.bf16.msra.mxu0 0
      %4456 = vmatprep.subr.bf16.mxu0 0
      %4457 = vmatpush1.bf16.msra.mxu0 0
      %4458 = vmatprep.subr.bf16.mxu0 0
      %4459 = vmatpush1.bf16.msra.mxu0 0
      %4460 = vmatprep.subr.bf16.mxu0 0
      %4461 = vmatpush1.bf16.msra.mxu0 0
      %4462 = vmatprep.mubr.bf16.mxu0 0
      %4463 = vmatmul.mubr.bf16.gmra.mrb[0].mxu0 %v4380
      %v4464 = vpop.f32.mrb[0].mxu0
      %v4465 = vadd.f32 0.0, %v4464
      %v4466 = vpop.f32.mrb[0].mxu0
      %v4467 = vpop.f32.mrb[0].mxu0
      %v4468 = vadd.f32 0.0, %v4467
      %v4469 = vpop.f32.mrb[0].mxu0
      %4470 = vmatprep.mubr.bf16.mxu0 0
      %4471 = vmatmul.mubr.bf16.gmra.mrb[0].mxu0 %v4383
      %v4472 = vpop.f32.mrb[0].mxu0
      %v4473 = vadd.f32 0.0, %v4472
      %v4474 = vpop.f32.mrb[0].mxu0
      %v4475 = vpop.f32.mrb[0].mxu0
      %v4476 = vadd.f32 0.0, %v4475
      %v4477 = vpop.f32.mrb[0].mxu0
      %4478 = vmatprep.mubr.bf16.mxu0 0
      %4479 = vmatmul.mubr.bf16.gmra.mrb[0].mxu0 %v4386
      %v4480 = vpop.f32.mrb[0].mxu0
      %v4481 = vadd.f32 0.0, %v4480
      %v4482 = vpop.f32.mrb[0].mxu0
      %v4483 = vpop.f32.mrb[0].mxu0
      %v4484 = vadd.f32 0.0, %v4483
      %v4485 = vpop.f32.mrb[0].mxu0
      %4486 = vmatprep.mubr.bf16.mxu0 0
      %4487 = vmatmul.mubr.bf16.gmra.mrb[0].mxu0 %v4389
      %v4488 = vpop.f32.mrb[0].mxu0
      %v4489 = vadd.f32 0.0, %v4488
      %v4490 = vpop.f32.mrb[0].mxu0
      %v4491 = vpop.f32.mrb[0].mxu0
      %v4492 = vadd.f32 0.0, %v4491
      %v4493 = vpop.f32.mrb[0].mxu0
      %4494 = vmatprep.mubr.bf16.mxu0 0
      %4495 = vmatmul.mubr.bf16.gmra.mrb[0].mxu0 %v4392
      %v4496 = vpop.f32.mrb[0].mxu0
      %v4497 = vadd.f32 0.0, %v4496
      %v4498 = vpop.f32.mrb[0].mxu0
      %v4499 = vpop.f32.mrb[0].mxu0
      %v4500 = vadd.f32 0.0, %v4499
      %v4501 = vpop.f32.mrb[0].mxu0
      %4502 = vmatprep.mubr.bf16.mxu0 0
      %4503 = vmatmul.mubr.bf16.gmra.mrb[0].mxu0 %v4395
      %v4504 = vpop.f32.mrb[0].mxu0
      %v4505 = vadd.f32 0.0, %v4504
      %v4506 = vpop.f32.mrb[0].mxu0
      %v4507 = vpop.f32.mrb[0].mxu0
      %v4508 = vadd.f32 0.0, %v4507
      %v4509 = vpop.f32.mrb[0].mxu0
      %4510 = vmatprep.mubr.bf16.mxu0 0
      %4511 = vmatmul.mubr.bf16.gmra.mrb[0].mxu0 %v4398
      %v4512 = vpop.f32.mrb[0].mxu0
      %v4513 = vadd.f32 0.0, %v4512
      %v4514 = vpop.f32.mrb[0].mxu0
      %v4515 = vpop.f32.mrb[0].mxu0
      %v4516 = vadd.f32 0.0, %v4515
      %v4517 = vpop.f32.mrb[0].mxu0
      %4518 = vmatprep.mubr.bf16.mxu0 0
      %4519 = vmatmul.mubr.bf16.gmra.mrb[0].mxu0 %v4401
      %v4520 = vpop.f32.mrb[0].mxu0
      %v4521 = vadd.f32 0.0, %v4520
      %v4522 = vpop.f32.mrb[0].mxu0
      %v4523 = vpop.f32.mrb[0].mxu0
      %v4524 = vadd.f32 0.0, %v4523
      %v4525 = vpop.f32.mrb[0].mxu0
      %4526 = vmatprep.mubr.bf16.mxu0 0
      %4527 = vmatmul.mubr.bf16.gmra.mrb[0].mxu0 %v4404
      %v4528 = vpop.f32.mrb[0].mxu0
      %v4529 = vadd.f32 0.0, %v4528
      %v4530 = vpop.f32.mrb[0].mxu0
      %v4531 = vpop.f32.mrb[0].mxu0
      %v4532 = vadd.f32 0.0, %v4531
      %v4533 = vpop.f32.mrb[0].mxu0
      %4534 = vmatprep.mubr.bf16.mxu0 0
      %4535 = vmatmul.mubr.bf16.gmra.mrb[0].mxu0 %v4407
      %v4536 = vpop.f32.mrb[0].mxu0
      %v4537 = vadd.f32 0.0, %v4536
      %v4538 = vpop.f32.mrb[0].mxu0
      %v4539 = vpop.f32.mrb[0].mxu0
      %v4540 = vadd.f32 0.0, %v4539
      %v4541 = vpop.f32.mrb[0].mxu0
      %4542 = vmatprep.mubr.bf16.mxu0 0
      %4543 = vmatmul.mubr.bf16.gmra.mrb[0].mxu0 %v4410
      %v4544 = vpop.f32.mrb[0].mxu0
      %v4545 = vadd.f32 0.0, %v4544
      %v4546 = vpop.f32.mrb[0].mxu0
      %v4547 = vpop.f32.mrb[0].mxu0
      %v4548 = vadd.f32 0.0, %v4547
      %v4549 = vpop.f32.mrb[0].mxu0
      %4550 = vmatprep.mubr.bf16.mxu0 0
      %4551 = vmatmul.mubr.bf16.gmra.mrb[0].mxu0 %v4413
      %v4552 = vpop.f32.mrb[0].mxu0
      %v4553 = vadd.f32 0.0, %v4552
      %v4554 = vpop.f32.mrb[0].mxu0
      %v4555 = vpop.f32.mrb[0].mxu0
      %v4556 = vadd.f32 0.0, %v4555
      %v4557 = vpop.f32.mrb[0].mxu0
      %4558 = vmatprep.mubr.bf16.mxu0 0
      %4559 = vmatmul.mubr.bf16.gmra.mrb[0].mxu0 %v4416
      %v4560 = vpop.f32.mrb[0].mxu0
      %v4561 = vadd.f32 0.0, %v4560
      %v4562 = vpop.f32.mrb[0].mxu0
      %v4563 = vpop.f32.mrb[0].mxu0
      %v4564 = vadd.f32 0.0, %v4563
      %v4565 = vpop.f32.mrb[0].mxu0
      %4566 = vmatprep.mubr.bf16.mxu0 0
      %4567 = vmatmul.mubr.bf16.gmra.mrb[0].mxu0 %v4419
      %v4568 = vpop.f32.mrb[0].mxu0
      %v4569 = vadd.f32 0.0, %v4568
      %v4570 = vpop.f32.mrb[0].mxu0
      %v4571 = vpop.f32.mrb[0].mxu0
      %v4572 = vadd.f32 0.0, %v4571
      %v4573 = vpop.f32.mrb[0].mxu0
      %4574 = vmatprep.mubr.bf16.mxu0 0
      %4575 = vmatmul.mubr.bf16.gmra.mrb[0].mxu0 %v4422
      %v4576 = vpop.f32.mrb[0].mxu0
      %v4577 = vadd.f32 0.0, %v4576
      %v4578 = vpop.f32.mrb[0].mxu0
      %v4579 = vpop.f32.mrb[0].mxu0
      %v4580 = vadd.f32 0.0, %v4579
      %v4581 = vpop.f32.mrb[0].mxu0
      %4582 = vmatprep.mubr.bf16.mxu0 0
      %4583 = vmatmul.mubr.bf16.gmra.mrb[0].mxu0 %v4425
      %v4584 = vpop.f32.mrb[0].mxu0
      %v4585 = vadd.f32 0.0, %v4584
      %v4586 = vpop.f32.mrb[0].mxu0
      %v4587 = vpop.f32.mrb[0].mxu0
      %v4588 = vadd.f32 0.0, %v4587
      %v4589 = vpop.f32.mrb[0].mxu0
      %4590 = vdwg.mxu0
      %v4591 = vadd.f32 %v4297, %v4465
      %v4592 = vadd.f32 %v4298, %v4468
      %v4593 = vadd.f32 %v4299, %v4473
      %v4594 = vadd.f32 %v4300, %v4476
      %v4595 = vadd.f32 %v4301, %v4481
      %v4596 = vadd.f32 %v4302, %v4484
      %v4597 = vadd.f32 %v4303, %v4489
      %v4598 = vadd.f32 %v4304, %v4492
      %v4599 = vadd.f32 %v4305, %v4497
      %v4600 = vadd.f32 %v4306, %v4500
      %v4601 = vadd.f32 %v4307, %v4505
      %v4602 = vadd.f32 %v4308, %v4508
      %v4603 = vadd.f32 %v4309, %v4513
      %v4604 = vadd.f32 %v4310, %v4516
      %v4605 = vadd.f32 %v4311, %v4521
      %v4606 = vadd.f32 %v4312, %v4524
      %v4607 = vadd.f32 %v4313, %v4529
      %v4608 = vadd.f32 %v4314, %v4532
      %v4609 = vadd.f32 %v4315, %v4537
      %v4610 = vadd.f32 %v4316, %v4540
      %v4611 = vadd.f32 %v4317, %v4545
      %v4612 = vadd.f32 %v4318, %v4548
      %v4613 = vadd.f32 %v4319, %v4553
      %v4614 = vadd.f32 %v4320, %v4556
      %v4615 = vadd.f32 %v4321, %v4561
      %v4616 = vadd.f32 %v4322, %v4564
      %v4617 = vadd.f32 %v4323, %v4569
      %v4618 = vadd.f32 %v4324, %v4572
      %v4619 = vadd.f32 %v4325, %v4577
      %v4620 = vadd.f32 %v4326, %v4580
      %v4621 = vadd.f32 %v4327, %v4585
      %v4622 = vadd.f32 %v4328, %v4588
      %v4623 = vld [vmem:[%s304 + $0x2] sm:$0xff]
      %v4624 = vld [vmem:[%s304 + $0xa] sm:$0xff]
      %v4625 = vld [vmem:[%s304 + $0x1a] sm:$0xff]
      %v4626 = vld [vmem:[%s304 + $0x22] sm:$0xff]
      %v4627 = vld [vmem:[%s304 + $0x32] sm:$0xff]
      %v4628 = vld [vmem:[%s304 + $0x3a] sm:$0xff]
      %v4629 = vld [vmem:[%s304 + $0x4a] sm:$0xff]
      %v4630 = vld [vmem:[%s304 + $0x52] sm:$0xff]
      %v4631 = vld [vmem:[%s304 + $0x62] sm:$0xff]
      %v4632 = vld [vmem:[%s304 + $0x6a] sm:$0xff]
      %v4633 = vld [vmem:[%s304 + $0x7a] sm:$0xff]
      %v4634 = vld [vmem:[%s304 + $0x82] sm:$0xff]
      %v4635 = vld [vmem:[%s304 + $0x92] sm:$0xff]
      %v4636 = vld [vmem:[%s304 + $0x9a] sm:$0xff]
      %v4637 = vld [vmem:[%s304 + $0xaa] sm:$0xff]
      %v4638 = vld [vmem:[%s304 + $0xb2] sm:$0xff]
      %v4639 = vld [vmem:[%s304 + $0xc2] sm:$0xff]
      %v4640 = vld [vmem:[%s304 + $0xca] sm:$0xff]
      %v4641 = vld [vmem:[%s304 + $0xda] sm:$0xff]
      %v4642 = vld [vmem:[%s304 + $0xe2] sm:$0xff]
      %v4643 = vld [vmem:[%s304 + $0xf2] sm:$0xff]
      %v4644 = vld [vmem:[%s304 + $0xfa] sm:$0xff]
      %v4645 = vld [vmem:[%s304 + $0x10a] sm:$0xff]
      %v4646 = vld [vmem:[%s304 + $0x112] sm:$0xff]
      %v4647 = vld [vmem:[%s304 + $0x122] sm:$0xff]
      %v4648 = vld [vmem:[%s304 + $0x12a] sm:$0xff]
      %v4649 = vld [vmem:[%s304 + $0x13a] sm:$0xff]
      %v4650 = vld [vmem:[%s304 + $0x142] sm:$0xff]
      %v4651 = vld [vmem:[%s304 + $0x152] sm:$0xff]
      %v4652 = vld [vmem:[%s304 + $0x15a] sm:$0xff]
      %v4653 = vld [vmem:[%s304 + $0x16a] sm:$0xff]
      %v4654 = vld [vmem:[%s304 + $0x172] sm:$0xff]
      %v4655 = vpack.c.bf16 %v4624, %v4623
      %v4656 = vpack.c.bf16 %v4626, %v4625
      %v4657 = vpack.c.bf16 %v4628, %v4627
      %v4658 = vpack.c.bf16 %v4630, %v4629
      %v4659 = vpack.c.bf16 %v4632, %v4631
      %v4660 = vpack.c.bf16 %v4634, %v4633
      %v4661 = vpack.c.bf16 %v4636, %v4635
      %v4662 = vpack.c.bf16 %v4638, %v4637
      %v4663 = vpack.c.bf16 %v4640, %v4639
      %v4664 = vpack.c.bf16 %v4642, %v4641
      %v4665 = vpack.c.bf16 %v4644, %v4643
      %v4666 = vpack.c.bf16 %v4646, %v4645
      %v4667 = vpack.c.bf16 %v4648, %v4647
      %v4668 = vpack.c.bf16 %v4650, %v4649
      %v4669 = vpack.c.bf16 %v4652, %v4651
      %v4670 = vpack.c.bf16 %v4654, %v4653
      %s4671 = scalar_lea.vmem %s3, 20
      %v4672 = vld [vmem:[%s4671] sm:$0xf]
      %v4674 = vsel %vm226, %v4655, 0
      %v4677 = vsel %vm226, %v4656, 0
      %v4680 = vsel %vm226, %v4657, 0
      %v4683 = vsel %vm226, %v4658, 0
      %v4686 = vsel %vm226, %v4659, 0
      %v4689 = vsel %vm226, %v4660, 0
      %v4692 = vsel %vm226, %v4661, 0
      %v4695 = vsel %vm226, %v4662, 0
      %v4698 = vsel %vm226, %v4663, 0
      %v4701 = vsel %vm226, %v4664, 0
      %v4704 = vsel %vm226, %v4665, 0
      %v4707 = vsel %vm226, %v4666, 0
      %v4710 = vsel %vm226, %v4667, 0
      %v4713 = vsel %vm226, %v4668, 0
      %v4716 = vsel %vm226, %v4669, 0
      %v4719 = vsel %vm226, %v4670, 0
      %v4722 = vsel %vm3364, %v4672, 0
      %4724 = vmatprep.subr.bf16.mxu0 0
      %4725 = vmatpush1.bf16.msra.mxu0 %v4722
      %4726 = vmatprep.subr.bf16.mxu0 0
      %4727 = vmatpush1.bf16.msra.mxu0 0
      %4728 = vmatprep.subr.bf16.mxu0 0
      %4729 = vmatpush1.bf16.msra.mxu0 0
      %4730 = vmatprep.subr.bf16.mxu0 0
      %4731 = vmatpush1.bf16.msra.mxu0 0
      %4732 = vmatprep.subr.bf16.mxu0 0
      %4733 = vmatpush1.bf16.msra.mxu0 0
      %4734 = vmatprep.subr.bf16.mxu0 0
      %4735 = vmatpush1.bf16.msra.mxu0 0
      %4736 = vmatprep.subr.bf16.mxu0 0
      %4737 = vmatpush1.bf16.msra.mxu0 0
      %4738 = vmatprep.subr.bf16.mxu0 0
      %4739 = vmatpush1.bf16.msra.mxu0 0
      %4740 = vmatprep.subr.bf16.mxu0 0
      %4741 = vmatpush1.bf16.msra.mxu0 0
      %4742 = vmatprep.subr.bf16.mxu0 0
      %4743 = vmatpush1.bf16.msra.mxu0 0
      %4744 = vmatprep.subr.bf16.mxu0 0
      %4745 = vmatpush1.bf16.msra.mxu0 0
      %4746 = vmatprep.subr.bf16.mxu0 0
      %4747 = vmatpush1.bf16.msra.mxu0 0
      %4748 = vmatprep.subr.bf16.mxu0 0
      %4749 = vmatpush1.bf16.msra.mxu0 0
      %4750 = vmatprep.subr.bf16.mxu0 0
      %4751 = vmatpush1.bf16.msra.mxu0 0
      %4752 = vmatprep.subr.bf16.mxu0 0
      %4753 = vmatpush1.bf16.msra.mxu0 0
      %4754 = vmatprep.subr.bf16.mxu0 0
      %4755 = vmatpush1.bf16.msra.mxu0 0
      %4756 = vmatprep.mubr.bf16.mxu0 0
      %4757 = vmatmul.mubr.bf16.gmra.mrb[0].mxu0 %v4674
      %v4758 = vpop.f32.mrb[0].mxu0
      %v4759 = vadd.f32 0.0, %v4758
      %v4760 = vpop.f32.mrb[0].mxu0
      %v4761 = vpop.f32.mrb[0].mxu0
      %v4762 = vadd.f32 0.0, %v4761
      %v4763 = vpop.f32.mrb[0].mxu0
      %4764 = vmatprep.mubr.bf16.mxu0 0
      %4765 = vmatmul.mubr.bf16.gmra.mrb[0].mxu0 %v4677
      %v4766 = vpop.f32.mrb[0].mxu0
      %v4767 = vadd.f32 0.0, %v4766
      %v4768 = vpop.f32.mrb[0].mxu0
      %v4769 = vpop.f32.mrb[0].mxu0
      %v4770 = vadd.f32 0.0, %v4769
      %v4771 = vpop.f32.mrb[0].mxu0
      %4772 = vmatprep.mubr.bf16.mxu0 0
      %4773 = vmatmul.mubr.bf16.gmra.mrb[0].mxu0 %v4680
      %v4774 = vpop.f32.mrb[0].mxu0
      %v4775 = vadd.f32 0.0, %v4774
      %v4776 = vpop.f32.mrb[0].mxu0
      %v4777 = vpop.f32.mrb[0].mxu0
      %v4778 = vadd.f32 0.0, %v4777
      %v4779 = vpop.f32.mrb[0].mxu0
      %4780 = vmatprep.mubr.bf16.mxu0 0
      %4781 = vmatmul.mubr.bf16.gmra.mrb[0].mxu0 %v4683
      %v4782 = vpop.f32.mrb[0].mxu0
      %v4783 = vadd.f32 0.0, %v4782
      %v4784 = vpop.f32.mrb[0].mxu0
      %v4785 = vpop.f32.mrb[0].mxu0
      %v4786 = vadd.f32 0.0, %v4785
      %v4787 = vpop.f32.mrb[0].mxu0
      %4788 = vmatprep.mubr.bf16.mxu0 0
      %4789 = vmatmul.mubr.bf16.gmra.mrb[0].mxu0 %v4686
      %v4790 = vpop.f32.mrb[0].mxu0
      %v4791 = vadd.f32 0.0, %v4790
      %v4792 = vpop.f32.mrb[0].mxu0
      %v4793 = vpop.f32.mrb[0].mxu0
      %v4794 = vadd.f32 0.0, %v4793
      %v4795 = vpop.f32.mrb[0].mxu0
      %4796 = vmatprep.mubr.bf16.mxu0 0
      %4797 = vmatmul.mubr.bf16.gmra.mrb[0].mxu0 %v4689
      %v4798 = vpop.f32.mrb[0].mxu0
      %v4799 = vadd.f32 0.0, %v4798
      %v4800 = vpop.f32.mrb[0].mxu0
      %v4801 = vpop.f32.mrb[0].mxu0
      %v4802 = vadd.f32 0.0, %v4801
      %v4803 = vpop.f32.mrb[0].mxu0
      %4804 = vmatprep.mubr.bf16.mxu0 0
      %4805 = vmatmul.mubr.bf16.gmra.mrb[0].mxu0 %v4692
      %v4806 = vpop.f32.mrb[0].mxu0
      %v4807 = vadd.f32 0.0, %v4806
      %v4808 = vpop.f32.mrb[0].mxu0
      %v4809 = vpop.f32.mrb[0].mxu0
      %v4810 = vadd.f32 0.0, %v4809
      %v4811 = vpop.f32.mrb[0].mxu0
      %4812 = vmatprep.mubr.bf16.mxu0 0
      %4813 = vmatmul.mubr.bf16.gmra.mrb[0].mxu0 %v4695
      %v4814 = vpop.f32.mrb[0].mxu0
      %v4815 = vadd.f32 0.0, %v4814
      %v4816 = vpop.f32.mrb[0].mxu0
      %v4817 = vpop.f32.mrb[0].mxu0
      %v4818 = vadd.f32 0.0, %v4817
      %v4819 = vpop.f32.mrb[0].mxu0
      %4820 = vmatprep.mubr.bf16.mxu0 0
      %4821 = vmatmul.mubr.bf16.gmra.mrb[0].mxu0 %v4698
      %v4822 = vpop.f32.mrb[0].mxu0
      %v4823 = vadd.f32 0.0, %v4822
      %v4824 = vpop.f32.mrb[0].mxu0
      %v4825 = vpop.f32.mrb[0].mxu0
      %v4826 = vadd.f32 0.0, %v4825
      %v4827 = vpop.f32.mrb[0].mxu0
      %4828 = vmatprep.mubr.bf16.mxu0 0
      %4829 = vmatmul.mubr.bf16.gmra.mrb[0].mxu0 %v4701
      %v4830 = vpop.f32.mrb[0].mxu0
      %v4831 = vadd.f32 0.0, %v4830
      %v4832 = vpop.f32.mrb[0].mxu0
      %v4833 = vpop.f32.mrb[0].mxu0
      %v4834 = vadd.f32 0.0, %v4833
      %v4835 = vpop.f32.mrb[0].mxu0
      %4836 = vmatprep.mubr.bf16.mxu0 0
      %4837 = vmatmul.mubr.bf16.gmra.mrb[0].mxu0 %v4704
      %v4838 = vpop.f32.mrb[0].mxu0
      %v4839 = vadd.f32 0.0, %v4838
      %v4840 = vpop.f32.mrb[0].mxu0
      %v4841 = vpop.f32.mrb[0].mxu0
      %v4842 = vadd.f32 0.0, %v4841
      %v4843 = vpop.f32.mrb[0].mxu0
      %4844 = vmatprep.mubr.bf16.mxu0 0
      %4845 = vmatmul.mubr.bf16.gmra.mrb[0].mxu0 %v4707
      %v4846 = vpop.f32.mrb[0].mxu0
      %v4847 = vadd.f32 0.0, %v4846
      %v4848 = vpop.f32.mrb[0].mxu0
      %v4849 = vpop.f32.mrb[0].mxu0
      %v4850 = vadd.f32 0.0, %v4849
      %v4851 = vpop.f32.mrb[0].mxu0
      %4852 = vmatprep.mubr.bf16.mxu0 0
      %4853 = vmatmul.mubr.bf16.gmra.mrb[0].mxu0 %v4710
      %v4854 = vpop.f32.mrb[0].mxu0
      %v4855 = vadd.f32 0.0, %v4854
      %v4856 = vpop.f32.mrb[0].mxu0
      %v4857 = vpop.f32.mrb[0].mxu0
      %v4858 = vadd.f32 0.0, %v4857
      %v4859 = vpop.f32.mrb[0].mxu0
      %4860 = vmatprep.mubr.bf16.mxu0 0
      %4861 = vmatmul.mubr.bf16.gmra.mrb[0].mxu0 %v4713
      %v4862 = vpop.f32.mrb[0].mxu0
      %v4863 = vadd.f32 0.0, %v4862
      %v4864 = vpop.f32.mrb[0].mxu0
      %v4865 = vpop.f32.mrb[0].mxu0
      %v4866 = vadd.f32 0.0, %v4865
      %v4867 = vpop.f32.mrb[0].mxu0
      %4868 = vmatprep.mubr.bf16.mxu0 0
      %4869 = vmatmul.mubr.bf16.gmra.mrb[0].mxu0 %v4716
      %v4870 = vpop.f32.mrb[0].mxu0
      %v4871 = vadd.f32 0.0, %v4870
      %v4872 = vpop.f32.mrb[0].mxu0
      %v4873 = vpop.f32.mrb[0].mxu0
      %v4874 = vadd.f32 0.0, %v4873
      %v4875 = vpop.f32.mrb[0].mxu0
      %4876 = vmatprep.mubr.bf16.mxu0 0
      %4877 = vmatmul.mubr.bf16.gmra.mrb[0].mxu0 %v4719
      %v4878 = vpop.f32.mrb[0].mxu0
      %v4879 = vadd.f32 0.0, %v4878
      %v4880 = vpop.f32.mrb[0].mxu0
      %v4881 = vpop.f32.mrb[0].mxu0
      %v4882 = vadd.f32 0.0, %v4881
      %v4883 = vpop.f32.mrb[0].mxu0
      %4884 = vdwg.mxu0
      %v4885 = vadd.f32 %v4591, %v4759
      %v4886 = vadd.f32 %v4592, %v4762
      %v4887 = vadd.f32 %v4593, %v4767
      %v4888 = vadd.f32 %v4594, %v4770
      %v4889 = vadd.f32 %v4595, %v4775
      %v4890 = vadd.f32 %v4596, %v4778
      %v4891 = vadd.f32 %v4597, %v4783
      %v4892 = vadd.f32 %v4598, %v4786
      %v4893 = vadd.f32 %v4599, %v4791
      %v4894 = vadd.f32 %v4600, %v4794
      %v4895 = vadd.f32 %v4601, %v4799
      %v4896 = vadd.f32 %v4602, %v4802
      %v4897 = vadd.f32 %v4603, %v4807
      %v4898 = vadd.f32 %v4604, %v4810
      %v4899 = vadd.f32 %v4605, %v4815
      %v4900 = vadd.f32 %v4606, %v4818
      %v4901 = vadd.f32 %v4607, %v4823
      %v4902 = vadd.f32 %v4608, %v4826
      %v4903 = vadd.f32 %v4609, %v4831
      %v4904 = vadd.f32 %v4610, %v4834
      %v4905 = vadd.f32 %v4611, %v4839
      %v4906 = vadd.f32 %v4612, %v4842
      %v4907 = vadd.f32 %v4613, %v4847
      %v4908 = vadd.f32 %v4614, %v4850
      %v4909 = vadd.f32 %v4615, %v4855
      %v4910 = vadd.f32 %v4616, %v4858
      %v4911 = vadd.f32 %v4617, %v4863
      %v4912 = vadd.f32 %v4618, %v4866
      %v4913 = vadd.f32 %v4619, %v4871
      %v4914 = vadd.f32 %v4620, %v4874
      %v4915 = vadd.f32 %v4621, %v4879
      %v4916 = vadd.f32 %v4622, %v4882
      %v4917 = vld [vmem:[%s2038] sm:$0xff]
      %v4918 = vld [vmem:[%s2038 + $0x8] sm:$0xff]
      %v4919 = vld [vmem:[%s2038 + $0x18] sm:$0xff]
      %v4920 = vld [vmem:[%s2038 + $0x20] sm:$0xff]
      %v4921 = vld [vmem:[%s2038 + $0x30] sm:$0xff]
      %v4922 = vld [vmem:[%s2038 + $0x38] sm:$0xff]
      %v4923 = vld [vmem:[%s2038 + $0x48] sm:$0xff]
      %v4924 = vld [vmem:[%s2038 + $0x50] sm:$0xff]
      %v4925 = vld [vmem:[%s2038 + $0x60] sm:$0xff]
      %v4926 = vld [vmem:[%s2038 + $0x68] sm:$0xff]
      %v4927 = vld [vmem:[%s2038 + $0x78] sm:$0xff]
      %v4928 = vld [vmem:[%s2038 + $0x80] sm:$0xff]
      %v4929 = vld [vmem:[%s2038 + $0x90] sm:$0xff]
      %v4930 = vld [vmem:[%s2038 + $0x98] sm:$0xff]
      %v4931 = vld [vmem:[%s2038 + $0xa8] sm:$0xff]
      %v4932 = vld [vmem:[%s2038 + $0xb0] sm:$0xff]
      %v4933 = vld [vmem:[%s2038 + $0xc0] sm:$0xff]
      %v4934 = vld [vmem:[%s2038 + $0xc8] sm:$0xff]
      %v4935 = vld [vmem:[%s2038 + $0xd8] sm:$0xff]
      %v4936 = vld [vmem:[%s2038 + $0xe0] sm:$0xff]
      %v4937 = vld [vmem:[%s2038 + $0xf0] sm:$0xff]
      %v4938 = vld [vmem:[%s2038 + $0xf8] sm:$0xff]
      %v4939 = vld [vmem:[%s2038 + $0x108] sm:$0xff]
      %v4940 = vld [vmem:[%s2038 + $0x110] sm:$0xff]
      %v4941 = vld [vmem:[%s2038 + $0x120] sm:$0xff]
      %v4942 = vld [vmem:[%s2038 + $0x128] sm:$0xff]
      %v4943 = vld [vmem:[%s2038 + $0x138] sm:$0xff]
      %v4944 = vld [vmem:[%s2038 + $0x140] sm:$0xff]
      %v4945 = vld [vmem:[%s2038 + $0x150] sm:$0xff]
      %v4946 = vld [vmem:[%s2038 + $0x158] sm:$0xff]
      %v4947 = vld [vmem:[%s2038 + $0x168] sm:$0xff]
      %v4948 = vld [vmem:[%s2038 + $0x170] sm:$0xff]
      %v4949 = vpack.c.bf16 %v4918, %v4917
      %v4950 = vpack.c.bf16 %v4920, %v4919
      %v4951 = vpack.c.bf16 %v4922, %v4921
      %v4952 = vpack.c.bf16 %v4924, %v4923
      %v4953 = vpack.c.bf16 %v4926, %v4925
      %v4954 = vpack.c.bf16 %v4928, %v4927
      %v4955 = vpack.c.bf16 %v4930, %v4929
      %v4956 = vpack.c.bf16 %v4932, %v4931
      %v4957 = vpack.c.bf16 %v4934, %v4933
      %v4958 = vpack.c.bf16 %v4936, %v4935
      %v4959 = vpack.c.bf16 %v4938, %v4937
      %v4960 = vpack.c.bf16 %v4940, %v4939
      %v4961 = vpack.c.bf16 %v4942, %v4941
      %v4962 = vpack.c.bf16 %v4944, %v4943
      %v4963 = vpack.c.bf16 %v4946, %v4945
      %v4964 = vpack.c.bf16 %v4948, %v4947
      %s4965 = scalar_lea.vmem %s3, 24
      %v4966 = vld [vmem:[%s4965] sm:$0xf]
      %v4968 = vsel %vm226, %v4949, 0
      %v4971 = vsel %vm226, %v4950, 0
      %v4974 = vsel %vm226, %v4951, 0
      %v4977 = vsel %vm226, %v4952, 0
      %v4980 = vsel %vm226, %v4953, 0
      %v4983 = vsel %vm226, %v4954, 0
      %v4986 = vsel %vm226, %v4955, 0
      %v4989 = vsel %vm226, %v4956, 0
      %v4992 = vsel %vm226, %v4957, 0
      %v4995 = vsel %vm226, %v4958, 0
      %v4998 = vsel %vm226, %v4959, 0
      %v5001 = vsel %vm226, %v4960, 0
      %v5004 = vsel %vm226, %v4961, 0
      %v5007 = vsel %vm226, %v4962, 0
      %v5010 = vsel %vm226, %v4963, 0
      %v5013 = vsel %vm226, %v4964, 0
      %v5016 = vsel %vm3364, %v4966, 0
      %5018 = vmatprep.subr.bf16.mxu0 0
      %5019 = vmatpush1.bf16.msra.mxu0 %v5016
      %5020 = vmatprep.subr.bf16.mxu0 0
      %5021 = vmatpush1.bf16.msra.mxu0 0
      %5022 = vmatprep.subr.bf16.mxu0 0
      %5023 = vmatpush1.bf16.msra.mxu0 0
      %5024 = vmatprep.subr.bf16.mxu0 0
      %5025 = vmatpush1.bf16.msra.mxu0 0
      %5026 = vmatprep.subr.bf16.mxu0 0
      %5027 = vmatpush1.bf16.msra.mxu0 0
      %5028 = vmatprep.subr.bf16.mxu0 0
      %5029 = vmatpush1.bf16.msra.mxu0 0
      %5030 = vmatprep.subr.bf16.mxu0 0
      %5031 = vmatpush1.bf16.msra.mxu0 0
      %5032 = vmatprep.subr.bf16.mxu0 0
      %5033 = vmatpush1.bf16.msra.mxu0 0
      %5034 = vmatprep.subr.bf16.mxu0 0
      %5035 = vmatpush1.bf16.msra.mxu0 0
      %5036 = vmatprep.subr.bf16.mxu0 0
      %5037 = vmatpush1.bf16.msra.mxu0 0
      %5038 = vmatprep.subr.bf16.mxu0 0
      %5039 = vmatpush1.bf16.msra.mxu0 0
      %5040 = vmatprep.subr.bf16.mxu0 0
      %5041 = vmatpush1.bf16.msra.mxu0 0
      %5042 = vmatprep.subr.bf16.mxu0 0
      %5043 = vmatpush1.bf16.msra.mxu0 0
      %5044 = vmatprep.subr.bf16.mxu0 0
      %5045 = vmatpush1.bf16.msra.mxu0 0
      %5046 = vmatprep.subr.bf16.mxu0 0
      %5047 = vmatpush1.bf16.msra.mxu0 0
      %5048 = vmatprep.subr.bf16.mxu0 0
      %5049 = vmatpush1.bf16.msra.mxu0 0
      %5050 = vmatprep.mubr.bf16.mxu0 0
      %5051 = vmatmul.mubr.bf16.gmra.mrb[0].mxu0 %v4968
      %v5052 = vpop.f32.mrb[0].mxu0
      %v5053 = vadd.f32 0.0, %v5052
      %v5054 = vpop.f32.mrb[0].mxu0
      %v5055 = vpop.f32.mrb[0].mxu0
      %v5056 = vadd.f32 0.0, %v5055
      %v5057 = vpop.f32.mrb[0].mxu0
      %5058 = vmatprep.mubr.bf16.mxu0 0
      %5059 = vmatmul.mubr.bf16.gmra.mrb[0].mxu0 %v4971
      %v5060 = vpop.f32.mrb[0].mxu0
      %v5061 = vadd.f32 0.0, %v5060
      %v5062 = vpop.f32.mrb[0].mxu0
      %v5063 = vpop.f32.mrb[0].mxu0
      %v5064 = vadd.f32 0.0, %v5063
      %v5065 = vpop.f32.mrb[0].mxu0
      %5066 = vmatprep.mubr.bf16.mxu0 0
      %5067 = vmatmul.mubr.bf16.gmra.mrb[0].mxu0 %v4974
      %v5068 = vpop.f32.mrb[0].mxu0
      %v5069 = vadd.f32 0.0, %v5068
      %v5070 = vpop.f32.mrb[0].mxu0
      %v5071 = vpop.f32.mrb[0].mxu0
      %v5072 = vadd.f32 0.0, %v5071
      %v5073 = vpop.f32.mrb[0].mxu0
      %5074 = vmatprep.mubr.bf16.mxu0 0
      %5075 = vmatmul.mubr.bf16.gmra.mrb[0].mxu0 %v4977
      %v5076 = vpop.f32.mrb[0].mxu0
      %v5077 = vadd.f32 0.0, %v5076
      %v5078 = vpop.f32.mrb[0].mxu0
      %v5079 = vpop.f32.mrb[0].mxu0
      %v5080 = vadd.f32 0.0, %v5079
      %v5081 = vpop.f32.mrb[0].mxu0
      %5082 = vmatprep.mubr.bf16.mxu0 0
      %5083 = vmatmul.mubr.bf16.gmra.mrb[0].mxu0 %v4980
      %v5084 = vpop.f32.mrb[0].mxu0
      %v5085 = vadd.f32 0.0, %v5084
      %v5086 = vpop.f32.mrb[0].mxu0
      %v5087 = vpop.f32.mrb[0].mxu0
      %v5088 = vadd.f32 0.0, %v5087
      %v5089 = vpop.f32.mrb[0].mxu0
      %5090 = vmatprep.mubr.bf16.mxu0 0
      %5091 = vmatmul.mubr.bf16.gmra.mrb[0].mxu0 %v4983
      %v5092 = vpop.f32.mrb[0].mxu0
      %v5093 = vadd.f32 0.0, %v5092
      %v5094 = vpop.f32.mrb[0].mxu0
      %v5095 = vpop.f32.mrb[0].mxu0
      %v5096 = vadd.f32 0.0, %v5095
      %v5097 = vpop.f32.mrb[0].mxu0
      %5098 = vmatprep.mubr.bf16.mxu0 0
      %5099 = vmatmul.mubr.bf16.gmra.mrb[0].mxu0 %v4986
      %v5100 = vpop.f32.mrb[0].mxu0
      %v5101 = vadd.f32 0.0, %v5100
      %v5102 = vpop.f32.mrb[0].mxu0
      %v5103 = vpop.f32.mrb[0].mxu0
      %v5104 = vadd.f32 0.0, %v5103
      %v5105 = vpop.f32.mrb[0].mxu0
      %5106 = vmatprep.mubr.bf16.mxu0 0
      %5107 = vmatmul.mubr.bf16.gmra.mrb[0].mxu0 %v4989
      %v5108 = vpop.f32.mrb[0].mxu0
      %v5109 = vadd.f32 0.0, %v5108
      %v5110 = vpop.f32.mrb[0].mxu0
      %v5111 = vpop.f32.mrb[0].mxu0
      %v5112 = vadd.f32 0.0, %v5111
      %v5113 = vpop.f32.mrb[0].mxu0
      %5114 = vmatprep.mubr.bf16.mxu0 0
      %5115 = vmatmul.mubr.bf16.gmra.mrb[0].mxu0 %v4992
      %v5116 = vpop.f32.mrb[0].mxu0
      %v5117 = vadd.f32 0.0, %v5116
      %v5118 = vpop.f32.mrb[0].mxu0
      %v5119 = vpop.f32.mrb[0].mxu0
      %v5120 = vadd.f32 0.0, %v5119
      %v5121 = vpop.f32.mrb[0].mxu0
      %5122 = vmatprep.mubr.bf16.mxu0 0
      %5123 = vmatmul.mubr.bf16.gmra.mrb[0].mxu0 %v4995
      %v5124 = vpop.f32.mrb[0].mxu0
      %v5125 = vadd.f32 0.0, %v5124
      %v5126 = vpop.f32.mrb[0].mxu0
      %v5127 = vpop.f32.mrb[0].mxu0
      %v5128 = vadd.f32 0.0, %v5127
      %v5129 = vpop.f32.mrb[0].mxu0
      %5130 = vmatprep.mubr.bf16.mxu0 0
      %5131 = vmatmul.mubr.bf16.gmra.mrb[0].mxu0 %v4998
      %v5132 = vpop.f32.mrb[0].mxu0
      %v5133 = vadd.f32 0.0, %v5132
      %v5134 = vpop.f32.mrb[0].mxu0
      %v5135 = vpop.f32.mrb[0].mxu0
      %v5136 = vadd.f32 0.0, %v5135
      %v5137 = vpop.f32.mrb[0].mxu0
      %5138 = vmatprep.mubr.bf16.mxu0 0
      %5139 = vmatmul.mubr.bf16.gmra.mrb[0].mxu0 %v5001
      %v5140 = vpop.f32.mrb[0].mxu0
      %v5141 = vadd.f32 0.0, %v5140
      %v5142 = vpop.f32.mrb[0].mxu0
      %v5143 = vpop.f32.mrb[0].mxu0
      %v5144 = vadd.f32 0.0, %v5143
      %v5145 = vpop.f32.mrb[0].mxu0
      %5146 = vmatprep.mubr.bf16.mxu0 0
      %5147 = vmatmul.mubr.bf16.gmra.mrb[0].mxu0 %v5004
      %v5148 = vpop.f32.mrb[0].mxu0
      %v5149 = vadd.f32 0.0, %v5148
      %v5150 = vpop.f32.mrb[0].mxu0
      %v5151 = vpop.f32.mrb[0].mxu0
      %v5152 = vadd.f32 0.0, %v5151
      %v5153 = vpop.f32.mrb[0].mxu0
      %5154 = vmatprep.mubr.bf16.mxu0 0
      %5155 = vmatmul.mubr.bf16.gmra.mrb[0].mxu0 %v5007
      %v5156 = vpop.f32.mrb[0].mxu0
      %v5157 = vadd.f32 0.0, %v5156
      %v5158 = vpop.f32.mrb[0].mxu0
      %v5159 = vpop.f32.mrb[0].mxu0
      %v5160 = vadd.f32 0.0, %v5159
      %v5161 = vpop.f32.mrb[0].mxu0
      %5162 = vmatprep.mubr.bf16.mxu0 0
      %5163 = vmatmul.mubr.bf16.gmra.mrb[0].mxu0 %v5010
      %v5164 = vpop.f32.mrb[0].mxu0
      %v5165 = vadd.f32 0.0, %v5164
      %v5166 = vpop.f32.mrb[0].mxu0
      %v5167 = vpop.f32.mrb[0].mxu0
      %v5168 = vadd.f32 0.0, %v5167
      %v5169 = vpop.f32.mrb[0].mxu0
      %5170 = vmatprep.mubr.bf16.mxu0 0
      %5171 = vmatmul.mubr.bf16.gmra.mrb[0].mxu0 %v5013
      %v5172 = vpop.f32.mrb[0].mxu0
      %v5173 = vadd.f32 0.0, %v5172
      %v5174 = vpop.f32.mrb[0].mxu0
      %v5175 = vpop.f32.mrb[0].mxu0
      %v5176 = vadd.f32 0.0, %v5175
      %v5177 = vpop.f32.mrb[0].mxu0
      %5178 = vdwg.mxu0
      %v5179 = vadd.f32 %v4885, %v5053
      %v5180 = vadd.f32 %v4886, %v5056
      %v5181 = vadd.f32 %v4887, %v5061
      %v5182 = vadd.f32 %v4888, %v5064
      %v5183 = vadd.f32 %v4889, %v5069
      %v5184 = vadd.f32 %v4890, %v5072
      %v5185 = vadd.f32 %v4891, %v5077
      %v5186 = vadd.f32 %v4892, %v5080
      %v5187 = vadd.f32 %v4893, %v5085
      %v5188 = vadd.f32 %v4894, %v5088
      %v5189 = vadd.f32 %v4895, %v5093
      %v5190 = vadd.f32 %v4896, %v5096
      %v5191 = vadd.f32 %v4897, %v5101
      %v5192 = vadd.f32 %v4898, %v5104
      %v5193 = vadd.f32 %v4899, %v5109
      %v5194 = vadd.f32 %v4900, %v5112
      %v5195 = vadd.f32 %v4901, %v5117
      %v5196 = vadd.f32 %v4902, %v5120
      %v5197 = vadd.f32 %v4903, %v5125
      %v5198 = vadd.f32 %v4904, %v5128
      %v5199 = vadd.f32 %v4905, %v5133
      %v5200 = vadd.f32 %v4906, %v5136
      %v5201 = vadd.f32 %v4907, %v5141
      %v5202 = vadd.f32 %v4908, %v5144
      %v5203 = vadd.f32 %v4909, %v5149
      %v5204 = vadd.f32 %v4910, %v5152
      %v5205 = vadd.f32 %v4911, %v5157
      %v5206 = vadd.f32 %v4912, %v5160
      %v5207 = vadd.f32 %v4913, %v5165
      %v5208 = vadd.f32 %v4914, %v5168
      %v5209 = vadd.f32 %v4915, %v5173
      %v5210 = vadd.f32 %v4916, %v5176
      %v5211 = vld [vmem:[%s2038 + $0x1] sm:$0xff]
      %v5212 = vld [vmem:[%s2038 + $0x9] sm:$0xff]
      %v5213 = vld [vmem:[%s2038 + $0x19] sm:$0xff]
      %v5214 = vld [vmem:[%s2038 + $0x21] sm:$0xff]
      %v5215 = vld [vmem:[%s2038 + $0x31] sm:$0xff]
      %v5216 = vld [vmem:[%s2038 + $0x39] sm:$0xff]
      %v5217 = vld [vmem:[%s2038 + $0x49] sm:$0xff]
      %v5218 = vld [vmem:[%s2038 + $0x51] sm:$0xff]
      %v5219 = vld [vmem:[%s2038 + $0x61] sm:$0xff]
      %v5220 = vld [vmem:[%s2038 + $0x69] sm:$0xff]
      %v5221 = vld [vmem:[%s2038 + $0x79] sm:$0xff]
      %v5222 = vld [vmem:[%s2038 + $0x81] sm:$0xff]
      %v5223 = vld [vmem:[%s2038 + $0x91] sm:$0xff]
      %v5224 = vld [vmem:[%s2038 + $0x99] sm:$0xff]
      %v5225 = vld [vmem:[%s2038 + $0xa9] sm:$0xff]
      %v5226 = vld [vmem:[%s2038 + $0xb1] sm:$0xff]
      %v5227 = vld [vmem:[%s2038 + $0xc1] sm:$0xff]
      %v5228 = vld [vmem:[%s2038 + $0xc9] sm:$0xff]
      %v5229 = vld [vmem:[%s2038 + $0xd9] sm:$0xff]
      %v5230 = vld [vmem:[%s2038 + $0xe1] sm:$0xff]
      %v5231 = vld [vmem:[%s2038 + $0xf1] sm:$0xff]
      %v5232 = vld [vmem:[%s2038 + $0xf9] sm:$0xff]
      %v5233 = vld [vmem:[%s2038 + $0x109] sm:$0xff]
      %v5234 = vld [vmem:[%s2038 + $0x111] sm:$0xff]
      %v5235 = vld [vmem:[%s2038 + $0x121] sm:$0xff]
      %v5236 = vld [vmem:[%s2038 + $0x129] sm:$0xff]
      %v5237 = vld [vmem:[%s2038 + $0x139] sm:$0xff]
      %v5238 = vld [vmem:[%s2038 + $0x141] sm:$0xff]
      %v5239 = vld [vmem:[%s2038 + $0x151] sm:$0xff]
      %v5240 = vld [vmem:[%s2038 + $0x159] sm:$0xff]
      %v5241 = vld [vmem:[%s2038 + $0x169] sm:$0xff]
      %v5242 = vld [vmem:[%s2038 + $0x171] sm:$0xff]
      %v5243 = vpack.c.bf16 %v5212, %v5211
      %v5244 = vpack.c.bf16 %v5214, %v5213
      %v5245 = vpack.c.bf16 %v5216, %v5215
      %v5246 = vpack.c.bf16 %v5218, %v5217
      %v5247 = vpack.c.bf16 %v5220, %v5219
      %v5248 = vpack.c.bf16 %v5222, %v5221
      %v5249 = vpack.c.bf16 %v5224, %v5223
      %v5250 = vpack.c.bf16 %v5226, %v5225
      %v5251 = vpack.c.bf16 %v5228, %v5227
      %v5252 = vpack.c.bf16 %v5230, %v5229
      %v5253 = vpack.c.bf16 %v5232, %v5231
      %v5254 = vpack.c.bf16 %v5234, %v5233
      %v5255 = vpack.c.bf16 %v5236, %v5235
      %v5256 = vpack.c.bf16 %v5238, %v5237
      %v5257 = vpack.c.bf16 %v5240, %v5239
      %v5258 = vpack.c.bf16 %v5242, %v5241
      %s5259 = scalar_lea.vmem %s3, 28
      %v5260 = vld [vmem:[%s5259] sm:$0xf]
      %v5262 = vsel %vm226, %v5243, 0
      %v5265 = vsel %vm226, %v5244, 0
      %v5268 = vsel %vm226, %v5245, 0
      %v5271 = vsel %vm226, %v5246, 0
      %v5274 = vsel %vm226, %v5247, 0
      %v5277 = vsel %vm226, %v5248, 0
      %v5280 = vsel %vm226, %v5249, 0
      %v5283 = vsel %vm226, %v5250, 0
      %v5286 = vsel %vm226, %v5251, 0
      %v5289 = vsel %vm226, %v5252, 0
      %v5292 = vsel %vm226, %v5253, 0
      %v5295 = vsel %vm226, %v5254, 0
      %v5298 = vsel %vm226, %v5255, 0
      %v5301 = vsel %vm226, %v5256, 0
      %v5304 = vsel %vm226, %v5257, 0
      %v5307 = vsel %vm226, %v5258, 0
      %v5310 = vsel %vm3364, %v5260, 0
      %5312 = vmatprep.subr.bf16.mxu0 0
      %5313 = vmatpush1.bf16.msra.mxu0 %v5310
      %5314 = vmatprep.subr.bf16.mxu0 0
      %5315 = vmatpush1.bf16.msra.mxu0 0
      %5316 = vmatprep.subr.bf16.mxu0 0
      %5317 = vmatpush1.bf16.msra.mxu0 0
      %5318 = vmatprep.subr.bf16.mxu0 0
      %5319 = vmatpush1.bf16.msra.mxu0 0
      %5320 = vmatprep.subr.bf16.mxu0 0
      %5321 = vmatpush1.bf16.msra.mxu0 0
      %5322 = vmatprep.subr.bf16.mxu0 0
      %5323 = vmatpush1.bf16.msra.mxu0 0
      %5324 = vmatprep.subr.bf16.mxu0 0
      %5325 = vmatpush1.bf16.msra.mxu0 0
      %5326 = vmatprep.subr.bf16.mxu0 0
      %5327 = vmatpush1.bf16.msra.mxu0 0
      %5328 = vmatprep.subr.bf16.mxu0 0
      %5329 = vmatpush1.bf16.msra.mxu0 0
      %5330 = vmatprep.subr.bf16.mxu0 0
      %5331 = vmatpush1.bf16.msra.mxu0 0
      %5332 = vmatprep.subr.bf16.mxu0 0
      %5333 = vmatpush1.bf16.msra.mxu0 0
      %5334 = vmatprep.subr.bf16.mxu0 0
      %5335 = vmatpush1.bf16.msra.mxu0 0
      %5336 = vmatprep.subr.bf16.mxu0 0
      %5337 = vmatpush1.bf16.msra.mxu0 0
      %5338 = vmatprep.subr.bf16.mxu0 0
      %5339 = vmatpush1.bf16.msra.mxu0 0
      %5340 = vmatprep.subr.bf16.mxu0 0
      %5341 = vmatpush1.bf16.msra.mxu0 0
      %5342 = vmatprep.subr.bf16.mxu0 0
      %5343 = vmatpush1.bf16.msra.mxu0 0
      %5344 = vmatprep.mubr.bf16.mxu0 0
      %5345 = vmatmul.mubr.bf16.gmra.mrb[0].mxu0 %v5262
      %v5346 = vpop.f32.mrb[0].mxu0
      %v5347 = vadd.f32 0.0, %v5346
      %v5348 = vpop.f32.mrb[0].mxu0
      %v5349 = vpop.f32.mrb[0].mxu0
      %v5350 = vadd.f32 0.0, %v5349
      %v5351 = vpop.f32.mrb[0].mxu0
      %5352 = vmatprep.mubr.bf16.mxu0 0
      %5353 = vmatmul.mubr.bf16.gmra.mrb[0].mxu0 %v5265
      %v5354 = vpop.f32.mrb[0].mxu0
      %v5355 = vadd.f32 0.0, %v5354
      %v5356 = vpop.f32.mrb[0].mxu0
      %v5357 = vpop.f32.mrb[0].mxu0
      %v5358 = vadd.f32 0.0, %v5357
      %v5359 = vpop.f32.mrb[0].mxu0
      %5360 = vmatprep.mubr.bf16.mxu0 0
      %5361 = vmatmul.mubr.bf16.gmra.mrb[0].mxu0 %v5268
      %v5362 = vpop.f32.mrb[0].mxu0
      %v5363 = vadd.f32 0.0, %v5362
      %v5364 = vpop.f32.mrb[0].mxu0
      %v5365 = vpop.f32.mrb[0].mxu0
      %v5366 = vadd.f32 0.0, %v5365
      %v5367 = vpop.f32.mrb[0].mxu0
      %5368 = vmatprep.mubr.bf16.mxu0 0
      %5369 = vmatmul.mubr.bf16.gmra.mrb[0].mxu0 %v5271
      %v5370 = vpop.f32.mrb[0].mxu0
      %v5371 = vadd.f32 0.0, %v5370
      %v5372 = vpop.f32.mrb[0].mxu0
      %v5373 = vpop.f32.mrb[0].mxu0
      %v5374 = vadd.f32 0.0, %v5373
      %v5375 = vpop.f32.mrb[0].mxu0
      %5376 = vmatprep.mubr.bf16.mxu0 0
      %5377 = vmatmul.mubr.bf16.gmra.mrb[0].mxu0 %v5274
      %v5378 = vpop.f32.mrb[0].mxu0
      %v5379 = vadd.f32 0.0, %v5378
      %v5380 = vpop.f32.mrb[0].mxu0
      %v5381 = vpop.f32.mrb[0].mxu0
      %v5382 = vadd.f32 0.0, %v5381
      %v5383 = vpop.f32.mrb[0].mxu0
      %5384 = vmatprep.mubr.bf16.mxu0 0
      %5385 = vmatmul.mubr.bf16.gmra.mrb[0].mxu0 %v5277
      %v5386 = vpop.f32.mrb[0].mxu0
      %v5387 = vadd.f32 0.0, %v5386
      %v5388 = vpop.f32.mrb[0].mxu0
      %v5389 = vpop.f32.mrb[0].mxu0
      %v5390 = vadd.f32 0.0, %v5389
      %v5391 = vpop.f32.mrb[0].mxu0
      %5392 = vmatprep.mubr.bf16.mxu0 0
      %5393 = vmatmul.mubr.bf16.gmra.mrb[0].mxu0 %v5280
      %v5394 = vpop.f32.mrb[0].mxu0
      %v5395 = vadd.f32 0.0, %v5394
      %v5396 = vpop.f32.mrb[0].mxu0
      %v5397 = vpop.f32.mrb[0].mxu0
      %v5398 = vadd.f32 0.0, %v5397
      %v5399 = vpop.f32.mrb[0].mxu0
      %5400 = vmatprep.mubr.bf16.mxu0 0
      %5401 = vmatmul.mubr.bf16.gmra.mrb[0].mxu0 %v5283
      %v5402 = vpop.f32.mrb[0].mxu0
      %v5403 = vadd.f32 0.0, %v5402
      %v5404 = vpop.f32.mrb[0].mxu0
      %v5405 = vpop.f32.mrb[0].mxu0
      %v5406 = vadd.f32 0.0, %v5405
      %v5407 = vpop.f32.mrb[0].mxu0
      %5408 = vmatprep.mubr.bf16.mxu0 0
      %5409 = vmatmul.mubr.bf16.gmra.mrb[0].mxu0 %v5286
      %v5410 = vpop.f32.mrb[0].mxu0
      %v5411 = vadd.f32 0.0, %v5410
      %v5412 = vpop.f32.mrb[0].mxu0
      %v5413 = vpop.f32.mrb[0].mxu0
      %v5414 = vadd.f32 0.0, %v5413
      %v5415 = vpop.f32.mrb[0].mxu0
      %5416 = vmatprep.mubr.bf16.mxu0 0
      %5417 = vmatmul.mubr.bf16.gmra.mrb[0].mxu0 %v5289
      %v5418 = vpop.f32.mrb[0].mxu0
      %v5419 = vadd.f32 0.0, %v5418
      %v5420 = vpop.f32.mrb[0].mxu0
      %v5421 = vpop.f32.mrb[0].mxu0
      %v5422 = vadd.f32 0.0, %v5421
      %v5423 = vpop.f32.mrb[0].mxu0
      %5424 = vmatprep.mubr.bf16.mxu0 0
      %5425 = vmatmul.mubr.bf16.gmra.mrb[0].mxu0 %v5292
      %v5426 = vpop.f32.mrb[0].mxu0
      %v5427 = vadd.f32 0.0, %v5426
      %v5428 = vpop.f32.mrb[0].mxu0
      %v5429 = vpop.f32.mrb[0].mxu0
      %v5430 = vadd.f32 0.0, %v5429
      %v5431 = vpop.f32.mrb[0].mxu0
      %5432 = vmatprep.mubr.bf16.mxu0 0
      %5433 = vmatmul.mubr.bf16.gmra.mrb[0].mxu0 %v5295
      %v5434 = vpop.f32.mrb[0].mxu0
      %v5435 = vadd.f32 0.0, %v5434
      %v5436 = vpop.f32.mrb[0].mxu0
      %v5437 = vpop.f32.mrb[0].mxu0
      %v5438 = vadd.f32 0.0, %v5437
      %v5439 = vpop.f32.mrb[0].mxu0
      %5440 = vmatprep.mubr.bf16.mxu0 0
      %5441 = vmatmul.mubr.bf16.gmra.mrb[0].mxu0 %v5298
      %v5442 = vpop.f32.mrb[0].mxu0
      %v5443 = vadd.f32 0.0, %v5442
      %v5444 = vpop.f32.mrb[0].mxu0
      %v5445 = vpop.f32.mrb[0].mxu0
      %v5446 = vadd.f32 0.0, %v5445
      %v5447 = vpop.f32.mrb[0].mxu0
      %5448 = vmatprep.mubr.bf16.mxu0 0
      %5449 = vmatmul.mubr.bf16.gmra.mrb[0].mxu0 %v5301
      %v5450 = vpop.f32.mrb[0].mxu0
      %v5451 = vadd.f32 0.0, %v5450
      %v5452 = vpop.f32.mrb[0].mxu0
      %v5453 = vpop.f32.mrb[0].mxu0
      %v5454 = vadd.f32 0.0, %v5453
      %v5455 = vpop.f32.mrb[0].mxu0
      %5456 = vmatprep.mubr.bf16.mxu0 0
      %5457 = vmatmul.mubr.bf16.gmra.mrb[0].mxu0 %v5304
      %v5458 = vpop.f32.mrb[0].mxu0
      %v5459 = vadd.f32 0.0, %v5458
      %v5460 = vpop.f32.mrb[0].mxu0
      %v5461 = vpop.f32.mrb[0].mxu0
      %v5462 = vadd.f32 0.0, %v5461
      %v5463 = vpop.f32.mrb[0].mxu0
      %5464 = vmatprep.mubr.bf16.mxu0 0
      %5465 = vmatmul.mubr.bf16.gmra.mrb[0].mxu0 %v5307
      %v5466 = vpop.f32.mrb[0].mxu0
      %v5467 = vadd.f32 0.0, %v5466
      %v5468 = vpop.f32.mrb[0].mxu0
      %v5469 = vpop.f32.mrb[0].mxu0
      %v5470 = vadd.f32 0.0, %v5469
      %v5471 = vpop.f32.mrb[0].mxu0
      %5472 = vdwg.mxu0
      %v5473 = vadd.f32 %v5179, %v5347
      %v5474 = vadd.f32 %v5180, %v5350
      %v5475 = vadd.f32 %v5181, %v5355
      %v5476 = vadd.f32 %v5182, %v5358
      %v5477 = vadd.f32 %v5183, %v5363
      %v5478 = vadd.f32 %v5184, %v5366
      %v5479 = vadd.f32 %v5185, %v5371
      %v5480 = vadd.f32 %v5186, %v5374
      %v5481 = vadd.f32 %v5187, %v5379
      %v5482 = vadd.f32 %v5188, %v5382
      %v5483 = vadd.f32 %v5189, %v5387
      %v5484 = vadd.f32 %v5190, %v5390
      %v5485 = vadd.f32 %v5191, %v5395
      %v5486 = vadd.f32 %v5192, %v5398
      %v5487 = vadd.f32 %v5193, %v5403
      %v5488 = vadd.f32 %v5194, %v5406
      %v5489 = vadd.f32 %v5195, %v5411
      %v5490 = vadd.f32 %v5196, %v5414
      %v5491 = vadd.f32 %v5197, %v5419
      %v5492 = vadd.f32 %v5198, %v5422
      %v5493 = vadd.f32 %v5199, %v5427
      %v5494 = vadd.f32 %v5200, %v5430
      %v5495 = vadd.f32 %v5201, %v5435
      %v5496 = vadd.f32 %v5202, %v5438
      %v5497 = vadd.f32 %v5203, %v5443
      %v5498 = vadd.f32 %v5204, %v5446
      %v5499 = vadd.f32 %v5205, %v5451
      %v5500 = vadd.f32 %v5206, %v5454
      %v5501 = vadd.f32 %v5207, %v5459
      %v5502 = vadd.f32 %v5208, %v5462
      %v5503 = vadd.f32 %v5209, %v5467
      %v5504 = vadd.f32 %v5210, %v5470
      %v5505 = vld [vmem:[%s2038 + $0x2] sm:$0xff]
      %v5506 = vld [vmem:[%s2038 + $0xa] sm:$0xff]
      %v5507 = vld [vmem:[%s2038 + $0x1a] sm:$0xff]
      %v5508 = vld [vmem:[%s2038 + $0x22] sm:$0xff]
      %v5509 = vld [vmem:[%s2038 + $0x32] sm:$0xff]
      %v5510 = vld [vmem:[%s2038 + $0x3a] sm:$0xff]
      %v5511 = vld [vmem:[%s2038 + $0x4a] sm:$0xff]
      %v5512 = vld [vmem:[%s2038 + $0x52] sm:$0xff]
      %v5513 = vld [vmem:[%s2038 + $0x62] sm:$0xff]
      %v5514 = vld [vmem:[%s2038 + $0x6a] sm:$0xff]
      %v5515 = vld [vmem:[%s2038 + $0x7a] sm:$0xff]
      %v5516 = vld [vmem:[%s2038 + $0x82] sm:$0xff]
      %v5517 = vld [vmem:[%s2038 + $0x92] sm:$0xff]
      %v5518 = vld [vmem:[%s2038 + $0x9a] sm:$0xff]
      %v5519 = vld [vmem:[%s2038 + $0xaa] sm:$0xff]
      %v5520 = vld [vmem:[%s2038 + $0xb2] sm:$0xff]
      %v5521 = vld [vmem:[%s2038 + $0xc2] sm:$0xff]
      %v5522 = vld [vmem:[%s2038 + $0xca] sm:$0xff]
      %v5523 = vld [vmem:[%s2038 + $0xda] sm:$0xff]
      %v5524 = vld [vmem:[%s2038 + $0xe2] sm:$0xff]
      %v5525 = vld [vmem:[%s2038 + $0xf2] sm:$0xff]
      %v5526 = vld [vmem:[%s2038 + $0xfa] sm:$0xff]
      %v5527 = vld [vmem:[%s2038 + $0x10a] sm:$0xff]
      %v5528 = vld [vmem:[%s2038 + $0x112] sm:$0xff]
      %v5529 = vld [vmem:[%s2038 + $0x122] sm:$0xff]
      %v5530 = vld [vmem:[%s2038 + $0x12a] sm:$0xff]
      %v5531 = vld [vmem:[%s2038 + $0x13a] sm:$0xff]
      %v5532 = vld [vmem:[%s2038 + $0x142] sm:$0xff]
      %v5533 = vld [vmem:[%s2038 + $0x152] sm:$0xff]
      %v5534 = vld [vmem:[%s2038 + $0x15a] sm:$0xff]
      %v5535 = vld [vmem:[%s2038 + $0x16a] sm:$0xff]
      %v5536 = vld [vmem:[%s2038 + $0x172] sm:$0xff]
      %v5537 = vpack.c.bf16 %v5506, %v5505
      %v5538 = vpack.c.bf16 %v5508, %v5507
      %v5539 = vpack.c.bf16 %v5510, %v5509
      %v5540 = vpack.c.bf16 %v5512, %v5511
      %v5541 = vpack.c.bf16 %v5514, %v5513
      %v5542 = vpack.c.bf16 %v5516, %v5515
      %v5543 = vpack.c.bf16 %v5518, %v5517
      %v5544 = vpack.c.bf16 %v5520, %v5519
      %v5545 = vpack.c.bf16 %v5522, %v5521
      %v5546 = vpack.c.bf16 %v5524, %v5523
      %v5547 = vpack.c.bf16 %v5526, %v5525
      %v5548 = vpack.c.bf16 %v5528, %v5527
      %v5549 = vpack.c.bf16 %v5530, %v5529
      %v5550 = vpack.c.bf16 %v5532, %v5531
      %v5551 = vpack.c.bf16 %v5534, %v5533
      %v5552 = vpack.c.bf16 %v5536, %v5535
      %s5553 = scalar_lea.vmem %s3, 32
      %v5554 = vld [vmem:[%s5553] sm:$0xf]
      %v5556 = vsel %vm226, %v5537, 0
      %v5559 = vsel %vm226, %v5538, 0
      %v5562 = vsel %vm226, %v5539, 0
      %v5565 = vsel %vm226, %v5540, 0
      %v5568 = vsel %vm226, %v5541, 0
      %v5571 = vsel %vm226, %v5542, 0
      %v5574 = vsel %vm226, %v5543, 0
      %v5577 = vsel %vm226, %v5544, 0
      %v5580 = vsel %vm226, %v5545, 0
      %v5583 = vsel %vm226, %v5546, 0
      %v5586 = vsel %vm226, %v5547, 0
      %v5589 = vsel %vm226, %v5548, 0
      %v5592 = vsel %vm226, %v5549, 0
      %v5595 = vsel %vm226, %v5550, 0
      %v5598 = vsel %vm226, %v5551, 0
      %v5601 = vsel %vm226, %v5552, 0
      %v5604 = vsel %vm3364, %v5554, 0
      %5606 = vmatprep.subr.bf16.mxu0 0
      %5607 = vmatpush1.bf16.msra.mxu0 %v5604
      %5608 = vmatprep.subr.bf16.mxu0 0
      %5609 = vmatpush1.bf16.msra.mxu0 0
      %5610 = vmatprep.subr.bf16.mxu0 0
      %5611 = vmatpush1.bf16.msra.mxu0 0
      %5612 = vmatprep.subr.bf16.mxu0 0
      %5613 = vmatpush1.bf16.msra.mxu0 0
      %5614 = vmatprep.subr.bf16.mxu0 0
      %5615 = vmatpush1.bf16.msra.mxu0 0
      %5616 = vmatprep.subr.bf16.mxu0 0
      %5617 = vmatpush1.bf16.msra.mxu0 0
      %5618 = vmatprep.subr.bf16.mxu0 0
      %5619 = vmatpush1.bf16.msra.mxu0 0
      %5620 = vmatprep.subr.bf16.mxu0 0
      %5621 = vmatpush1.bf16.msra.mxu0 0
      %5622 = vmatprep.subr.bf16.mxu0 0
      %5623 = vmatpush1.bf16.msra.mxu0 0
      %5624 = vmatprep.subr.bf16.mxu0 0
      %5625 = vmatpush1.bf16.msra.mxu0 0
      %5626 = vmatprep.subr.bf16.mxu0 0
      %5627 = vmatpush1.bf16.msra.mxu0 0
      %5628 = vmatprep.subr.bf16.mxu0 0
      %5629 = vmatpush1.bf16.msra.mxu0 0
      %5630 = vmatprep.subr.bf16.mxu0 0
      %5631 = vmatpush1.bf16.msra.mxu0 0
      %5632 = vmatprep.subr.bf16.mxu0 0
      %5633 = vmatpush1.bf16.msra.mxu0 0
      %5634 = vmatprep.subr.bf16.mxu0 0
      %5635 = vmatpush1.bf16.msra.mxu0 0
      %5636 = vmatprep.subr.bf16.mxu0 0
      %5637 = vmatpush1.bf16.msra.mxu0 0
      %5638 = vmatprep.mubr.bf16.mxu0 0
      %5639 = vmatmul.mubr.bf16.gmra.mrb[0].mxu0 %v5556
      %v5640 = vpop.f32.mrb[0].mxu0
      %v5641 = vadd.f32 0.0, %v5640
      %v5642 = vpop.f32.mrb[0].mxu0
      %v5643 = vpop.f32.mrb[0].mxu0
      %v5644 = vadd.f32 0.0, %v5643
      %v5645 = vpop.f32.mrb[0].mxu0
      %5646 = vmatprep.mubr.bf16.mxu0 0
      %5647 = vmatmul.mubr.bf16.gmra.mrb[0].mxu0 %v5559
      %v5648 = vpop.f32.mrb[0].mxu0
      %v5649 = vadd.f32 0.0, %v5648
      %v5650 = vpop.f32.mrb[0].mxu0
      %v5651 = vpop.f32.mrb[0].mxu0
      %v5652 = vadd.f32 0.0, %v5651
      %v5653 = vpop.f32.mrb[0].mxu0
      %5654 = vmatprep.mubr.bf16.mxu0 0
      %5655 = vmatmul.mubr.bf16.gmra.mrb[0].mxu0 %v5562
      %v5656 = vpop.f32.mrb[0].mxu0
      %v5657 = vadd.f32 0.0, %v5656
      %v5658 = vpop.f32.mrb[0].mxu0
      %v5659 = vpop.f32.mrb[0].mxu0
      %v5660 = vadd.f32 0.0, %v5659
      %v5661 = vpop.f32.mrb[0].mxu0
      %5662 = vmatprep.mubr.bf16.mxu0 0
      %5663 = vmatmul.mubr.bf16.gmra.mrb[0].mxu0 %v5565
      %v5664 = vpop.f32.mrb[0].mxu0
      %v5665 = vadd.f32 0.0, %v5664
      %v5666 = vpop.f32.mrb[0].mxu0
      %v5667 = vpop.f32.mrb[0].mxu0
      %v5668 = vadd.f32 0.0, %v5667
      %v5669 = vpop.f32.mrb[0].mxu0
      %5670 = vmatprep.mubr.bf16.mxu0 0
      %5671 = vmatmul.mubr.bf16.gmra.mrb[0].mxu0 %v5568
      %v5672 = vpop.f32.mrb[0].mxu0
      %v5673 = vadd.f32 0.0, %v5672
      %v5674 = vpop.f32.mrb[0].mxu0
      %v5675 = vpop.f32.mrb[0].mxu0
      %v5676 = vadd.f32 0.0, %v5675
      %v5677 = vpop.f32.mrb[0].mxu0
      %5678 = vmatprep.mubr.bf16.mxu0 0
      %5679 = vmatmul.mubr.bf16.gmra.mrb[0].mxu0 %v5571
      %v5680 = vpop.f32.mrb[0].mxu0
      %v5681 = vadd.f32 0.0, %v5680
      %v5682 = vpop.f32.mrb[0].mxu0
      %v5683 = vpop.f32.mrb[0].mxu0
      %v5684 = vadd.f32 0.0, %v5683
      %v5685 = vpop.f32.mrb[0].mxu0
      %5686 = vmatprep.mubr.bf16.mxu0 0
      %5687 = vmatmul.mubr.bf16.gmra.mrb[0].mxu0 %v5574
      %v5688 = vpop.f32.mrb[0].mxu0
      %v5689 = vadd.f32 0.0, %v5688
      %v5690 = vpop.f32.mrb[0].mxu0
      %v5691 = vpop.f32.mrb[0].mxu0
      %v5692 = vadd.f32 0.0, %v5691
      %v5693 = vpop.f32.mrb[0].mxu0
      %5694 = vmatprep.mubr.bf16.mxu0 0
      %5695 = vmatmul.mubr.bf16.gmra.mrb[0].mxu0 %v5577
      %v5696 = vpop.f32.mrb[0].mxu0
      %v5697 = vadd.f32 0.0, %v5696
      %v5698 = vpop.f32.mrb[0].mxu0
      %v5699 = vpop.f32.mrb[0].mxu0
      %v5700 = vadd.f32 0.0, %v5699
      %v5701 = vpop.f32.mrb[0].mxu0
      %5702 = vmatprep.mubr.bf16.mxu0 0
      %5703 = vmatmul.mubr.bf16.gmra.mrb[0].mxu0 %v5580
      %v5704 = vpop.f32.mrb[0].mxu0
      %v5705 = vadd.f32 0.0, %v5704
      %v5706 = vpop.f32.mrb[0].mxu0
      %v5707 = vpop.f32.mrb[0].mxu0
      %v5708 = vadd.f32 0.0, %v5707
      %v5709 = vpop.f32.mrb[0].mxu0
      %5710 = vmatprep.mubr.bf16.mxu0 0
      %5711 = vmatmul.mubr.bf16.gmra.mrb[0].mxu0 %v5583
      %v5712 = vpop.f32.mrb[0].mxu0
      %v5713 = vadd.f32 0.0, %v5712
      %v5714 = vpop.f32.mrb[0].mxu0
      %v5715 = vpop.f32.mrb[0].mxu0
      %v5716 = vadd.f32 0.0, %v5715
      %v5717 = vpop.f32.mrb[0].mxu0
      %5718 = vmatprep.mubr.bf16.mxu0 0
      %5719 = vmatmul.mubr.bf16.gmra.mrb[0].mxu0 %v5586
      %v5720 = vpop.f32.mrb[0].mxu0
      %v5721 = vadd.f32 0.0, %v5720
      %v5722 = vpop.f32.mrb[0].mxu0
      %v5723 = vpop.f32.mrb[0].mxu0
      %v5724 = vadd.f32 0.0, %v5723
      %v5725 = vpop.f32.mrb[0].mxu0
      %5726 = vmatprep.mubr.bf16.mxu0 0
      %5727 = vmatmul.mubr.bf16.gmra.mrb[0].mxu0 %v5589
      %v5728 = vpop.f32.mrb[0].mxu0
      %v5729 = vadd.f32 0.0, %v5728
      %v5730 = vpop.f32.mrb[0].mxu0
      %v5731 = vpop.f32.mrb[0].mxu0
      %v5732 = vadd.f32 0.0, %v5731
      %v5733 = vpop.f32.mrb[0].mxu0
      %5734 = vmatprep.mubr.bf16.mxu0 0
      %5735 = vmatmul.mubr.bf16.gmra.mrb[0].mxu0 %v5592
      %v5736 = vpop.f32.mrb[0].mxu0
      %v5737 = vadd.f32 0.0, %v5736
      %v5738 = vpop.f32.mrb[0].mxu0
      %v5739 = vpop.f32.mrb[0].mxu0
      %v5740 = vadd.f32 0.0, %v5739
      %v5741 = vpop.f32.mrb[0].mxu0
      %5742 = vmatprep.mubr.bf16.mxu0 0
      %5743 = vmatmul.mubr.bf16.gmra.mrb[0].mxu0 %v5595
      %v5744 = vpop.f32.mrb[0].mxu0
      %v5745 = vadd.f32 0.0, %v5744
      %v5746 = vpop.f32.mrb[0].mxu0
      %v5747 = vpop.f32.mrb[0].mxu0
      %v5748 = vadd.f32 0.0, %v5747
      %v5749 = vpop.f32.mrb[0].mxu0
      %5750 = vmatprep.mubr.bf16.mxu0 0
      %5751 = vmatmul.mubr.bf16.gmra.mrb[0].mxu0 %v5598
      %v5752 = vpop.f32.mrb[0].mxu0
      %v5753 = vadd.f32 0.0, %v5752
      %v5754 = vpop.f32.mrb[0].mxu0
      %v5755 = vpop.f32.mrb[0].mxu0
      %v5756 = vadd.f32 0.0, %v5755
      %v5757 = vpop.f32.mrb[0].mxu0
      %5758 = vmatprep.mubr.bf16.mxu0 0
      %5759 = vmatmul.mubr.bf16.gmra.mrb[0].mxu0 %v5601
      %v5760 = vpop.f32.mrb[0].mxu0
      %v5761 = vadd.f32 0.0, %v5760
      %v5762 = vpop.f32.mrb[0].mxu0
      %v5763 = vpop.f32.mrb[0].mxu0
      %v5764 = vadd.f32 0.0, %v5763
      %v5765 = vpop.f32.mrb[0].mxu0
      %5766 = vdwg.mxu0
      %v5767 = vadd.f32 %v5473, %v5641
      %v5768 = vadd.f32 %v5474, %v5644
      %v5769 = vadd.f32 %v5475, %v5649
      %v5770 = vadd.f32 %v5476, %v5652
      %v5771 = vadd.f32 %v5477, %v5657
      %v5772 = vadd.f32 %v5478, %v5660
      %v5773 = vadd.f32 %v5479, %v5665
      %v5774 = vadd.f32 %v5480, %v5668
      %v5775 = vadd.f32 %v5481, %v5673
      %v5776 = vadd.f32 %v5482, %v5676
      %v5777 = vadd.f32 %v5483, %v5681
      %v5778 = vadd.f32 %v5484, %v5684
      %v5779 = vadd.f32 %v5485, %v5689
      %v5780 = vadd.f32 %v5486, %v5692
      %v5781 = vadd.f32 %v5487, %v5697
      %v5782 = vadd.f32 %v5488, %v5700
      %v5783 = vadd.f32 %v5489, %v5705
      %v5784 = vadd.f32 %v5490, %v5708
      %v5785 = vadd.f32 %v5491, %v5713
      %v5786 = vadd.f32 %v5492, %v5716
      %v5787 = vadd.f32 %v5493, %v5721
      %v5788 = vadd.f32 %v5494, %v5724
      %v5789 = vadd.f32 %v5495, %v5729
      %v5790 = vadd.f32 %v5496, %v5732
      %v5791 = vadd.f32 %v5497, %v5737
      %v5792 = vadd.f32 %v5498, %v5740
      %v5793 = vadd.f32 %v5499, %v5745
      %v5794 = vadd.f32 %v5500, %v5748
      %v5795 = vadd.f32 %v5501, %v5753
      %v5796 = vadd.f32 %v5502, %v5756
      %v5797 = vadd.f32 %v5503, %v5761
      %v5798 = vadd.f32 %v5504, %v5764
      %v5799 = vld [vmem:[%s4] sm:$0x1]
      %v5801 = vlaneseq
      %v5802 = vshrl.u32 %v5801, 7
      %v5803 = vsub.s32 0, %v5802
      %v5804 = vrot.slane %v5799, %v5803
      %v5806 = vadd.f32 %v5767, %v5804
      %v5807 = vadd.f32 %v5768, %v5804
      %v5808 = vadd.f32 %v5769, %v5804
      %v5809 = vadd.f32 %v5770, %v5804
      %v5810 = vadd.f32 %v5771, %v5804
      %v5811 = vadd.f32 %v5772, %v5804
      %v5812 = vadd.f32 %v5773, %v5804
      %v5813 = vadd.f32 %v5774, %v5804
      %v5814 = vadd.f32 %v5775, %v5804
      %v5815 = vadd.f32 %v5776, %v5804
      %v5816 = vadd.f32 %v5777, %v5804
      %v5817 = vadd.f32 %v5778, %v5804
      %v5818 = vadd.f32 %v5779, %v5804
      %v5819 = vadd.f32 %v5780, %v5804
      %v5820 = vadd.f32 %v5781, %v5804
      %v5821 = vadd.f32 %v5782, %v5804
      %v5822 = vadd.f32 %v5783, %v5804
      %v5823 = vadd.f32 %v5784, %v5804
      %v5824 = vadd.f32 %v5785, %v5804
      %v5825 = vadd.f32 %v5786, %v5804
      %v5826 = vadd.f32 %v5787, %v5804
      %v5827 = vadd.f32 %v5788, %v5804
      %v5828 = vadd.f32 %v5789, %v5804
      %v5829 = vadd.f32 %v5790, %v5804
      %v5830 = vadd.f32 %v5791, %v5804
      %v5831 = vadd.f32 %v5792, %v5804
      %v5832 = vadd.f32 %v5793, %v5804
      %v5833 = vadd.f32 %v5794, %v5804
      %v5834 = vadd.f32 %v5795, %v5804
      %v5835 = vadd.f32 %v5796, %v5804
      %v5836 = vadd.f32 %v5797, %v5804
      %v5837 = vadd.f32 %v5798, %v5804
      %vm5838 = vcmp.gt.f32.partialorder %v5806, 0.0
      %vm5839 = vcmp.gt.f32.partialorder %v5807, 0.0
      %vm5840 = vcmp.gt.f32.partialorder %v5808, 0.0
      %vm5841 = vcmp.gt.f32.partialorder %v5809, 0.0
      %vm5842 = vcmp.gt.f32.partialorder %v5810, 0.0
      %vm5843 = vcmp.gt.f32.partialorder %v5811, 0.0
      %vm5844 = vcmp.gt.f32.partialorder %v5812, 0.0
      %vm5845 = vcmp.gt.f32.partialorder %v5813, 0.0
      %vm5846 = vcmp.gt.f32.partialorder %v5814, 0.0
      %vm5847 = vcmp.gt.f32.partialorder %v5815, 0.0
      %vm5848 = vcmp.gt.f32.partialorder %v5816, 0.0
      %vm5849 = vcmp.gt.f32.partialorder %v5817, 0.0
      %vm5850 = vcmp.gt.f32.partialorder %v5818, 0.0
      %vm5851 = vcmp.gt.f32.partialorder %v5819, 0.0
      %vm5852 = vcmp.gt.f32.partialorder %v5820, 0.0
      %vm5853 = vcmp.gt.f32.partialorder %v5821, 0.0
      %vm5854 = vcmp.gt.f32.partialorder %v5822, 0.0
      %vm5855 = vcmp.gt.f32.partialorder %v5823, 0.0
      %vm5856 = vcmp.gt.f32.partialorder %v5824, 0.0
      %vm5857 = vcmp.gt.f32.partialorder %v5825, 0.0
      %vm5858 = vcmp.gt.f32.partialorder %v5826, 0.0
      %vm5859 = vcmp.gt.f32.partialorder %v5827, 0.0
      %vm5860 = vcmp.gt.f32.partialorder %v5828, 0.0
      %vm5861 = vcmp.gt.f32.partialorder %v5829, 0.0
      %vm5862 = vcmp.gt.f32.partialorder %v5830, 0.0
      %vm5863 = vcmp.gt.f32.partialorder %v5831, 0.0
      %vm5864 = vcmp.gt.f32.partialorder %v5832, 0.0
      %vm5865 = vcmp.gt.f32.partialorder %v5833, 0.0
      %vm5866 = vcmp.gt.f32.partialorder %v5834, 0.0
      %vm5867 = vcmp.gt.f32.partialorder %v5835, 0.0
      %vm5868 = vcmp.gt.f32.partialorder %v5836, 0.0
      %vm5869 = vcmp.gt.f32.partialorder %v5837, 0.0
      %v5870 = vmul.f32 %v5806, 0.2
      %v5871 = vmul.f32 %v5807, 0.2
      %v5872 = vmul.f32 %v5808, 0.2
      %v5873 = vmul.f32 %v5809, 0.2
      %v5874 = vmul.f32 %v5810, 0.2
      %v5875 = vmul.f32 %v5811, 0.2
      %v5876 = vmul.f32 %v5812, 0.2
      %v5877 = vmul.f32 %v5813, 0.2
      %v5878 = vmul.f32 %v5814, 0.2
      %v5879 = vmul.f32 %v5815, 0.2
      %v5880 = vmul.f32 %v5816, 0.2
      %v5881 = vmul.f32 %v5817, 0.2
      %v5882 = vmul.f32 %v5818, 0.2
      %v5883 = vmul.f32 %v5819, 0.2
      %v5884 = vmul.f32 %v5820, 0.2
      %v5885 = vmul.f32 %v5821, 0.2
      %v5886 = vmul.f32 %v5822, 0.2
      %v5887 = vmul.f32 %v5823, 0.2
      %v5888 = vmul.f32 %v5824, 0.2
      %v5889 = vmul.f32 %v5825, 0.2
      %v5890 = vmul.f32 %v5826, 0.2
      %v5891 = vmul.f32 %v5827, 0.2
      %v5892 = vmul.f32 %v5828, 0.2
      %v5893 = vmul.f32 %v5829, 0.2
      %v5894 = vmul.f32 %v5830, 0.2
      %v5895 = vmul.f32 %v5831, 0.2
      %v5896 = vmul.f32 %v5832, 0.2
      %v5897 = vmul.f32 %v5833, 0.2
      %v5898 = vmul.f32 %v5834, 0.2
      %v5899 = vmul.f32 %v5835, 0.2
      %v5900 = vmul.f32 %v5836, 0.2
      %v5901 = vmul.f32 %v5837, 0.2
      %v5902 = vsel %vm5838, %v5806, %v5870
      %v5903 = vsel %vm5839, %v5807, %v5871
      %v5904 = vsel %vm5840, %v5808, %v5872
      %v5905 = vsel %vm5841, %v5809, %v5873
      %v5906 = vsel %vm5842, %v5810, %v5874
      %v5907 = vsel %vm5843, %v5811, %v5875
      %v5908 = vsel %vm5844, %v5812, %v5876
      %v5909 = vsel %vm5845, %v5813, %v5877
      %v5910 = vsel %vm5846, %v5814, %v5878
      %v5911 = vsel %vm5847, %v5815, %v5879
      %v5912 = vsel %vm5848, %v5816, %v5880
      %v5913 = vsel %vm5849, %v5817, %v5881
      %v5914 = vsel %vm5850, %v5818, %v5882
      %v5915 = vsel %vm5851, %v5819, %v5883
      %v5916 = vsel %vm5852, %v5820, %v5884
      %v5917 = vsel %vm5853, %v5821, %v5885
      %v5918 = vsel %vm5854, %v5822, %v5886
      %v5919 = vsel %vm5855, %v5823, %v5887
      %v5920 = vsel %vm5856, %v5824, %v5888
      %v5921 = vsel %vm5857, %v5825, %v5889
      %v5922 = vsel %vm5858, %v5826, %v5890
      %v5923 = vsel %vm5859, %v5827, %v5891
      %v5924 = vsel %vm5860, %v5828, %v5892
      %v5925 = vsel %vm5861, %v5829, %v5893
      %v5926 = vsel %vm5862, %v5830, %v5894
      %v5927 = vsel %vm5863, %v5831, %v5895
      %v5928 = vsel %vm5864, %v5832, %v5896
      %v5929 = vsel %vm5865, %v5833, %v5897
      %v5930 = vsel %vm5866, %v5834, %v5898
      %v5931 = vsel %vm5867, %v5835, %v5899
      %v5932 = vsel %vm5868, %v5836, %v5900
      %v5933 = vsel %vm5869, %v5837, %v5901
      %5966 = vrot.lane.b32.xlu0 %v5902, 8
      %v5967 = vpop.permute.xlu0 %5966
      %5968 = vrot.lane.b32.xlu0 %v5903, 8
      %v5969 = vpop.permute.xlu0 %5968
      %5970 = vrot.lane.b32.xlu0 %v5904, 8
      %v5971 = vpop.permute.xlu0 %5970
      %5972 = vrot.lane.b32.xlu0 %v5905, 8
      %v5973 = vpop.permute.xlu0 %5972
      %5974 = vrot.lane.b32.xlu0 %v5906, 8
      %v5975 = vpop.permute.xlu0 %5974
      %5976 = vrot.lane.b32.xlu0 %v5907, 8
      %v5977 = vpop.permute.xlu0 %5976
      %5978 = vrot.lane.b32.xlu0 %v5908, 8
      %v5979 = vpop.permute.xlu0 %5978
      %5980 = vrot.lane.b32.xlu0 %v5909, 8
      %v5981 = vpop.permute.xlu0 %5980
      %5982 = vrot.lane.b32.xlu0 %v5910, 8
      %v5983 = vpop.permute.xlu0 %5982
      %5984 = vrot.lane.b32.xlu0 %v5911, 8
      %v5985 = vpop.permute.xlu0 %5984
      %5986 = vrot.lane.b32.xlu0 %v5912, 8
      %v5987 = vpop.permute.xlu0 %5986
      %5988 = vrot.lane.b32.xlu0 %v5913, 8
      %v5989 = vpop.permute.xlu0 %5988
      %5990 = vrot.lane.b32.xlu0 %v5914, 8
      %v5991 = vpop.permute.xlu0 %5990
      %5992 = vrot.lane.b32.xlu0 %v5915, 8
      %v5993 = vpop.permute.xlu0 %5992
      %5994 = vrot.lane.b32.xlu0 %v5916, 8
      %v5995 = vpop.permute.xlu0 %5994
      %5996 = vrot.lane.b32.xlu0 %v5917, 8
      %v5997 = vpop.permute.xlu0 %5996
      %5998 = vrot.lane.b32.xlu0 %v5918, 8
      %v5999 = vpop.permute.xlu0 %5998
      %6000 = vrot.lane.b32.xlu0 %v5919, 8
      %v6001 = vpop.permute.xlu0 %6000
      %6002 = vrot.lane.b32.xlu0 %v5920, 8
      %v6003 = vpop.permute.xlu0 %6002
      %6004 = vrot.lane.b32.xlu0 %v5921, 8
      %v6005 = vpop.permute.xlu0 %6004
      %6006 = vrot.lane.b32.xlu0 %v5922, 8
      %v6007 = vpop.permute.xlu0 %6006
      %6008 = vrot.lane.b32.xlu0 %v5923, 8
      %v6009 = vpop.permute.xlu0 %6008
      %6010 = vrot.lane.b32.xlu0 %v5924, 8
      %v6011 = vpop.permute.xlu0 %6010
      %6012 = vrot.lane.b32.xlu0 %v5925, 8
      %v6013 = vpop.permute.xlu0 %6012
      %6014 = vrot.lane.b32.xlu0 %v5926, 8
      %v6015 = vpop.permute.xlu0 %6014
      %6016 = vrot.lane.b32.xlu0 %v5927, 8
      %v6017 = vpop.permute.xlu0 %6016
      %6018 = vrot.lane.b32.xlu0 %v5928, 8
      %v6019 = vpop.permute.xlu0 %6018
      %6020 = vrot.lane.b32.xlu0 %v5929, 8
      %v6021 = vpop.permute.xlu0 %6020
      %6022 = vrot.lane.b32.xlu0 %v5930, 8
      %v6023 = vpop.permute.xlu0 %6022
      %6024 = vrot.lane.b32.xlu0 %v5931, 8
      %v6025 = vpop.permute.xlu0 %6024
      %6026 = vrot.lane.b32.xlu0 %v5932, 8
      %v6027 = vpop.permute.xlu0 %6026
      %6028 = vrot.lane.b32.xlu0 %v5933, 8
      %v6029 = vpop.permute.xlu0 %6028
      %v6062 = vsel %vm305, %v272, %v3089
      %v6063 = vsel %vm305, %v273, %v3091
      %v6064 = vsel %vm305, %v274, %v3093
      %v6065 = vsel %vm305, %v275, %v3095
      %v6066 = vsel %vm305, %v276, %v3097
      %v6067 = vsel %vm305, %v277, %v3099
      %v6068 = vsel %vm305, %v278, %v3101
      %v6069 = vsel %vm305, %v279, %v3103
      %v6070 = vsel %vm305, %v280, %v3105
      %v6071 = vsel %vm305, %v281, %v3107
      %v6072 = vsel %vm305, %v282, %v3109
      %v6073 = vsel %vm305, %v283, %v3111
      %v6074 = vsel %vm305, %v284, %v3113
      %v6075 = vsel %vm305, %v285, %v3115
      %v6076 = vsel %vm305, %v286, %v3117
      %v6077 = vsel %vm305, %v287, %v3119
      %v6078 = vsel %vm305, %v288, %v3121
      %v6079 = vsel %vm305, %v289, %v3123
      %v6080 = vsel %vm305, %v290, %v3125
      %v6081 = vsel %vm305, %v291, %v3127
      %v6082 = vsel %vm305, %v292, %v3129
      %v6083 = vsel %vm305, %v293, %v3131
      %v6084 = vsel %vm305, %v294, %v3133
      %v6085 = vsel %vm305, %v295, %v3135
      %v6086 = vsel %vm305, %v296, %v3137
      %v6087 = vsel %vm305, %v297, %v3139
      %v6088 = vsel %vm305, %v298, %v3141
      %v6089 = vsel %vm305, %v299, %v3143
      %v6090 = vsel %vm305, %v300, %v3145
      %v6091 = vsel %vm305, %v301, %v3147
      %v6092 = vsel %vm305, %v302, %v3149
      %v6093 = vsel %vm305, %v303, %v3151
      %v6094 = vsel %vm226, %v6062, %v5967
      %v6095 = vsel %vm226, %v6063, %v5969
      %v6096 = vsel %vm226, %v6064, %v5971
      %v6097 = vsel %vm226, %v6065, %v5973
      %v6098 = vsel %vm226, %v6066, %v5975
      %v6099 = vsel %vm226, %v6067, %v5977
      %v6100 = vsel %vm226, %v6068, %v5979
      %v6101 = vsel %vm226, %v6069, %v5981
      %v6102 = vsel %vm226, %v6070, %v5983
      %v6103 = vsel %vm226, %v6071, %v5985
      %v6104 = vsel %vm226, %v6072, %v5987
      %v6105 = vsel %vm226, %v6073, %v5989
      %v6106 = vsel %vm226, %v6074, %v5991
      %v6107 = vsel %vm226, %v6075, %v5993
      %v6108 = vsel %vm226, %v6076, %v5995
      %v6109 = vsel %vm226, %v6077, %v5997
      %v6110 = vsel %vm226, %v6078, %v5999
      %v6111 = vsel %vm226, %v6079, %v6001
      %v6112 = vsel %vm226, %v6080, %v6003
      %v6113 = vsel %vm226, %v6081, %v6005
      %v6114 = vsel %vm226, %v6082, %v6007
      %v6115 = vsel %vm226, %v6083, %v6009
      %v6116 = vsel %vm226, %v6084, %v6011
      %v6117 = vsel %vm226, %v6085, %v6013
      %v6118 = vsel %vm226, %v6086, %v6015
      %v6119 = vsel %vm226, %v6087, %v6017
      %v6120 = vsel %vm226, %v6088, %v6019
      %v6121 = vsel %vm226, %v6089, %v6021
      %v6122 = vsel %vm226, %v6090, %v6023
      %v6123 = vsel %vm226, %v6091, %v6025
      %v6124 = vsel %vm226, %v6092, %v6027
      %v6125 = vsel %vm226, %v6093, %v6029
      %vm6126 = vcmask 97280
      %6127 = vst.msk [vmem:[%s224] sm:$0xff] %vm6126, %v6094
      %6128 = vst.msk [vmem:[%s224 + $0x8] sm:$0xff] %vm6126, %v6095
      %6129 = vst.msk [vmem:[%s224 + $0x10] sm:$0xff] %vm6126, %v6096
      %6130 = vst.msk [vmem:[%s224 + $0x18] sm:$0xff] %vm6126, %v6097
      %6131 = vst.msk [vmem:[%s224 + $0x20] sm:$0xff] %vm6126, %v6098
      %6132 = vst.msk [vmem:[%s224 + $0x28] sm:$0xff] %vm6126, %v6099
      %6133 = vst.msk [vmem:[%s224 + $0x30] sm:$0xff] %vm6126, %v6100
      %6134 = vst.msk [vmem:[%s224 + $0x38] sm:$0xff] %vm6126, %v6101
      %6135 = vst.msk [vmem:[%s224 + $0x40] sm:$0xff] %vm6126, %v6102
      %6136 = vst.msk [vmem:[%s224 + $0x48] sm:$0xff] %vm6126, %v6103
      %6137 = vst.msk [vmem:[%s224 + $0x50] sm:$0xff] %vm6126, %v6104
      %6138 = vst.msk [vmem:[%s224 + $0x58] sm:$0xff] %vm6126, %v6105
      %6139 = vst.msk [vmem:[%s224 + $0x60] sm:$0xff] %vm6126, %v6106
      %6140 = vst.msk [vmem:[%s224 + $0x68] sm:$0xff] %vm6126, %v6107
      %6141 = vst.msk [vmem:[%s224 + $0x70] sm:$0xff] %vm6126, %v6108
      %6142 = vst.msk [vmem:[%s224 + $0x78] sm:$0xff] %vm6126, %v6109
      %6143 = vst.msk [vmem:[%s224 + $0x80] sm:$0xff] %vm6126, %v6110
      %6144 = vst.msk [vmem:[%s224 + $0x88] sm:$0xff] %vm6126, %v6111
      %6145 = vst.msk [vmem:[%s224 + $0x90] sm:$0xff] %vm6126, %v6112
      %6146 = vst.msk [vmem:[%s224 + $0x98] sm:$0xff] %vm6126, %v6113
      %6147 = vst.msk [vmem:[%s224 + $0xa0] sm:$0xff] %vm6126, %v6114
      %6148 = vst.msk [vmem:[%s224 + $0xa8] sm:$0xff] %vm6126, %v6115
      %6149 = vst.msk [vmem:[%s224 + $0xb0] sm:$0xff] %vm6126, %v6116
      %6150 = vst.msk [vmem:[%s224 + $0xb8] sm:$0xff] %vm6126, %v6117
      %6151 = vst.msk [vmem:[%s224 + $0xc0] sm:$0xff] %vm6126, %v6118
      %6152 = vst.msk [vmem:[%s224 + $0xc8] sm:$0xff] %vm6126, %v6119
      %6153 = vst.msk [vmem:[%s224 + $0xd0] sm:$0xff] %vm6126, %v6120
      %6154 = vst.msk [vmem:[%s224 + $0xd8] sm:$0xff] %vm6126, %v6121
      %6155 = vst.msk [vmem:[%s224 + $0xe0] sm:$0xff] %vm6126, %v6122
      %6156 = vst.msk [vmem:[%s224 + $0xe8] sm:$0xff] %vm6126, %v6123
      %6157 = vst.msk [vmem:[%s224 + $0xf0] sm:$0xff] %vm6126, %v6124
      %6158 = vst.msk [vmem:[%s224 + $0xf8] sm:$0xff] %vm6126, %v6125
      %p6159 = scmp.lt.s32.totalorder %s16, 1
      %s6160 = scalar_select %p6159, %s16, 1
      %s6161 = smul.addr %s6160, 32
      %s6162 = smul.addr %s6161, 8
      %s6163 = scalar_lea.vmem %s5, %s6162
      // Predicated region
      $region41: #{tpu_custom_call.1} parent=39 // pred_check
        %p6164 = pneg %p144
      $region42: #{tpu_custom_call.1} parent=39 // pred_check_branch
        %6166 = sbr.rel (%p6164) target = $region44
      $region43: #{tpu_custom_call.1} parent=39 // pred_region
        _
      $region44: #{tpu_custom_call.1} parent=39 // pred_fallthru
        _
    $region40: #{tpu_custom_call.1} parent=5 // pred_fallthru
      _
    %p6167 = scmp.le.s32.totalorder 2, %s11
    // Predicated region
    $region45: #{tpu_custom_call.1} parent=5 // pred_check
      %p6168 = pneg %p6167
    $region46: #{tpu_custom_call.1} parent=5 // pred_check_branch
      %6170 = sbr.rel (%p6168) target = $region48
    $region47: #{tpu_custom_call.1} parent=5 // pred_region
      %s6171 = ssub.s32 %s11, 2
      // Predicated region
      $region49: #{tpu_custom_call.1} parent=47 // pred_check
        %p6172 = pneg %p150
      $region50: #{tpu_custom_call.1} parent=47 // pred_check_branch
        %6174 = sbr.rel (%p6172) target = $region52
      $region51: #{tpu_custom_call.1} parent=47 // pred_region
        %p6175 = scmp.lt.s32.totalorder %s17, 1
        %s6176 = scalar_select %p6175, %s17, 1
        %s6177 = smul.addr %s6176, 32
        %s6178 = smul.addr %s6177, 8
        %s6179 = scalar_lea.vmem %s5, %s6178
      $region52: #{tpu_custom_call.1} parent=47 // pred_fallthru
        _
    $region48: #{tpu_custom_call.1} parent=5 // pred_fallthru
      _
  $region6: #{tpu_custom_call.1} parent=0 // loop_footer
    %s15 = sadd.s32 1, %s11
  $region7: #{tpu_custom_call.1} parent=0 // loop_footer_branch
    %10 = sbr.rel target = $region3
  $region8: #{tpu_custom_call.1} parent=0 // loop_exit
    _

</llo_original>
